<compile_context>
chip_gen: v7x
topology: tpu7x:2x2x1
jax: 0.10.0
libtpu: 0.0.40
codegen_flags: <defaults>
</compile_context>

<pallas_src>
import functools

import jax
import jax.numpy as jnp
from jax.experimental import pallas as pl
from jax.experimental.pallas import tpu as pltpu


# ----------------------------------------------------------------------------
# Fused kernel: conv-as-matmul (+ReLU) -> reduction -> LSTM -> vocab proj
# ----------------------------------------------------------------------------
def _fused_kernel(ids_ref,                     # SMEM, ((T-1)*B,) int32 (scalar prefetch)
                  col_ref,                     # (B*S, 2*C*9)
                  encw_ref,                    # (2*C*9, 2O)  block-diagonal
                  encb_ref,                    # (1, 2O)
                  rw3_ref,                     # (2O, S, H)   reduction weight
                  redb_ref,                    # (1, H)
                  xtab_ref,                    # (V, 4H)  = emb @ wih + b_lstm
                  whh_ref,                     # (H, 4H)
                  outw_ref,                    # (H, Vp)
                  outb_ref,                    # (1, Vp)
                  o_ref,                       # (T*B, Vp) output
                  *, B, S, H, T, O2):
    # ---- both encoders in one matmul (block-diag weight) + ReLU -------------
    act = jnp.maximum(
        jnp.dot(col_ref[...], encw_ref[...], preferred_element_type=jnp.float32)
        + encb_ref[...], 0.0)                                   # (B*S, 2O)

    # ---- reduction Linear without materializing the (B, S*2O) flatten ------
    # reduced[b,h] = sum_{c,s} act[b*S+s, c] * red_w[c*S+s, h]
    red_rows = []
    for b in range(B):                                          # B = 2, static
        act_b = act[b * S:(b + 1) * S, :]                       # (S, 2O)
        acc = jnp.zeros((S, H), jnp.float32)
        for c in range(O2):                                     # 2O = 16, static
            acc = acc + act_b[:, c:c + 1] * rw3_ref[c]          # (S,1)*(S,H) VPU MAC
        red_rows.append(jnp.sum(acc, axis=0, keepdims=True))    # (1, H) sublane sum
    reduced = jnp.concatenate(red_rows, axis=0) + redb_ref[...]  # (B, H)

    h = reduced                                                  # h0 = c0 = reduced
    c_state = reduced
    whh = whh_ref[...]                                           # loop-invariant

    # ---- fully unrolled LSTM recurrence; state and history stay in vregs ----
    hs = []
    for t in range(T):                                           # T-1 = 7, static
        rows = [xtab_ref[pl.ds(ids_ref[t * B + b], 1), :] for b in range(B)]
        xproj_t = jnp.concatenate(rows, axis=0)                  # (B, 4H) gathered
        gates = xproj_t + jnp.dot(h, whh, preferred_element_type=jnp.float32)
        sg = jax.nn.sigmoid(gates)                               # full 128-lane vreg
        tg = jnp.tanh(gates)                                     # full 128-lane vreg
        i_g = sg[:, 0 * H:1 * H]
        f_g = sg[:, 1 * H:2 * H]
        g_g = tg[:, 2 * H:3 * H]
        o_g = sg[:, 3 * H:4 * H]
        c_state = f_g * c_state + i_g * g_g
        h = o_g * jnp.tanh(c_state)
        hs.append(h)

    # ---- single vocab projection over the whole h history (lane-dense) -----
    h_all = jnp.concatenate(hs, axis=0)                          # (T*B, H)
    logits = (jnp.dot(h_all, outw_ref[...], preferred_element_type=jnp.float32)
              + outb_ref[...])                                   # (T*B, Vp)
    o_ref[...] = logits.astype(o_ref.dtype)


def fused_forward_pallas(ids_tb, col, pp, *, B, S, Tm1):
    BS, K2 = col.shape
    O2 = pp["enc_b_cat"].shape[1]
    H = pp["whh"].shape[0]
    H4 = pp["whh"].shape[1]
    V = pp["xtab"].shape[0]
    Vp = pp["out_w_pad"].shape[1]

    kernel = functools.partial(_fused_kernel, B=B, S=S, H=H, T=Tm1, O2=O2)

    flops = 2 * (BS * K2 * O2 + B * S * O2 * H + Tm1 * B * H * H4
                 + Tm1 * B * H * Vp)
    transcendentals = Tm1 * B * (2 * H4 + H)
    bytes_accessed = 4 * (BS * K2 + K2 * O2 + O2 * S * H + V * H4 + H * H4
                          + H * Vp + Tm1 * B * Vp)

    return pl.pallas_call(
        kernel,
        out_shape=jax.ShapeDtypeStruct((Tm1 * B, Vp), jnp.float32),
        grid_spec=pltpu.PrefetchScalarGridSpec(
            num_scalar_prefetch=1,
            grid=(1,),
            in_specs=[
                pl.BlockSpec((BS, K2), lambda i, ids: (0, 0)),        # col
                pl.BlockSpec((K2, O2), lambda i, ids: (0, 0)),        # enc_w_bd
                pl.BlockSpec((1, O2), lambda i, ids: (0, 0)),         # enc_b_cat
                pl.BlockSpec((O2, S, H), lambda i, ids: (0, 0, 0)),   # rw3
                pl.BlockSpec((1, H), lambda i, ids: (0, 0)),          # red_b
                pl.BlockSpec((V, H4), lambda i, ids: (0, 0)),         # xtab
                pl.BlockSpec((H, H4), lambda i, ids: (0, 0)),         # whh
                pl.BlockSpec((H, Vp), lambda i, ids: (0, 0)),         # out_w_pad
                pl.BlockSpec((1, Vp), lambda i, ids: (0, 0)),         # out_b_pad
            ],
            out_specs=pl.BlockSpec((Tm1 * B, Vp), lambda i, ids: (0, 0)),
        ),
        compiler_params=pltpu.CompilerParams(
            dimension_semantics=("arbitrary",)),
        cost_estimate=pl.CostEstimate(flops=flops,
                                      transcendentals=transcendentals,
                                      bytes_accessed=bytes_accessed),
    )(ids_tb, col, pp["enc_w_bd"], pp["enc_b_cat"], pp["rw3"], pp["red_b"],
      pp["xtab"], pp["whh"], pp["out_w_pad"], pp["out_b_pad"])


# ----------------------------------------------------------------------------
# Glue: im2col for NCHW conv (layout prep in the wrapper; matmul in Pallas)
# ----------------------------------------------------------------------------
def im2col_nchw(x, kh, kw, stride, padding):
    B, C, H, W = x.shape
    xp = jnp.pad(x, ((0, 0), (0, 0), (padding, padding), (padding, padding)))
    OH = (H + 2 * padding - kh) // stride + 1
    OW = (W + 2 * padding - kw) // stride + 1
    cols = []
    for i in range(kh):
        for j in range(kw):
            patch = xp[:, :, i:i + stride * OH:stride, j:j + stride * OW:stride]
            cols.append(patch)                           # (B, C, OH, OW)
    col = jnp.stack(cols, axis=-1)                       # (B, C, OH, OW, kh*kw)
    col = col.transpose(0, 2, 3, 1, 4)                   # (B, OH, OW, C, kh*kw)
    col = col.reshape(B * OH * OW, C * kh * kw)          # c-major, (kh,kw)-minor
    return col, OH, OW


# ----------------------------------------------------------------------------
# Full forward pass (Pallas) and a pure-JAX reference
# ----------------------------------------------------------------------------
def forward_pallas(pp, image, caption, masked_image, *, vocab):
    B = image.shape[0]
    # Stack both images on the channel axis -> ONE im2col; the block-diagonal
    # weight inside the kernel covers both encoders with one matmul.
    x_both = jnp.concatenate([image, masked_image], axis=1)          # (B, 2C, H, W)
    col, OH, OW = im2col_nchw(x_both, 3, 3, 2, 1)                    # (B*S, 2C*9)
    S = OH * OW

    ids = caption[:, :-1].astype(jnp.int32)                          # (B, T-1)
    Tm1 = ids.shape[1]
    ids_tb = jnp.transpose(ids).reshape(-1)                          # ((T-1)*B,) time-major

    out = fused_forward_pallas(ids_tb, col, pp, B=B, S=S, Tm1=Tm1)   # (T-1*B, Vp)

    logits = out.reshape(Tm1, B, -1)[:, :, :vocab]                   # (T-1, B, V)
    return jnp.transpose(logits, (1, 2, 0))                          # (B, V, T-1)


def forward_ref(params, image, caption, masked_image):
    """Pure-JAX reference in the original PyTorch (NCHW) parameter layout."""
    def conv_ref(x, w, b):
        Bn = x.shape[0]
        O, C, KH, KW = w.shape
        col, OH, OW = im2col_nchw(x, KH, KW, 2, 1)
        out = jnp.maximum(col @ w.reshape(O, -1).T + b[None, :], 0.0)
        return out.reshape(Bn, OH, OW, O).transpose(0, 3, 1, 2)

    enc = conv_ref(image, params["enc1_w"], params["enc1_b"])
    enc_m = conv_ref(masked_image, params["enc2_w"], params["enc2_b"])
    flat = jnp.concatenate([enc, enc_m], axis=1).reshape(image.shape[0], -1)
    reduced = flat @ params["red_w"] + params["red_b"][None, :]
    h0 = c0 = reduced
    ids = caption[:, :-1]
    emb = jnp.take(params["emb"], ids, axis=0)
    x_tbe = jnp.transpose(emb, (1, 0, 2))
    H = h0.shape[-1]

    def step(carry, x_t):
        h, c = carry
        gates = x_t @ params["wih"] + h @ params["whh"] + params["b_lstm"][None, :]
        i = jax.nn.sigmoid(gates[:, :H])
        f = jax.nn.sigmoid(gates[:, H:2 * H])
        g = jnp.tanh(gates[:, 2 * H:3 * H])
        o = jax.nn.sigmoid(gates[:, 3 * H:])
        c_new = f * c + i * g
        h_new = o * jnp.tanh(c_new)
        return (h_new, c_new), h_new

    _, lstm_out = jax.lax.scan(step, (h0, c0), x_tbe)                # (T-1, B, H)
    logits = lstm_out @ params["out_w"] + params["out_b"][None, None, :]
    return jnp.transpose(logits, (1, 2, 0))


# ----------------------------------------------------------------------------
# Deterministic parameter init + offline (one-time) Pallas weight preparation
# ----------------------------------------------------------------------------
def make_params(key, *, c_in, c_enc, img, image_embedding, vocab, embed_dim):
    oh = img // 2
    flat_dim = 2 * c_enc * oh * oh
    ks = jax.random.split(key, 10)
    s = 0.1
    return {
        "enc1_w": s * jax.random.normal(ks[0], (c_enc, c_in, 3, 3), jnp.float32),
        "enc1_b": s * jax.random.normal(ks[1], (c_enc,), jnp.float32),
        "enc2_w": s * jax.random.normal(ks[2], (c_enc, c_in, 3, 3), jnp.float32),
        "enc2_b": s * jax.random.normal(ks[3], (c_enc,), jnp.float32),
        "red_w": s * jax.random.normal(ks[4], (flat_dim, image_embedding), jnp.float32),
        "red_b": s * jax.random.normal(ks[5], (image_embedding,), jnp.float32),
        "emb": s * jax.random.normal(ks[6], (vocab, embed_dim), jnp.float32),
        "wih": s * jax.random.normal(ks[7], (embed_dim, 4 * image_embedding), jnp.float32),
        "whh": s * jax.random.normal(ks[8], (image_embedding, 4 * image_embedding), jnp.float32),
        # NOTE: single bias == torch b_ih + b_hh folded (sum them when porting
        # real PyTorch weights).
        "b_lstm": s * jax.random.normal(ks[9], (4 * image_embedding,), jnp.float32),
        "out_w": s * jax.random.normal(jax.random.fold_in(key, 100),
                                       (image_embedding, vocab), jnp.float32),
        "out_b": s * jax.random.normal(jax.random.fold_in(key, 101),
                                       (vocab,), jnp.float32),
    }


def prepare_pallas_params(p, *, img):
    """One-time offline re-layout / algebraic folding of weights."""
    O, C, KH, KW = p["enc1_w"].shape
    K = C * KH * KW
    S = (img // 2) ** 2
    H = p["red_w"].shape[1]
    O2 = 2 * O
    V = p["out_w"].shape[1]
    Vp = max(128, ((V + 127) // 128) * 128)

    # Block-diagonal conv weight: [col_img | col_mimg] @ [[W1,0],[0,W2]]
    w1 = p["enc1_w"].reshape(O, K).T                     # (K, O)
    w2 = p["enc2_w"].reshape(O, K).T
    w_bd = jnp.zeros((2 * K, O2), jnp.float32).at[:K, :O].set(w1).at[K:, O:].set(w2)
    b_cat = jnp.concatenate([p["enc1_b"], p["enc2_b"]]).reshape(1, O2)

    # Reduction weight viewed as (channel, spatial, hidden); the kernel
    # contracts channel on the VPU and spatial on the XLU, so no flatten.
    rw3 = p["red_w"].reshape(O2, S, H)

    # Embedding folded into the LSTM input projection: (V, 4H) lookup table.
    xtab = p["emb"] @ p["wih"] + p["b_lstm"][None, :]

    # Vocab projection padded to a 128-lane multiple for lane-dense stores.
    out_w_pad = jnp.zeros((H, Vp), jnp.float32).at[:, :V].set(p["out_w"])
    out_b_pad = jnp.zeros((1, Vp), jnp.float32).at[:, :V].set(p["out_b"][None, :])

    return {
        "enc_w_bd": w_bd,
        "enc_b_cat": b_cat,
        "rw3": rw3,
        "red_b": p["red_b"].reshape(1, H),
        "xtab": xtab,
        "whh": p["whh"],
        "out_w_pad": out_w_pad,
        "out_b_pad": out_b_pad,
    }


if __name__ == "__main__":
    B, C_IN, IMG = 2, 3, 16
    C_ENC = 8
    IMAGE_EMBEDDING = 32      # == LSTM hidden size (reduced feeds h0/c0)
    EMBED_DIM = 32
    VOCAB = 16
    T = 8                     # caption length; decoder consumes caption[:, :-1]

    key = jax.random.PRNGKey(0)
    k_img, k_mimg, k_cap, k_par = jax.random.split(key, 4)

    image = jax.random.normal(k_img, (B, C_IN, IMG, IMG), jnp.float32)
    masked_image = jax.random.normal(k_mimg, (B, C_IN, IMG, IMG), jnp.float32)
    caption = jax.random.randint(k_cap, (B, T), 0, VOCAB, jnp.int32)
    params = make_params(k_par, c_in=C_IN, c_enc=C_ENC, img=IMG,
                         image_embedding=IMAGE_EMBEDDING, vocab=VOCAB,
                         embed_dim=EMBED_DIM)
    pparams = prepare_pallas_params(params, img=IMG)

    fwd = jax.jit(functools.partial(forward_pallas, vocab=VOCAB))
    out = fwd(pparams, image, caption, masked_image)
    out = jax.block_until_ready(out)

    ref = forward_ref(params, image, caption, masked_image)
    assert out.shape == (B, VOCAB, T - 1), out.shape
    assert jnp.allclose(out, ref, atol=2e-4, rtol=2e-4), "mismatch vs reference"

    print("KERNEL_OK")
</pallas_src>

<mosaic_0001>
module attributes {stable_mosaic.version = 11 : i64} {
  func.func @_fused_kernel(%arg0: i32, %arg1: memref<14xi32, #tpu.memory_space<smem>>, %arg2: memref<128x54xf32, #tpu.memory_space<vmem>>, %arg3: memref<54x16xf32, #tpu.memory_space<vmem>>, %arg4: memref<1x16xf32, #tpu.memory_space<vmem>>, %arg5: memref<16x64x32xf32, #tpu.memory_space<vmem>>, %arg6: memref<1x32xf32, #tpu.memory_space<vmem>>, %arg7: memref<16x128xf32, #tpu.memory_space<vmem>>, %arg8: memref<32x128xf32, #tpu.memory_space<vmem>>, %arg9: memref<32x128xf32, #tpu.memory_space<vmem>>, %arg10: memref<1x128xf32, #tpu.memory_space<vmem>>, %arg11: memref<14x128xf32, #tpu.memory_space<vmem>>) attributes {dimension_semantics = [#tpu.dimension_semantics<arbitrary>], iteration_bounds = array<i64: 1>, scalar_prefetch = 1 : i64, scratch_operands = 0 : i64, tpu.core_type = #tpu.core_type<tc>, window_params = [{pipeline_mode = #tpu.pipeline_mode<synchronous>, transform_indices = @transform_0, window_bounds = array<i64: 128, 54>}, {pipeline_mode = #tpu.pipeline_mode<synchronous>, transform_indices = @transform_1, window_bounds = array<i64: 54, 16>}, {pipeline_mode = #tpu.pipeline_mode<synchronous>, transform_indices = @transform_2, window_bounds = array<i64: 1, 16>}, {pipeline_mode = #tpu.pipeline_mode<synchronous>, transform_indices = @transform_3, window_bounds = array<i64: 16, 64, 32>}, {pipeline_mode = #tpu.pipeline_mode<synchronous>, transform_indices = @transform_4, window_bounds = array<i64: 1, 32>}, {pipeline_mode = #tpu.pipeline_mode<synchronous>, transform_indices = @transform_5, window_bounds = array<i64: 16, 128>}, {pipeline_mode = #tpu.pipeline_mode<synchronous>, transform_indices = @transform_6, window_bounds = array<i64: 32, 128>}, {pipeline_mode = #tpu.pipeline_mode<synchronous>, transform_indices = @transform_7, window_bounds = array<i64: 32, 128>}, {pipeline_mode = #tpu.pipeline_mode<synchronous>, transform_indices = @transform_8, window_bounds = array<i64: 1, 128>}, {pipeline_mode = #tpu.pipeline_mode<synchronous>, transform_indices = @transform_9, window_bounds = array<i64: 14, 128>}]} {
    %c0 = arith.constant 0 : index
    %c0_0 = arith.constant 0 : index
    %0 = vector.load %arg2[%c0, %c0_0] : memref<128x54xf32, #tpu.memory_space<vmem>>, vector<128x54xf32>
    %c0_1 = arith.constant 0 : index
    %c0_2 = arith.constant 0 : index
    %1 = vector.load %arg3[%c0_1, %c0_2] : memref<54x16xf32, #tpu.memory_space<vmem>>, vector<54x16xf32>
    %cst = arith.constant dense<0.000000e+00> : vector<128x16xf32>
    %2 = tpu.matmul %0, %1, %cst {dimension_numbers = #tpu.dot_dimension_numbers<[1], [0], [0], [1], [0, 0, 1, 1], [], []>} : vector<128x54xf32>, vector<54x16xf32>, vector<128x16xf32> -> vector<128x16xf32>
    %c0_3 = arith.constant 0 : index
    %c0_4 = arith.constant 0 : index
    %3 = vector.load %arg4[%c0_3, %c0_4] : memref<1x16xf32, #tpu.memory_space<vmem>>, vector<1x16xf32>
    %4 = vector.broadcast %3 : vector<1x16xf32> to vector<128x16xf32>
    %5 = arith.addf %2, %4 : vector<128x16xf32>
    %cst_5 = arith.constant 0.000000e+00 : f32
    %6 = vector.broadcast %cst_5 : f32 to vector<128x16xf32>
    %7 = arith.maximumf %5, %6 : vector<128x16xf32>
    %8 = vector.extract_strided_slice %7 {offsets = [0, 0], sizes = [64, 16], strides = [1, 1]} : vector<128x16xf32> to vector<64x16xf32>
    %cst_6 = arith.constant 0.000000e+00 : f32
    %9 = vector.broadcast %cst_6 : f32 to vector<64x32xf32>
    %10 = vector.extract_strided_slice %8 {offsets = [0, 0], sizes = [64, 1], strides = [1, 1]} : vector<64x16xf32> to vector<64x1xf32>
    %c0_7 = arith.constant 0 : index
    %c0_8 = arith.constant 0 : index
    %c0_9 = arith.constant 0 : index
    %11 = vector.load %arg5[%c0_7, %c0_8, %c0_9] : memref<16x64x32xf32, #tpu.memory_space<vmem>>, vector<1x64x32xf32>
    %12 = vector.shape_cast %11 : vector<1x64x32xf32> to vector<64x32xf32>
    %13 = vector.broadcast %10 : vector<64x1xf32> to vector<64x32xf32>
    %14 = arith.mulf %13, %12 : vector<64x32xf32>
    %15 = arith.addf %9, %14 : vector<64x32xf32>
    %16 = vector.extract_strided_slice %8 {offsets = [0, 1], sizes = [64, 1], strides = [1, 1]} : vector<64x16xf32> to vector<64x1xf32>
    %c1 = arith.constant 1 : index
    %c0_10 = arith.constant 0 : index
    %c0_11 = arith.constant 0 : index
    %17 = vector.load %arg5[%c1, %c0_10, %c0_11] : memref<16x64x32xf32, #tpu.memory_space<vmem>>, vector<1x64x32xf32>
    %18 = vector.shape_cast %17 : vector<1x64x32xf32> to vector<64x32xf32>
    %19 = vector.broadcast %16 : vector<64x1xf32> to vector<64x32xf32>
    %20 = arith.mulf %19, %18 : vector<64x32xf32>
    %21 = arith.addf %15, %20 : vector<64x32xf32>
    %22 = vector.extract_strided_slice %8 {offsets = [0, 2], sizes = [64, 1], strides = [1, 1]} : vector<64x16xf32> to vector<64x1xf32>
    %c2 = arith.constant 2 : index
    %c0_12 = arith.constant 0 : index
    %c0_13 = arith.constant 0 : index
    %23 = vector.load %arg5[%c2, %c0_12, %c0_13] : memref<16x64x32xf32, #tpu.memory_space<vmem>>, vector<1x64x32xf32>
    %24 = vector.shape_cast %23 : vector<1x64x32xf32> to vector<64x32xf32>
    %25 = vector.broadcast %22 : vector<64x1xf32> to vector<64x32xf32>
    %26 = arith.mulf %25, %24 : vector<64x32xf32>
    %27 = arith.addf %21, %26 : vector<64x32xf32>
    %28 = vector.extract_strided_slice %8 {offsets = [0, 3], sizes = [64, 1], strides = [1, 1]} : vector<64x16xf32> to vector<64x1xf32>
    %c3 = arith.constant 3 : index
    %c0_14 = arith.constant 0 : index
    %c0_15 = arith.constant 0 : index
    %29 = vector.load %arg5[%c3, %c0_14, %c0_15] : memref<16x64x32xf32, #tpu.memory_space<vmem>>, vector<1x64x32xf32>
    %30 = vector.shape_cast %29 : vector<1x64x32xf32> to vector<64x32xf32>
    %31 = vector.broadcast %28 : vector<64x1xf32> to vector<64x32xf32>
    %32 = arith.mulf %31, %30 : vector<64x32xf32>
    %33 = arith.addf %27, %32 : vector<64x32xf32>
    %34 = vector.extract_strided_slice %8 {offsets = [0, 4], sizes = [64, 1], strides = [1, 1]} : vector<64x16xf32> to vector<64x1xf32>
    %c4 = arith.constant 4 : index
    %c0_16 = arith.constant 0 : index
    %c0_17 = arith.constant 0 : index
    %35 = vector.load %arg5[%c4, %c0_16, %c0_17] : memref<16x64x32xf32, #tpu.memory_space<vmem>>, vector<1x64x32xf32>
    %36 = vector.shape_cast %35 : vector<1x64x32xf32> to vector<64x32xf32>
    %37 = vector.broadcast %34 : vector<64x1xf32> to vector<64x32xf32>
    %38 = arith.mulf %37, %36 : vector<64x32xf32>
    %39 = arith.addf %33, %38 : vector<64x32xf32>
    %40 = vector.extract_strided_slice %8 {offsets = [0, 5], sizes = [64, 1], strides = [1, 1]} : vector<64x16xf32> to vector<64x1xf32>
    %c5 = arith.constant 5 : index
    %c0_18 = arith.constant 0 : index
    %c0_19 = arith.constant 0 : index
    %41 = vector.load %arg5[%c5, %c0_18, %c0_19] : memref<16x64x32xf32, #tpu.memory_space<vmem>>, vector<1x64x32xf32>
    %42 = vector.shape_cast %41 : vector<1x64x32xf32> to vector<64x32xf32>
    %43 = vector.broadcast %40 : vector<64x1xf32> to vector<64x32xf32>
    %44 = arith.mulf %43, %42 : vector<64x32xf32>
    %45 = arith.addf %39, %44 : vector<64x32xf32>
    %46 = vector.extract_strided_slice %8 {offsets = [0, 6], sizes = [64, 1], strides = [1, 1]} : vector<64x16xf32> to vector<64x1xf32>
    %c6 = arith.constant 6 : index
    %c0_20 = arith.constant 0 : index
    %c0_21 = arith.constant 0 : index
    %47 = vector.load %arg5[%c6, %c0_20, %c0_21] : memref<16x64x32xf32, #tpu.memory_space<vmem>>, vector<1x64x32xf32>
    %48 = vector.shape_cast %47 : vector<1x64x32xf32> to vector<64x32xf32>
    %49 = vector.broadcast %46 : vector<64x1xf32> to vector<64x32xf32>
    %50 = arith.mulf %49, %48 : vector<64x32xf32>
    %51 = arith.addf %45, %50 : vector<64x32xf32>
    %52 = vector.extract_strided_slice %8 {offsets = [0, 7], sizes = [64, 1], strides = [1, 1]} : vector<64x16xf32> to vector<64x1xf32>
    %c7 = arith.constant 7 : index
    %c0_22 = arith.constant 0 : index
    %c0_23 = arith.constant 0 : index
    %53 = vector.load %arg5[%c7, %c0_22, %c0_23] : memref<16x64x32xf32, #tpu.memory_space<vmem>>, vector<1x64x32xf32>
    %54 = vector.shape_cast %53 : vector<1x64x32xf32> to vector<64x32xf32>
    %55 = vector.broadcast %52 : vector<64x1xf32> to vector<64x32xf32>
    %56 = arith.mulf %55, %54 : vector<64x32xf32>
    %57 = arith.addf %51, %56 : vector<64x32xf32>
    %58 = vector.extract_strided_slice %8 {offsets = [0, 8], sizes = [64, 1], strides = [1, 1]} : vector<64x16xf32> to vector<64x1xf32>
    %c8 = arith.constant 8 : index
    %c0_24 = arith.constant 0 : index
    %c0_25 = arith.constant 0 : index
    %59 = vector.load %arg5[%c8, %c0_24, %c0_25] : memref<16x64x32xf32, #tpu.memory_space<vmem>>, vector<1x64x32xf32>
    %60 = vector.shape_cast %59 : vector<1x64x32xf32> to vector<64x32xf32>
    %61 = vector.broadcast %58 : vector<64x1xf32> to vector<64x32xf32>
    %62 = arith.mulf %61, %60 : vector<64x32xf32>
    %63 = arith.addf %57, %62 : vector<64x32xf32>
    %64 = vector.extract_strided_slice %8 {offsets = [0, 9], sizes = [64, 1], strides = [1, 1]} : vector<64x16xf32> to vector<64x1xf32>
    %c9 = arith.constant 9 : index
    %c0_26 = arith.constant 0 : index
    %c0_27 = arith.constant 0 : index
    %65 = vector.load %arg5[%c9, %c0_26, %c0_27] : memref<16x64x32xf32, #tpu.memory_space<vmem>>, vector<1x64x32xf32>
    %66 = vector.shape_cast %65 : vector<1x64x32xf32> to vector<64x32xf32>
    %67 = vector.broadcast %64 : vector<64x1xf32> to vector<64x32xf32>
    %68 = arith.mulf %67, %66 : vector<64x32xf32>
    %69 = arith.addf %63, %68 : vector<64x32xf32>
    %70 = vector.extract_strided_slice %8 {offsets = [0, 10], sizes = [64, 1], strides = [1, 1]} : vector<64x16xf32> to vector<64x1xf32>
    %c10 = arith.constant 10 : index
    %c0_28 = arith.constant 0 : index
    %c0_29 = arith.constant 0 : index
    %71 = vector.load %arg5[%c10, %c0_28, %c0_29] : memref<16x64x32xf32, #tpu.memory_space<vmem>>, vector<1x64x32xf32>
    %72 = vector.shape_cast %71 : vector<1x64x32xf32> to vector<64x32xf32>
    %73 = vector.broadcast %70 : vector<64x1xf32> to vector<64x32xf32>
    %74 = arith.mulf %73, %72 : vector<64x32xf32>
    %75 = arith.addf %69, %74 : vector<64x32xf32>
    %76 = vector.extract_strided_slice %8 {offsets = [0, 11], sizes = [64, 1], strides = [1, 1]} : vector<64x16xf32> to vector<64x1xf32>
    %c11 = arith.constant 11 : index
    %c0_30 = arith.constant 0 : index
    %c0_31 = arith.constant 0 : index
    %77 = vector.load %arg5[%c11, %c0_30, %c0_31] : memref<16x64x32xf32, #tpu.memory_space<vmem>>, vector<1x64x32xf32>
    %78 = vector.shape_cast %77 : vector<1x64x32xf32> to vector<64x32xf32>
    %79 = vector.broadcast %76 : vector<64x1xf32> to vector<64x32xf32>
    %80 = arith.mulf %79, %78 : vector<64x32xf32>
    %81 = arith.addf %75, %80 : vector<64x32xf32>
    %82 = vector.extract_strided_slice %8 {offsets = [0, 12], sizes = [64, 1], strides = [1, 1]} : vector<64x16xf32> to vector<64x1xf32>
    %c12 = arith.constant 12 : index
    %c0_32 = arith.constant 0 : index
    %c0_33 = arith.constant 0 : index
    %83 = vector.load %arg5[%c12, %c0_32, %c0_33] : memref<16x64x32xf32, #tpu.memory_space<vmem>>, vector<1x64x32xf32>
    %84 = vector.shape_cast %83 : vector<1x64x32xf32> to vector<64x32xf32>
    %85 = vector.broadcast %82 : vector<64x1xf32> to vector<64x32xf32>
    %86 = arith.mulf %85, %84 : vector<64x32xf32>
    %87 = arith.addf %81, %86 : vector<64x32xf32>
    %88 = vector.extract_strided_slice %8 {offsets = [0, 13], sizes = [64, 1], strides = [1, 1]} : vector<64x16xf32> to vector<64x1xf32>
    %c13 = arith.constant 13 : index
    %c0_34 = arith.constant 0 : index
    %c0_35 = arith.constant 0 : index
    %89 = vector.load %arg5[%c13, %c0_34, %c0_35] : memref<16x64x32xf32, #tpu.memory_space<vmem>>, vector<1x64x32xf32>
    %90 = vector.shape_cast %89 : vector<1x64x32xf32> to vector<64x32xf32>
    %91 = vector.broadcast %88 : vector<64x1xf32> to vector<64x32xf32>
    %92 = arith.mulf %91, %90 : vector<64x32xf32>
    %93 = arith.addf %87, %92 : vector<64x32xf32>
    %94 = vector.extract_strided_slice %8 {offsets = [0, 14], sizes = [64, 1], strides = [1, 1]} : vector<64x16xf32> to vector<64x1xf32>
    %c14 = arith.constant 14 : index
    %c0_36 = arith.constant 0 : index
    %c0_37 = arith.constant 0 : index
    %95 = vector.load %arg5[%c14, %c0_36, %c0_37] : memref<16x64x32xf32, #tpu.memory_space<vmem>>, vector<1x64x32xf32>
    %96 = vector.shape_cast %95 : vector<1x64x32xf32> to vector<64x32xf32>
    %97 = vector.broadcast %94 : vector<64x1xf32> to vector<64x32xf32>
    %98 = arith.mulf %97, %96 : vector<64x32xf32>
    %99 = arith.addf %93, %98 : vector<64x32xf32>
    %100 = vector.extract_strided_slice %8 {offsets = [0, 15], sizes = [64, 1], strides = [1, 1]} : vector<64x16xf32> to vector<64x1xf32>
    %c15 = arith.constant 15 : index
    %c0_38 = arith.constant 0 : index
    %c0_39 = arith.constant 0 : index
    %101 = vector.load %arg5[%c15, %c0_38, %c0_39] : memref<16x64x32xf32, #tpu.memory_space<vmem>>, vector<1x64x32xf32>
    %102 = vector.shape_cast %101 : vector<1x64x32xf32> to vector<64x32xf32>
    %103 = vector.broadcast %100 : vector<64x1xf32> to vector<64x32xf32>
    %104 = arith.mulf %103, %102 : vector<64x32xf32>
    %105 = arith.addf %99, %104 : vector<64x32xf32>
    %cst_40 = arith.constant dense<0.000000e+00> : vector<32xf32>
    %106 = vector.multi_reduction <add>, %105, %cst_40 [0] : vector<64x32xf32> to vector<32xf32>
    %107 = vector.shape_cast %106 : vector<32xf32> to vector<1x32xf32>
    %108 = vector.extract_strided_slice %7 {offsets = [64, 0], sizes = [64, 16], strides = [1, 1]} : vector<128x16xf32> to vector<64x16xf32>
    %cst_41 = arith.constant 0.000000e+00 : f32
    %109 = vector.broadcast %cst_41 : f32 to vector<64x32xf32>
    %110 = vector.extract_strided_slice %108 {offsets = [0, 0], sizes = [64, 1], strides = [1, 1]} : vector<64x16xf32> to vector<64x1xf32>
    %c0_42 = arith.constant 0 : index
    %c0_43 = arith.constant 0 : index
    %c0_44 = arith.constant 0 : index
    %111 = vector.load %arg5[%c0_42, %c0_43, %c0_44] : memref<16x64x32xf32, #tpu.memory_space<vmem>>, vector<1x64x32xf32>
    %112 = vector.shape_cast %111 : vector<1x64x32xf32> to vector<64x32xf32>
    %113 = vector.broadcast %110 : vector<64x1xf32> to vector<64x32xf32>
    %114 = arith.mulf %113, %112 : vector<64x32xf32>
    %115 = arith.addf %109, %114 : vector<64x32xf32>
    %116 = vector.extract_strided_slice %108 {offsets = [0, 1], sizes = [64, 1], strides = [1, 1]} : vector<64x16xf32> to vector<64x1xf32>
    %c1_45 = arith.constant 1 : index
    %c0_46 = arith.constant 0 : index
    %c0_47 = arith.constant 0 : index
    %117 = vector.load %arg5[%c1_45, %c0_46, %c0_47] : memref<16x64x32xf32, #tpu.memory_space<vmem>>, vector<1x64x32xf32>
    %118 = vector.shape_cast %117 : vector<1x64x32xf32> to vector<64x32xf32>
    %119 = vector.broadcast %116 : vector<64x1xf32> to vector<64x32xf32>
    %120 = arith.mulf %119, %118 : vector<64x32xf32>
    %121 = arith.addf %115, %120 : vector<64x32xf32>
    %122 = vector.extract_strided_slice %108 {offsets = [0, 2], sizes = [64, 1], strides = [1, 1]} : vector<64x16xf32> to vector<64x1xf32>
    %c2_48 = arith.constant 2 : index
    %c0_49 = arith.constant 0 : index
    %c0_50 = arith.constant 0 : index
    %123 = vector.load %arg5[%c2_48, %c0_49, %c0_50] : memref<16x64x32xf32, #tpu.memory_space<vmem>>, vector<1x64x32xf32>
    %124 = vector.shape_cast %123 : vector<1x64x32xf32> to vector<64x32xf32>
    %125 = vector.broadcast %122 : vector<64x1xf32> to vector<64x32xf32>
    %126 = arith.mulf %125, %124 : vector<64x32xf32>
    %127 = arith.addf %121, %126 : vector<64x32xf32>
    %128 = vector.extract_strided_slice %108 {offsets = [0, 3], sizes = [64, 1], strides = [1, 1]} : vector<64x16xf32> to vector<64x1xf32>
    %c3_51 = arith.constant 3 : index
    %c0_52 = arith.constant 0 : index
    %c0_53 = arith.constant 0 : index
    %129 = vector.load %arg5[%c3_51, %c0_52, %c0_53] : memref<16x64x32xf32, #tpu.memory_space<vmem>>, vector<1x64x32xf32>
    %130 = vector.shape_cast %129 : vector<1x64x32xf32> to vector<64x32xf32>
    %131 = vector.broadcast %128 : vector<64x1xf32> to vector<64x32xf32>
    %132 = arith.mulf %131, %130 : vector<64x32xf32>
    %133 = arith.addf %127, %132 : vector<64x32xf32>
    %134 = vector.extract_strided_slice %108 {offsets = [0, 4], sizes = [64, 1], strides = [1, 1]} : vector<64x16xf32> to vector<64x1xf32>
    %c4_54 = arith.constant 4 : index
    %c0_55 = arith.constant 0 : index
    %c0_56 = arith.constant 0 : index
    %135 = vector.load %arg5[%c4_54, %c0_55, %c0_56] : memref<16x64x32xf32, #tpu.memory_space<vmem>>, vector<1x64x32xf32>
    %136 = vector.shape_cast %135 : vector<1x64x32xf32> to vector<64x32xf32>
    %137 = vector.broadcast %134 : vector<64x1xf32> to vector<64x32xf32>
    %138 = arith.mulf %137, %136 : vector<64x32xf32>
    %139 = arith.addf %133, %138 : vector<64x32xf32>
    %140 = vector.extract_strided_slice %108 {offsets = [0, 5], sizes = [64, 1], strides = [1, 1]} : vector<64x16xf32> to vector<64x1xf32>
    %c5_57 = arith.constant 5 : index
    %c0_58 = arith.constant 0 : index
    %c0_59 = arith.constant 0 : index
    %141 = vector.load %arg5[%c5_57, %c0_58, %c0_59] : memref<16x64x32xf32, #tpu.memory_space<vmem>>, vector<1x64x32xf32>
    %142 = vector.shape_cast %141 : vector<1x64x32xf32> to vector<64x32xf32>
    %143 = vector.broadcast %140 : vector<64x1xf32> to vector<64x32xf32>
    %144 = arith.mulf %143, %142 : vector<64x32xf32>
    %145 = arith.addf %139, %144 : vector<64x32xf32>
    %146 = vector.extract_strided_slice %108 {offsets = [0, 6], sizes = [64, 1], strides = [1, 1]} : vector<64x16xf32> to vector<64x1xf32>
    %c6_60 = arith.constant 6 : index
    %c0_61 = arith.constant 0 : index
    %c0_62 = arith.constant 0 : index
    %147 = vector.load %arg5[%c6_60, %c0_61, %c0_62] : memref<16x64x32xf32, #tpu.memory_space<vmem>>, vector<1x64x32xf32>
    %148 = vector.shape_cast %147 : vector<1x64x32xf32> to vector<64x32xf32>
    %149 = vector.broadcast %146 : vector<64x1xf32> to vector<64x32xf32>
    %150 = arith.mulf %149, %148 : vector<64x32xf32>
    %151 = arith.addf %145, %150 : vector<64x32xf32>
    %152 = vector.extract_strided_slice %108 {offsets = [0, 7], sizes = [64, 1], strides = [1, 1]} : vector<64x16xf32> to vector<64x1xf32>
    %c7_63 = arith.constant 7 : index
    %c0_64 = arith.constant 0 : index
    %c0_65 = arith.constant 0 : index
    %153 = vector.load %arg5[%c7_63, %c0_64, %c0_65] : memref<16x64x32xf32, #tpu.memory_space<vmem>>, vector<1x64x32xf32>
    %154 = vector.shape_cast %153 : vector<1x64x32xf32> to vector<64x32xf32>
    %155 = vector.broadcast %152 : vector<64x1xf32> to vector<64x32xf32>
    %156 = arith.mulf %155, %154 : vector<64x32xf32>
    %157 = arith.addf %151, %156 : vector<64x32xf32>
    %158 = vector.extract_strided_slice %108 {offsets = [0, 8], sizes = [64, 1], strides = [1, 1]} : vector<64x16xf32> to vector<64x1xf32>
    %c8_66 = arith.constant 8 : index
    %c0_67 = arith.constant 0 : index
    %c0_68 = arith.constant 0 : index
    %159 = vector.load %arg5[%c8_66, %c0_67, %c0_68] : memref<16x64x32xf32, #tpu.memory_space<vmem>>, vector<1x64x32xf32>
    %160 = vector.shape_cast %159 : vector<1x64x32xf32> to vector<64x32xf32>
    %161 = vector.broadcast %158 : vector<64x1xf32> to vector<64x32xf32>
    %162 = arith.mulf %161, %160 : vector<64x32xf32>
    %163 = arith.addf %157, %162 : vector<64x32xf32>
    %164 = vector.extract_strided_slice %108 {offsets = [0, 9], sizes = [64, 1], strides = [1, 1]} : vector<64x16xf32> to vector<64x1xf32>
    %c9_69 = arith.constant 9 : index
    %c0_70 = arith.constant 0 : index
    %c0_71 = arith.constant 0 : index
    %165 = vector.load %arg5[%c9_69, %c0_70, %c0_71] : memref<16x64x32xf32, #tpu.memory_space<vmem>>, vector<1x64x32xf32>
    %166 = vector.shape_cast %165 : vector<1x64x32xf32> to vector<64x32xf32>
    %167 = vector.broadcast %164 : vector<64x1xf32> to vector<64x32xf32>
    %168 = arith.mulf %167, %166 : vector<64x32xf32>
    %169 = arith.addf %163, %168 : vector<64x32xf32>
    %170 = vector.extract_strided_slice %108 {offsets = [0, 10], sizes = [64, 1], strides = [1, 1]} : vector<64x16xf32> to vector<64x1xf32>
    %c10_72 = arith.constant 10 : index
    %c0_73 = arith.constant 0 : index
    %c0_74 = arith.constant 0 : index
    %171 = vector.load %arg5[%c10_72, %c0_73, %c0_74] : memref<16x64x32xf32, #tpu.memory_space<vmem>>, vector<1x64x32xf32>
    %172 = vector.shape_cast %171 : vector<1x64x32xf32> to vector<64x32xf32>
    %173 = vector.broadcast %170 : vector<64x1xf32> to vector<64x32xf32>
    %174 = arith.mulf %173, %172 : vector<64x32xf32>
    %175 = arith.addf %169, %174 : vector<64x32xf32>
    %176 = vector.extract_strided_slice %108 {offsets = [0, 11], sizes = [64, 1], strides = [1, 1]} : vector<64x16xf32> to vector<64x1xf32>
    %c11_75 = arith.constant 11 : index
    %c0_76 = arith.constant 0 : index
    %c0_77 = arith.constant 0 : index
    %177 = vector.load %arg5[%c11_75, %c0_76, %c0_77] : memref<16x64x32xf32, #tpu.memory_space<vmem>>, vector<1x64x32xf32>
    %178 = vector.shape_cast %177 : vector<1x64x32xf32> to vector<64x32xf32>
    %179 = vector.broadcast %176 : vector<64x1xf32> to vector<64x32xf32>
    %180 = arith.mulf %179, %178 : vector<64x32xf32>
    %181 = arith.addf %175, %180 : vector<64x32xf32>
    %182 = vector.extract_strided_slice %108 {offsets = [0, 12], sizes = [64, 1], strides = [1, 1]} : vector<64x16xf32> to vector<64x1xf32>
    %c12_78 = arith.constant 12 : index
    %c0_79 = arith.constant 0 : index
    %c0_80 = arith.constant 0 : index
    %183 = vector.load %arg5[%c12_78, %c0_79, %c0_80] : memref<16x64x32xf32, #tpu.memory_space<vmem>>, vector<1x64x32xf32>
    %184 = vector.shape_cast %183 : vector<1x64x32xf32> to vector<64x32xf32>
    %185 = vector.broadcast %182 : vector<64x1xf32> to vector<64x32xf32>
    %186 = arith.mulf %185, %184 : vector<64x32xf32>
    %187 = arith.addf %181, %186 : vector<64x32xf32>
    %188 = vector.extract_strided_slice %108 {offsets = [0, 13], sizes = [64, 1], strides = [1, 1]} : vector<64x16xf32> to vector<64x1xf32>
    %c13_81 = arith.constant 13 : index
    %c0_82 = arith.constant 0 : index
    %c0_83 = arith.constant 0 : index
    %189 = vector.load %arg5[%c13_81, %c0_82, %c0_83] : memref<16x64x32xf32, #tpu.memory_space<vmem>>, vector<1x64x32xf32>
    %190 = vector.shape_cast %189 : vector<1x64x32xf32> to vector<64x32xf32>
    %191 = vector.broadcast %188 : vector<64x1xf32> to vector<64x32xf32>
    %192 = arith.mulf %191, %190 : vector<64x32xf32>
    %193 = arith.addf %187, %192 : vector<64x32xf32>
    %194 = vector.extract_strided_slice %108 {offsets = [0, 14], sizes = [64, 1], strides = [1, 1]} : vector<64x16xf32> to vector<64x1xf32>
    %c14_84 = arith.constant 14 : index
    %c0_85 = arith.constant 0 : index
    %c0_86 = arith.constant 0 : index
    %195 = vector.load %arg5[%c14_84, %c0_85, %c0_86] : memref<16x64x32xf32, #tpu.memory_space<vmem>>, vector<1x64x32xf32>
    %196 = vector.shape_cast %195 : vector<1x64x32xf32> to vector<64x32xf32>
    %197 = vector.broadcast %194 : vector<64x1xf32> to vector<64x32xf32>
    %198 = arith.mulf %197, %196 : vector<64x32xf32>
    %199 = arith.addf %193, %198 : vector<64x32xf32>
    %200 = vector.extract_strided_slice %108 {offsets = [0, 15], sizes = [64, 1], strides = [1, 1]} : vector<64x16xf32> to vector<64x1xf32>
    %c15_87 = arith.constant 15 : index
    %c0_88 = arith.constant 0 : index
    %c0_89 = arith.constant 0 : index
    %201 = vector.load %arg5[%c15_87, %c0_88, %c0_89] : memref<16x64x32xf32, #tpu.memory_space<vmem>>, vector<1x64x32xf32>
    %202 = vector.shape_cast %201 : vector<1x64x32xf32> to vector<64x32xf32>
    %203 = vector.broadcast %200 : vector<64x1xf32> to vector<64x32xf32>
    %204 = arith.mulf %203, %202 : vector<64x32xf32>
    %205 = arith.addf %199, %204 : vector<64x32xf32>
    %cst_90 = arith.constant dense<0.000000e+00> : vector<32xf32>
    %206 = vector.multi_reduction <add>, %205, %cst_90 [0] : vector<64x32xf32> to vector<32xf32>
    %207 = vector.shape_cast %206 : vector<32xf32> to vector<1x32xf32>
    %208 = tpu.concatenate %107, %207 in 0 : vector<1x32xf32>, vector<1x32xf32> -> vector<2x32xf32>
    %c0_91 = arith.constant 0 : index
    %c0_92 = arith.constant 0 : index
    %209 = vector.load %arg6[%c0_91, %c0_92] : memref<1x32xf32, #tpu.memory_space<vmem>>, vector<1x32xf32>
    %210 = vector.broadcast %209 : vector<1x32xf32> to vector<2x32xf32>
    %211 = arith.addf %208, %210 : vector<2x32xf32>
    %c0_93 = arith.constant 0 : index
    %c0_94 = arith.constant 0 : index
    %212 = vector.load %arg8[%c0_93, %c0_94] : memref<32x128xf32, #tpu.memory_space<vmem>>, vector<32x128xf32>
    %c0_95 = arith.constant 0 : index
    %213 = memref.load %arg1[%c0_95] : memref<14xi32, #tpu.memory_space<smem>>
    %214 = arith.index_cast %213 : i32 to index
    %c0_96 = arith.constant 0 : index
    %215 = vector.load %arg7[%214, %c0_96] : memref<16x128xf32, #tpu.memory_space<vmem>>, vector<1x128xf32>
    %c1_97 = arith.constant 1 : index
    %216 = memref.load %arg1[%c1_97] : memref<14xi32, #tpu.memory_space<smem>>
    %217 = arith.index_cast %216 : i32 to index
    %c0_98 = arith.constant 0 : index
    %218 = vector.load %arg7[%217, %c0_98] : memref<16x128xf32, #tpu.memory_space<vmem>>, vector<1x128xf32>
    %219 = tpu.concatenate %215, %218 in 0 : vector<1x128xf32>, vector<1x128xf32> -> vector<2x128xf32>
    %cst_99 = arith.constant dense<0.000000e+00> : vector<2x128xf32>
    %220 = tpu.matmul %211, %212, %cst_99 {dimension_numbers = #tpu.dot_dimension_numbers<[1], [0], [0], [1], [0, 0, 1, 1], [], []>} : vector<2x32xf32>, vector<32x128xf32>, vector<2x128xf32> -> vector<2x128xf32>
    %221 = arith.addf %219, %220 : vector<2x128xf32>
    %222 = arith.negf %221 : vector<2x128xf32>
    %223 = math.exp %222 : vector<2x128xf32>
    %cst_100 = arith.constant 1.000000e+00 : f32
    %224 = vector.broadcast %cst_100 : f32 to vector<2x128xf32>
    %225 = arith.addf %224, %223 : vector<2x128xf32>
    %226 = arith.divf %224, %225 : vector<2x128xf32>
    %227 = math.tanh %221 : vector<2x128xf32>
    %228 = vector.extract_strided_slice %226 {offsets = [0, 0], sizes = [2, 32], strides = [1, 1]} : vector<2x128xf32> to vector<2x32xf32>
    %229 = vector.extract_strided_slice %226 {offsets = [0, 32], sizes = [2, 32], strides = [1, 1]} : vector<2x128xf32> to vector<2x32xf32>
    %230 = vector.extract_strided_slice %227 {offsets = [0, 64], sizes = [2, 32], strides = [1, 1]} : vector<2x128xf32> to vector<2x32xf32>
    %231 = vector.extract_strided_slice %226 {offsets = [0, 96], sizes = [2, 32], strides = [1, 1]} : vector<2x128xf32> to vector<2x32xf32>
    %232 = arith.mulf %229, %211 : vector<2x32xf32>
    %233 = arith.mulf %228, %230 : vector<2x32xf32>
    %234 = arith.addf %232, %233 : vector<2x32xf32>
    %235 = math.tanh %234 : vector<2x32xf32>
    %236 = arith.mulf %231, %235 : vector<2x32xf32>
    %c2_101 = arith.constant 2 : index
    %237 = memref.load %arg1[%c2_101] : memref<14xi32, #tpu.memory_space<smem>>
    %238 = arith.index_cast %237 : i32 to index
    %c0_102 = arith.constant 0 : index
    %239 = vector.load %arg7[%238, %c0_102] : memref<16x128xf32, #tpu.memory_space<vmem>>, vector<1x128xf32>
    %c3_103 = arith.constant 3 : index
    %240 = memref.load %arg1[%c3_103] : memref<14xi32, #tpu.memory_space<smem>>
    %241 = arith.index_cast %240 : i32 to index
    %c0_104 = arith.constant 0 : index
    %242 = vector.load %arg7[%241, %c0_104] : memref<16x128xf32, #tpu.memory_space<vmem>>, vector<1x128xf32>
    %243 = tpu.concatenate %239, %242 in 0 : vector<1x128xf32>, vector<1x128xf32> -> vector<2x128xf32>
    %cst_105 = arith.constant dense<0.000000e+00> : vector<2x128xf32>
    %244 = tpu.matmul %236, %212, %cst_105 {dimension_numbers = #tpu.dot_dimension_numbers<[1], [0], [0], [1], [0, 0, 1, 1], [], []>} : vector<2x32xf32>, vector<32x128xf32>, vector<2x128xf32> -> vector<2x128xf32>
    %245 = arith.addf %243, %244 : vector<2x128xf32>
    %246 = arith.negf %245 : vector<2x128xf32>
    %247 = math.exp %246 : vector<2x128xf32>
    %cst_106 = arith.constant 1.000000e+00 : f32
    %248 = vector.broadcast %cst_106 : f32 to vector<2x128xf32>
    %249 = arith.addf %248, %247 : vector<2x128xf32>
    %250 = arith.divf %248, %249 : vector<2x128xf32>
    %251 = math.tanh %245 : vector<2x128xf32>
    %252 = vector.extract_strided_slice %250 {offsets = [0, 0], sizes = [2, 32], strides = [1, 1]} : vector<2x128xf32> to vector<2x32xf32>
    %253 = vector.extract_strided_slice %250 {offsets = [0, 32], sizes = [2, 32], strides = [1, 1]} : vector<2x128xf32> to vector<2x32xf32>
    %254 = vector.extract_strided_slice %251 {offsets = [0, 64], sizes = [2, 32], strides = [1, 1]} : vector<2x128xf32> to vector<2x32xf32>
    %255 = vector.extract_strided_slice %250 {offsets = [0, 96], sizes = [2, 32], strides = [1, 1]} : vector<2x128xf32> to vector<2x32xf32>
    %256 = arith.mulf %253, %234 : vector<2x32xf32>
    %257 = arith.mulf %252, %254 : vector<2x32xf32>
    %258 = arith.addf %256, %257 : vector<2x32xf32>
    %259 = math.tanh %258 : vector<2x32xf32>
    %260 = arith.mulf %255, %259 : vector<2x32xf32>
    %c4_107 = arith.constant 4 : index
    %261 = memref.load %arg1[%c4_107] : memref<14xi32, #tpu.memory_space<smem>>
    %262 = arith.index_cast %261 : i32 to index
    %c0_108 = arith.constant 0 : index
    %263 = vector.load %arg7[%262, %c0_108] : memref<16x128xf32, #tpu.memory_space<vmem>>, vector<1x128xf32>
    %c5_109 = arith.constant 5 : index
    %264 = memref.load %arg1[%c5_109] : memref<14xi32, #tpu.memory_space<smem>>
    %265 = arith.index_cast %264 : i32 to index
    %c0_110 = arith.constant 0 : index
    %266 = vector.load %arg7[%265, %c0_110] : memref<16x128xf32, #tpu.memory_space<vmem>>, vector<1x128xf32>
    %267 = tpu.concatenate %263, %266 in 0 : vector<1x128xf32>, vector<1x128xf32> -> vector<2x128xf32>
    %cst_111 = arith.constant dense<0.000000e+00> : vector<2x128xf32>
    %268 = tpu.matmul %260, %212, %cst_111 {dimension_numbers = #tpu.dot_dimension_numbers<[1], [0], [0], [1], [0, 0, 1, 1], [], []>} : vector<2x32xf32>, vector<32x128xf32>, vector<2x128xf32> -> vector<2x128xf32>
    %269 = arith.addf %267, %268 : vector<2x128xf32>
    %270 = arith.negf %269 : vector<2x128xf32>
    %271 = math.exp %270 : vector<2x128xf32>
    %cst_112 = arith.constant 1.000000e+00 : f32
    %272 = vector.broadcast %cst_112 : f32 to vector<2x128xf32>
    %273 = arith.addf %272, %271 : vector<2x128xf32>
    %274 = arith.divf %272, %273 : vector<2x128xf32>
    %275 = math.tanh %269 : vector<2x128xf32>
    %276 = vector.extract_strided_slice %274 {offsets = [0, 0], sizes = [2, 32], strides = [1, 1]} : vector<2x128xf32> to vector<2x32xf32>
    %277 = vector.extract_strided_slice %274 {offsets = [0, 32], sizes = [2, 32], strides = [1, 1]} : vector<2x128xf32> to vector<2x32xf32>
    %278 = vector.extract_strided_slice %275 {offsets = [0, 64], sizes = [2, 32], strides = [1, 1]} : vector<2x128xf32> to vector<2x32xf32>
    %279 = vector.extract_strided_slice %274 {offsets = [0, 96], sizes = [2, 32], strides = [1, 1]} : vector<2x128xf32> to vector<2x32xf32>
    %280 = arith.mulf %277, %258 : vector<2x32xf32>
    %281 = arith.mulf %276, %278 : vector<2x32xf32>
    %282 = arith.addf %280, %281 : vector<2x32xf32>
    %283 = math.tanh %282 : vector<2x32xf32>
    %284 = arith.mulf %279, %283 : vector<2x32xf32>
    %c6_113 = arith.constant 6 : index
    %285 = memref.load %arg1[%c6_113] : memref<14xi32, #tpu.memory_space<smem>>
    %286 = arith.index_cast %285 : i32 to index
    %c0_114 = arith.constant 0 : index
    %287 = vector.load %arg7[%286, %c0_114] : memref<16x128xf32, #tpu.memory_space<vmem>>, vector<1x128xf32>
    %c7_115 = arith.constant 7 : index
    %288 = memref.load %arg1[%c7_115] : memref<14xi32, #tpu.memory_space<smem>>
    %289 = arith.index_cast %288 : i32 to index
    %c0_116 = arith.constant 0 : index
    %290 = vector.load %arg7[%289, %c0_116] : memref<16x128xf32, #tpu.memory_space<vmem>>, vector<1x128xf32>
    %291 = tpu.concatenate %287, %290 in 0 : vector<1x128xf32>, vector<1x128xf32> -> vector<2x128xf32>
    %cst_117 = arith.constant dense<0.000000e+00> : vector<2x128xf32>
    %292 = tpu.matmul %284, %212, %cst_117 {dimension_numbers = #tpu.dot_dimension_numbers<[1], [0], [0], [1], [0, 0, 1, 1], [], []>} : vector<2x32xf32>, vector<32x128xf32>, vector<2x128xf32> -> vector<2x128xf32>
    %293 = arith.addf %291, %292 : vector<2x128xf32>
    %294 = arith.negf %293 : vector<2x128xf32>
    %295 = math.exp %294 : vector<2x128xf32>
    %cst_118 = arith.constant 1.000000e+00 : f32
    %296 = vector.broadcast %cst_118 : f32 to vector<2x128xf32>
    %297 = arith.addf %296, %295 : vector<2x128xf32>
    %298 = arith.divf %296, %297 : vector<2x128xf32>
    %299 = math.tanh %293 : vector<2x128xf32>
    %300 = vector.extract_strided_slice %298 {offsets = [0, 0], sizes = [2, 32], strides = [1, 1]} : vector<2x128xf32> to vector<2x32xf32>
    %301 = vector.extract_strided_slice %298 {offsets = [0, 32], sizes = [2, 32], strides = [1, 1]} : vector<2x128xf32> to vector<2x32xf32>
    %302 = vector.extract_strided_slice %299 {offsets = [0, 64], sizes = [2, 32], strides = [1, 1]} : vector<2x128xf32> to vector<2x32xf32>
    %303 = vector.extract_strided_slice %298 {offsets = [0, 96], sizes = [2, 32], strides = [1, 1]} : vector<2x128xf32> to vector<2x32xf32>
    %304 = arith.mulf %301, %282 : vector<2x32xf32>
    %305 = arith.mulf %300, %302 : vector<2x32xf32>
    %306 = arith.addf %304, %305 : vector<2x32xf32>
    %307 = math.tanh %306 : vector<2x32xf32>
    %308 = arith.mulf %303, %307 : vector<2x32xf32>
    %c8_119 = arith.constant 8 : index
    %309 = memref.load %arg1[%c8_119] : memref<14xi32, #tpu.memory_space<smem>>
    %310 = arith.index_cast %309 : i32 to index
    %c0_120 = arith.constant 0 : index
    %311 = vector.load %arg7[%310, %c0_120] : memref<16x128xf32, #tpu.memory_space<vmem>>, vector<1x128xf32>
    %c9_121 = arith.constant 9 : index
    %312 = memref.load %arg1[%c9_121] : memref<14xi32, #tpu.memory_space<smem>>
    %313 = arith.index_cast %312 : i32 to index
    %c0_122 = arith.constant 0 : index
    %314 = vector.load %arg7[%313, %c0_122] : memref<16x128xf32, #tpu.memory_space<vmem>>, vector<1x128xf32>
    %315 = tpu.concatenate %311, %314 in 0 : vector<1x128xf32>, vector<1x128xf32> -> vector<2x128xf32>
    %cst_123 = arith.constant dense<0.000000e+00> : vector<2x128xf32>
    %316 = tpu.matmul %308, %212, %cst_123 {dimension_numbers = #tpu.dot_dimension_numbers<[1], [0], [0], [1], [0, 0, 1, 1], [], []>} : vector<2x32xf32>, vector<32x128xf32>, vector<2x128xf32> -> vector<2x128xf32>
    %317 = arith.addf %315, %316 : vector<2x128xf32>
    %318 = arith.negf %317 : vector<2x128xf32>
    %319 = math.exp %318 : vector<2x128xf32>
    %cst_124 = arith.constant 1.000000e+00 : f32
    %320 = vector.broadcast %cst_124 : f32 to vector<2x128xf32>
    %321 = arith.addf %320, %319 : vector<2x128xf32>
    %322 = arith.divf %320, %321 : vector<2x128xf32>
    %323 = math.tanh %317 : vector<2x128xf32>
    %324 = vector.extract_strided_slice %322 {offsets = [0, 0], sizes = [2, 32], strides = [1, 1]} : vector<2x128xf32> to vector<2x32xf32>
    %325 = vector.extract_strided_slice %322 {offsets = [0, 32], sizes = [2, 32], strides = [1, 1]} : vector<2x128xf32> to vector<2x32xf32>
    %326 = vector.extract_strided_slice %323 {offsets = [0, 64], sizes = [2, 32], strides = [1, 1]} : vector<2x128xf32> to vector<2x32xf32>
    %327 = vector.extract_strided_slice %322 {offsets = [0, 96], sizes = [2, 32], strides = [1, 1]} : vector<2x128xf32> to vector<2x32xf32>
    %328 = arith.mulf %325, %306 : vector<2x32xf32>
    %329 = arith.mulf %324, %326 : vector<2x32xf32>
    %330 = arith.addf %328, %329 : vector<2x32xf32>
    %331 = math.tanh %330 : vector<2x32xf32>
    %332 = arith.mulf %327, %331 : vector<2x32xf32>
    %c10_125 = arith.constant 10 : index
    %333 = memref.load %arg1[%c10_125] : memref<14xi32, #tpu.memory_space<smem>>
    %334 = arith.index_cast %333 : i32 to index
    %c0_126 = arith.constant 0 : index
    %335 = vector.load %arg7[%334, %c0_126] : memref<16x128xf32, #tpu.memory_space<vmem>>, vector<1x128xf32>
    %c11_127 = arith.constant 11 : index
    %336 = memref.load %arg1[%c11_127] : memref<14xi32, #tpu.memory_space<smem>>
    %337 = arith.index_cast %336 : i32 to index
    %c0_128 = arith.constant 0 : index
    %338 = vector.load %arg7[%337, %c0_128] : memref<16x128xf32, #tpu.memory_space<vmem>>, vector<1x128xf32>
    %339 = tpu.concatenate %335, %338 in 0 : vector<1x128xf32>, vector<1x128xf32> -> vector<2x128xf32>
    %cst_129 = arith.constant dense<0.000000e+00> : vector<2x128xf32>
    %340 = tpu.matmul %332, %212, %cst_129 {dimension_numbers = #tpu.dot_dimension_numbers<[1], [0], [0], [1], [0, 0, 1, 1], [], []>} : vector<2x32xf32>, vector<32x128xf32>, vector<2x128xf32> -> vector<2x128xf32>
    %341 = arith.addf %339, %340 : vector<2x128xf32>
    %342 = arith.negf %341 : vector<2x128xf32>
    %343 = math.exp %342 : vector<2x128xf32>
    %cst_130 = arith.constant 1.000000e+00 : f32
    %344 = vector.broadcast %cst_130 : f32 to vector<2x128xf32>
    %345 = arith.addf %344, %343 : vector<2x128xf32>
    %346 = arith.divf %344, %345 : vector<2x128xf32>
    %347 = math.tanh %341 : vector<2x128xf32>
    %348 = vector.extract_strided_slice %346 {offsets = [0, 0], sizes = [2, 32], strides = [1, 1]} : vector<2x128xf32> to vector<2x32xf32>
    %349 = vector.extract_strided_slice %346 {offsets = [0, 32], sizes = [2, 32], strides = [1, 1]} : vector<2x128xf32> to vector<2x32xf32>
    %350 = vector.extract_strided_slice %347 {offsets = [0, 64], sizes = [2, 32], strides = [1, 1]} : vector<2x128xf32> to vector<2x32xf32>
    %351 = vector.extract_strided_slice %346 {offsets = [0, 96], sizes = [2, 32], strides = [1, 1]} : vector<2x128xf32> to vector<2x32xf32>
    %352 = arith.mulf %349, %330 : vector<2x32xf32>
    %353 = arith.mulf %348, %350 : vector<2x32xf32>
    %354 = arith.addf %352, %353 : vector<2x32xf32>
    %355 = math.tanh %354 : vector<2x32xf32>
    %356 = arith.mulf %351, %355 : vector<2x32xf32>
    %c12_131 = arith.constant 12 : index
    %357 = memref.load %arg1[%c12_131] : memref<14xi32, #tpu.memory_space<smem>>
    %358 = arith.index_cast %357 : i32 to index
    %c0_132 = arith.constant 0 : index
    %359 = vector.load %arg7[%358, %c0_132] : memref<16x128xf32, #tpu.memory_space<vmem>>, vector<1x128xf32>
    %c13_133 = arith.constant 13 : index
    %360 = memref.load %arg1[%c13_133] : memref<14xi32, #tpu.memory_space<smem>>
    %361 = arith.index_cast %360 : i32 to index
    %c0_134 = arith.constant 0 : index
    %362 = vector.load %arg7[%361, %c0_134] : memref<16x128xf32, #tpu.memory_space<vmem>>, vector<1x128xf32>
    %363 = tpu.concatenate %359, %362 in 0 : vector<1x128xf32>, vector<1x128xf32> -> vector<2x128xf32>
    %cst_135 = arith.constant dense<0.000000e+00> : vector<2x128xf32>
    %364 = tpu.matmul %356, %212, %cst_135 {dimension_numbers = #tpu.dot_dimension_numbers<[1], [0], [0], [1], [0, 0, 1, 1], [], []>} : vector<2x32xf32>, vector<32x128xf32>, vector<2x128xf32> -> vector<2x128xf32>
    %365 = arith.addf %363, %364 : vector<2x128xf32>
    %366 = arith.negf %365 : vector<2x128xf32>
    %367 = math.exp %366 : vector<2x128xf32>
    %cst_136 = arith.constant 1.000000e+00 : f32
    %368 = vector.broadcast %cst_136 : f32 to vector<2x128xf32>
    %369 = arith.addf %368, %367 : vector<2x128xf32>
    %370 = arith.divf %368, %369 : vector<2x128xf32>
    %371 = math.tanh %365 : vector<2x128xf32>
    %372 = vector.extract_strided_slice %370 {offsets = [0, 0], sizes = [2, 32], strides = [1, 1]} : vector<2x128xf32> to vector<2x32xf32>
    %373 = vector.extract_strided_slice %370 {offsets = [0, 32], sizes = [2, 32], strides = [1, 1]} : vector<2x128xf32> to vector<2x32xf32>
    %374 = vector.extract_strided_slice %371 {offsets = [0, 64], sizes = [2, 32], strides = [1, 1]} : vector<2x128xf32> to vector<2x32xf32>
    %375 = vector.extract_strided_slice %370 {offsets = [0, 96], sizes = [2, 32], strides = [1, 1]} : vector<2x128xf32> to vector<2x32xf32>
    %376 = arith.mulf %373, %354 : vector<2x32xf32>
    %377 = arith.mulf %372, %374 : vector<2x32xf32>
    %378 = arith.addf %376, %377 : vector<2x32xf32>
    %379 = math.tanh %378 : vector<2x32xf32>
    %380 = arith.mulf %375, %379 : vector<2x32xf32>
    %381 = tpu.concatenate %236, %260, %284, %308, %332, %356, %380 in 0 : vector<2x32xf32>, vector<2x32xf32>, vector<2x32xf32>, vector<2x32xf32>, vector<2x32xf32>, vector<2x32xf32>, vector<2x32xf32> -> vector<14x32xf32>
    %c0_137 = arith.constant 0 : index
    %c0_138 = arith.constant 0 : index
    %382 = vector.load %arg9[%c0_137, %c0_138] : memref<32x128xf32, #tpu.memory_space<vmem>>, vector<32x128xf32>
    %cst_139 = arith.constant dense<0.000000e+00> : vector<14x128xf32>
    %383 = tpu.matmul %381, %382, %cst_139 {dimension_numbers = #tpu.dot_dimension_numbers<[1], [0], [0], [1], [0, 0, 1, 1], [], []>} : vector<14x32xf32>, vector<32x128xf32>, vector<14x128xf32> -> vector<14x128xf32>
    %c0_140 = arith.constant 0 : index
    %c0_141 = arith.constant 0 : index
    %384 = vector.load %arg10[%c0_140, %c0_141] : memref<1x128xf32, #tpu.memory_space<vmem>>, vector<1x128xf32>
    %385 = vector.broadcast %384 : vector<1x128xf32> to vector<14x128xf32>
    %386 = arith.addf %383, %385 : vector<14x128xf32>
    %c0_142 = arith.constant 0 : index
    %c0_143 = arith.constant 0 : index
    %387 = vector.load %arg11[%c0_142, %c0_143] : memref<14x128xf32, #tpu.memory_space<vmem>>, vector<14x128xf32>
    tpu.vector_store %arg11[%c0_142, %c0_143], %386 {strides = array<i32>} : memref<14x128xf32, #tpu.memory_space<vmem>>, vector<14x128xf32>,
    return
  }
  func.func @transform_0(%arg0: i32, %arg1: memref<14xi32, #tpu.memory_space<smem>>) -> (i32, i32) {
    %c0_i32 = arith.constant 0 : i32
    %c0_i32_0 = arith.constant 0 : i32
    %c0_i32_1 = arith.constant 0 : i32
    return %c0_i32, %c0_i32_0 : i32, i32
  }
  func.func @transform_1(%arg0: i32, %arg1: memref<14xi32, #tpu.memory_space<smem>>) -> (i32, i32) {
    %c0_i32 = arith.constant 0 : i32
    %c0_i32_0 = arith.constant 0 : i32
    %c0_i32_1 = arith.constant 0 : i32
    return %c0_i32, %c0_i32_0 : i32, i32
  }
  func.func @transform_2(%arg0: i32, %arg1: memref<14xi32, #tpu.memory_space<smem>>) -> (i32, i32) {
    %c0_i32 = arith.constant 0 : i32
    %c0_i32_0 = arith.constant 0 : i32
    %c0_i32_1 = arith.constant 0 : i32
    return %c0_i32, %c0_i32_0 : i32, i32
  }
  func.func @transform_3(%arg0: i32, %arg1: memref<14xi32, #tpu.memory_space<smem>>) -> (i32, i32, i32) {
    %c0_i32 = arith.constant 0 : i32
    %c0_i32_0 = arith.constant 0 : i32
    %c0_i32_1 = arith.constant 0 : i32
    %c0_i32_2 = arith.constant 0 : i32
    return %c0_i32, %c0_i32_0, %c0_i32_1 : i32, i32, i32
  }
  func.func @transform_4(%arg0: i32, %arg1: memref<14xi32, #tpu.memory_space<smem>>) -> (i32, i32) {
    %c0_i32 = arith.constant 0 : i32
    %c0_i32_0 = arith.constant 0 : i32
    %c0_i32_1 = arith.constant 0 : i32
    return %c0_i32, %c0_i32_0 : i32, i32
  }
  func.func @transform_5(%arg0: i32, %arg1: memref<14xi32, #tpu.memory_space<smem>>) -> (i32, i32) {
    %c0_i32 = arith.constant 0 : i32
    %c0_i32_0 = arith.constant 0 : i32
    %c0_i32_1 = arith.constant 0 : i32
    return %c0_i32, %c0_i32_0 : i32, i32
  }
  func.func @transform_6(%arg0: i32, %arg1: memref<14xi32, #tpu.memory_space<smem>>) -> (i32, i32) {
    %c0_i32 = arith.constant 0 : i32
    %c0_i32_0 = arith.constant 0 : i32
    %c0_i32_1 = arith.constant 0 : i32
    return %c0_i32, %c0_i32_0 : i32, i32
  }
  func.func @transform_7(%arg0: i32, %arg1: memref<14xi32, #tpu.memory_space<smem>>) -> (i32, i32) {
    %c0_i32 = arith.constant 0 : i32
    %c0_i32_0 = arith.constant 0 : i32
    %c0_i32_1 = arith.constant 0 : i32
    return %c0_i32, %c0_i32_0 : i32, i32
  }
  func.func @transform_8(%arg0: i32, %arg1: memref<14xi32, #tpu.memory_space<smem>>) -> (i32, i32) {
    %c0_i32 = arith.constant 0 : i32
    %c0_i32_0 = arith.constant 0 : i32
    %c0_i32_1 = arith.constant 0 : i32
    return %c0_i32, %c0_i32_0 : i32, i32
  }
  func.func @transform_9(%arg0: i32, %arg1: memref<14xi32, #tpu.memory_space<smem>>) -> (i32, i32) {
    %c0_i32 = arith.constant 0 : i32
    %c0_i32_0 = arith.constant 0 : i32
    %c0_i32_1 = arith.constant 0 : i32
    return %c0_i32, %c0_i32_0 : i32, i32
  }
}

</mosaic_0001>

<llo_original>
// kernel: forward_pallas.1
$region0: #{forward_pallas.1}
  #allocation0 [shape = 'u32[]', space=smem, size = 0x4, offset = 0x4, fixed_abs, tag = 'smem constant byte address 0x4 - core index']
  #allocation1 [shape = 'u32[144,128]{1,0:T(1,128)}', space=vmem, size = 0x12000, scoped, tag = 'internal scratch']
  #allocation2 [shape = 's32[1]{0}', space=sflag, size = 0x4, scoped, tag = 'scoped memory for forward_pallas.1']
  #allocation3 [shape = 'u8[512]{0}', space=smem, size = 0x200, scoped, tag = 'prefetched SMEM operand 0']
  %s0 = inlined_call_operand.vmem [shape: s32[14], index: 0, kind: input, shape index: {}]
  %s1 = inlined_call_operand.vmem [shape: f32[128,54], index: 1, kind: input, shape index: {}]
  %s2 = inlined_call_operand.vmem [shape: f32[54,16], index: 2, kind: input, shape index: {}]
  %s3 = inlined_call_operand.vmem [shape: f32[1,16], index: 3, kind: input, shape index: {}]
  %s4 = inlined_call_operand.vmem [shape: f32[16,64,32], index: 4, kind: input, shape index: {}]
  %s5 = inlined_call_operand.vmem [shape: f32[1,32], index: 5, kind: input, shape index: {}]
  %s6 = inlined_call_operand.vmem [shape: f32[16,128], index: 6, kind: input, shape index: {}]
  %s7 = inlined_call_operand.vmem [shape: f32[32,128], index: 7, kind: input, shape index: {}]
  %s8 = inlined_call_operand.vmem [shape: f32[32,128], index: 8, kind: input, shape index: {}]
  %s9 = inlined_call_operand.vmem [shape: f32[1,128], index: 9, kind: input, shape index: {}]
  %s10 = inlined_call_operand.vmem [shape: f32[14,128], index: 10, kind: output, shape index: {}]
  %s11 = sld [smem:[#allocation0]]
  $region46: #{forward_pallas.1} parent=0
    _
  %s13 = ssub.s32 1, %s11
  %s14 = scalar_select 0, %s13, %s11
  %s15 = sshll.u32 %s0, 4
  %s16 = int_to_ptr.vmem [resolvable:$true] %s15
  %18 = dma.vmem_to_smem %s16, 16, [#allocation3], [#allocation2]
  %19 = dma.done [#allocation2], 16
  %20 = sfence
  // Predicated region
  $region2: #{forward_pallas.1} parent=0 // pred_check
    _
  $region3: #{forward_pallas.1} parent=0 // pred_check_branch
    %22 = sbr.rel (0) target = $region5
  $region4: #{forward_pallas.1} parent=0 // pred_region
    _
  $region5: #{forward_pallas.1} parent=0 // pred_fallthru
    _
  // Predicated region
  $region6: #{forward_pallas.1} parent=0 // pred_check
    _
  $region7: #{forward_pallas.1} parent=0 // pred_check_branch
    %24 = sbr.rel (0) target = $region9
  $region8: #{forward_pallas.1} parent=0 // pred_region
    _
  $region9: #{forward_pallas.1} parent=0 // pred_fallthru
    _
  // Predicated region
  $region10: #{forward_pallas.1} parent=0 // pred_check
    _
  $region11: #{forward_pallas.1} parent=0 // pred_check_branch
    %26 = sbr.rel (0) target = $region13
  $region12: #{forward_pallas.1} parent=0 // pred_region
    _
  $region13: #{forward_pallas.1} parent=0 // pred_fallthru
    _
  // Predicated region
  $region14: #{forward_pallas.1} parent=0 // pred_check
    _
  $region15: #{forward_pallas.1} parent=0 // pred_check_branch
    %28 = sbr.rel (0) target = $region17
  $region16: #{forward_pallas.1} parent=0 // pred_region
    _
  $region17: #{forward_pallas.1} parent=0 // pred_fallthru
    _
  // Predicated region
  $region18: #{forward_pallas.1} parent=0 // pred_check
    _
  $region19: #{forward_pallas.1} parent=0 // pred_check_branch
    %30 = sbr.rel (0) target = $region21
  $region20: #{forward_pallas.1} parent=0 // pred_region
    _
  $region21: #{forward_pallas.1} parent=0 // pred_fallthru
    _
  // Predicated region
  $region22: #{forward_pallas.1} parent=0 // pred_check
    _
  $region23: #{forward_pallas.1} parent=0 // pred_check_branch
    %32 = sbr.rel (0) target = $region25
  $region24: #{forward_pallas.1} parent=0 // pred_region
    _
  $region25: #{forward_pallas.1} parent=0 // pred_fallthru
    _
  // Predicated region
  $region26: #{forward_pallas.1} parent=0 // pred_check
    _
  $region27: #{forward_pallas.1} parent=0 // pred_check_branch
    %34 = sbr.rel (0) target = $region29
  $region28: #{forward_pallas.1} parent=0 // pred_region
    _
  $region29: #{forward_pallas.1} parent=0 // pred_fallthru
    _
  // Predicated region
  $region30: #{forward_pallas.1} parent=0 // pred_check
    _
  $region31: #{forward_pallas.1} parent=0 // pred_check_branch
    %36 = sbr.rel (0) target = $region33
  $region32: #{forward_pallas.1} parent=0 // pred_region
    _
  $region33: #{forward_pallas.1} parent=0 // pred_fallthru
    _
  // Predicated region
  $region34: #{forward_pallas.1} parent=0 // pred_check
    _
  $region35: #{forward_pallas.1} parent=0 // pred_check_branch
    %38 = sbr.rel (0) target = $region37
  $region36: #{forward_pallas.1} parent=0 // pred_region
    _
  $region37: #{forward_pallas.1} parent=0 // pred_fallthru
    _
  %v39 = vld [vmem:[%s1] sm:$0xff]
  %v40 = vld [vmem:[%s1 + $0x8] sm:$0xff]
  %v41 = vld [vmem:[%s1 + $0x10] sm:$0xff]
  %v42 = vld [vmem:[%s1 + $0x18] sm:$0xff]
  %v43 = vld [vmem:[%s1 + $0x20] sm:$0xff]
  %v44 = vld [vmem:[%s1 + $0x28] sm:$0xff]
  %v45 = vld [vmem:[%s1 + $0x30] sm:$0xff]
  %v46 = vld [vmem:[%s1 + $0x38] sm:$0xff]
  %v47 = vld [vmem:[%s1 + $0x40] sm:$0xff]
  %v48 = vld [vmem:[%s1 + $0x48] sm:$0xff]
  %v49 = vld [vmem:[%s1 + $0x50] sm:$0xff]
  %v50 = vld [vmem:[%s1 + $0x58] sm:$0xff]
  %v51 = vld [vmem:[%s1 + $0x60] sm:$0xff]
  %v52 = vld [vmem:[%s1 + $0x68] sm:$0xff]
  %v53 = vld [vmem:[%s1 + $0x70] sm:$0xff]
  %v54 = vld [vmem:[%s1 + $0x78] sm:$0xff]
  %v55 = vld [vmem:[%s2] sm:$0xff]
  %v56 = vld [vmem:[%s2 + $0x8] sm:$0xff]
  %v57 = vld [vmem:[%s2 + $0x10] sm:$0xff]
  %v58 = vld [vmem:[%s2 + $0x18] sm:$0xff]
  %v59 = vld [vmem:[%s2 + $0x20] sm:$0xff]
  %v60 = vld [vmem:[%s2 + $0x28] sm:$0xff]
  %v61 = vld [vmem:[%s2 + $0x30] sm:$0x3f]
  %v62 = vld [vmem:[%s3] sm:$0x1]
  %v64 = vlaneseq
  %v65 = vshrl.u32 %v64, 7
  %v66 = vsub.s32 0, %v65
  %v67 = vrot.slane %v62, %v66
  %vm69 = vcmask 441344
  %v71 = vsel %vm69, %v39, 0
  %v74 = vsel %vm69, %v40, 0
  %v77 = vsel %vm69, %v41, 0
  %v80 = vsel %vm69, %v42, 0
  %v83 = vsel %vm69, %v43, 0
  %v86 = vsel %vm69, %v44, 0
  %v89 = vsel %vm69, %v45, 0
  %v92 = vsel %vm69, %v46, 0
  %v95 = vsel %vm69, %v47, 0
  %v98 = vsel %vm69, %v48, 0
  %v101 = vsel %vm69, %v49, 0
  %v104 = vsel %vm69, %v50, 0
  %v107 = vsel %vm69, %v51, 0
  %v110 = vsel %vm69, %v52, 0
  %v113 = vsel %vm69, %v53, 0
  %v116 = vsel %vm69, %v54, 0
  %vm118 = vcmask 1045504
  %v120 = vsel %vm118, %v61, 0
  %122 = vmatprep.subr.mxu0 0.0
  %123 = vmatpush1.msra.mxu0 %v55
  %124 = vmatprep.subr.mxu0 0.0
  %125 = vmatpush1.msra.mxu0 %v56
  %126 = vmatprep.subr.mxu0 0.0
  %127 = vmatpush1.msra.mxu0 %v57
  %128 = vmatprep.subr.mxu0 0.0
  %129 = vmatpush1.msra.mxu0 %v58
  %130 = vmatprep.subr.mxu0 0.0
  %131 = vmatpush1.msra.mxu0 %v59
  %132 = vmatprep.subr.mxu0 0.0
  %133 = vmatpush1.msra.mxu0 %v60
  %134 = vmatprep.subr.mxu0 0.0
  %135 = vmatpush1.msra.mxu0 %v120
  %136 = vmatprep.subr.mxu0 0.0
  %137 = vmatpush1.msra.mxu0 0.0
  %138 = vmatprep.subr.mxu0 0.0
  %139 = vmatpush1.msra.mxu0 0.0
  %140 = vmatprep.subr.mxu0 0.0
  %141 = vmatpush1.msra.mxu0 0.0
  %142 = vmatprep.subr.mxu0 0.0
  %143 = vmatpush1.msra.mxu0 0.0
  %144 = vmatprep.subr.mxu0 0.0
  %145 = vmatpush1.msra.mxu0 0.0
  %146 = vmatprep.subr.mxu0 0.0
  %147 = vmatpush1.msra.mxu0 0.0
  %148 = vmatprep.subr.mxu0 0.0
  %149 = vmatpush1.msra.mxu0 0.0
  %150 = vmatprep.subr.mxu0 0.0
  %151 = vmatpush1.msra.mxu0 0.0
  %152 = vmatprep.subr.mxu0 0.0
  %153 = vmatpush1.msra.mxu0 0.0
  %154 = vmatprep.subr.mxu0 0.0
  %155 = vmatpush1.msra.mxu0 0.0
  %156 = vmatprep.subr.mxu0 0.0
  %157 = vmatpush1.msra.mxu0 0.0
  %158 = vmatprep.subr.mxu0 0.0
  %159 = vmatpush1.msra.mxu0 0.0
  %160 = vmatprep.subr.mxu0 0.0
  %161 = vmatpush1.msra.mxu0 0.0
  %162 = vmatprep.subr.mxu0 0.0
  %163 = vmatpush1.msra.mxu0 0.0
  %164 = vmatprep.subr.mxu0 0.0
  %165 = vmatpush1.msra.mxu0 0.0
  %166 = vmatprep.subr.mxu0 0.0
  %167 = vmatpush1.msra.mxu0 0.0
  %168 = vmatprep.subr.mxu0 0.0
  %169 = vmatpush1.msra.mxu0 0.0
  %170 = vmatprep.subr.mxu0 0.0
  %171 = vmatpush1.msra.mxu0 0.0
  %172 = vmatprep.subr.mxu0 0.0
  %173 = vmatpush1.msra.mxu0 0.0
  %174 = vmatprep.subr.mxu0 0.0
  %175 = vmatpush1.msra.mxu0 0.0
  %176 = vmatprep.subr.mxu0 0.0
  %177 = vmatpush1.msra.mxu0 0.0
  %178 = vmatprep.subr.mxu0 0.0
  %179 = vmatpush1.msra.mxu0 0.0
  %180 = vmatprep.subr.mxu0 0.0
  %181 = vmatpush1.msra.mxu0 0.0
  %182 = vmatprep.subr.mxu0 0.0
  %183 = vmatpush1.msra.mxu0 0.0
  %184 = vmatprep.subr.mxu0 0.0
  %185 = vmatpush1.msra.mxu0 0.0
  %186 = vmatprep.mubr.f32.mxu0 0.0
  %187 = vmatmul.mubr.f32.gmra.mrb[0].mxu0 %v71
  %v188 = vpop.f32.mrb[0].mxu0
  %v189 = vadd.f32 %v67, %v188
  %v190 = vpop.f32.mrb[0].mxu0
  %191 = vmatprep.mubr.f32.mxu0 0.0
  %192 = vmatmul.mubr.f32.gmra.mrb[0].mxu0 %v74
  %v193 = vpop.f32.mrb[0].mxu0
  %v194 = vadd.f32 %v67, %v193
  %v195 = vpop.f32.mrb[0].mxu0
  %196 = vmatprep.mubr.f32.mxu0 0.0
  %197 = vmatmul.mubr.f32.gmra.mrb[0].mxu0 %v77
  %v198 = vpop.f32.mrb[0].mxu0
  %v199 = vadd.f32 %v67, %v198
  %v200 = vpop.f32.mrb[0].mxu0
  %201 = vmatprep.mubr.f32.mxu0 0.0
  %202 = vmatmul.mubr.f32.gmra.mrb[0].mxu0 %v80
  %v203 = vpop.f32.mrb[0].mxu0
  %v204 = vadd.f32 %v67, %v203
  %v205 = vpop.f32.mrb[0].mxu0
  %206 = vmatprep.mubr.f32.mxu0 0.0
  %207 = vmatmul.mubr.f32.gmra.mrb[0].mxu0 %v83
  %v208 = vpop.f32.mrb[0].mxu0
  %v209 = vadd.f32 %v67, %v208
  %v210 = vpop.f32.mrb[0].mxu0
  %211 = vmatprep.mubr.f32.mxu0 0.0
  %212 = vmatmul.mubr.f32.gmra.mrb[0].mxu0 %v86
  %v213 = vpop.f32.mrb[0].mxu0
  %v214 = vadd.f32 %v67, %v213
  %v215 = vpop.f32.mrb[0].mxu0
  %216 = vmatprep.mubr.f32.mxu0 0.0
  %217 = vmatmul.mubr.f32.gmra.mrb[0].mxu0 %v89
  %v218 = vpop.f32.mrb[0].mxu0
  %v219 = vadd.f32 %v67, %v218
  %v220 = vpop.f32.mrb[0].mxu0
  %221 = vmatprep.mubr.f32.mxu0 0.0
  %222 = vmatmul.mubr.f32.gmra.mrb[0].mxu0 %v92
  %v223 = vpop.f32.mrb[0].mxu0
  %v224 = vadd.f32 %v67, %v223
  %v225 = vpop.f32.mrb[0].mxu0
  %226 = vmatprep.mubr.f32.mxu0 0.0
  %227 = vmatmul.mubr.f32.gmra.mrb[0].mxu0 %v95
  %v228 = vpop.f32.mrb[0].mxu0
  %v229 = vadd.f32 %v67, %v228
  %v230 = vpop.f32.mrb[0].mxu0
  %231 = vmatprep.mubr.f32.mxu0 0.0
  %232 = vmatmul.mubr.f32.gmra.mrb[0].mxu0 %v98
  %v233 = vpop.f32.mrb[0].mxu0
  %v234 = vadd.f32 %v67, %v233
  %v235 = vpop.f32.mrb[0].mxu0
  %236 = vmatprep.mubr.f32.mxu0 0.0
  %237 = vmatmul.mubr.f32.gmra.mrb[0].mxu0 %v101
  %v238 = vpop.f32.mrb[0].mxu0
  %v239 = vadd.f32 %v67, %v238
  %v240 = vpop.f32.mrb[0].mxu0
  %241 = vmatprep.mubr.f32.mxu0 0.0
  %242 = vmatmul.mubr.f32.gmra.mrb[0].mxu0 %v104
  %v243 = vpop.f32.mrb[0].mxu0
  %v244 = vadd.f32 %v67, %v243
  %v245 = vpop.f32.mrb[0].mxu0
  %246 = vmatprep.mubr.f32.mxu0 0.0
  %247 = vmatmul.mubr.f32.gmra.mrb[0].mxu0 %v107
  %v248 = vpop.f32.mrb[0].mxu0
  %v249 = vadd.f32 %v67, %v248
  %v250 = vpop.f32.mrb[0].mxu0
  %251 = vmatprep.mubr.f32.mxu0 0.0
  %252 = vmatmul.mubr.f32.gmra.mrb[0].mxu0 %v110
  %v253 = vpop.f32.mrb[0].mxu0
  %v254 = vadd.f32 %v67, %v253
  %v255 = vpop.f32.mrb[0].mxu0
  %256 = vmatprep.mubr.f32.mxu0 0.0
  %257 = vmatmul.mubr.f32.gmra.mrb[0].mxu0 %v113
  %v258 = vpop.f32.mrb[0].mxu0
  %v259 = vadd.f32 %v67, %v258
  %v260 = vpop.f32.mrb[0].mxu0
  %261 = vmatprep.mubr.f32.mxu0 0.0
  %262 = vmatmul.mubr.f32.gmra.mrb[0].mxu0 %v116
  %v263 = vpop.f32.mrb[0].mxu0
  %v264 = vadd.f32 %v67, %v263
  %v265 = vpop.f32.mrb[0].mxu0
  %266 = vdwg.mxu0
  %v267 = vmax.f32 %v189, 0.0
  %v268 = vmax.f32 %v194, 0.0
  %v269 = vmax.f32 %v199, 0.0
  %v270 = vmax.f32 %v204, 0.0
  %v271 = vmax.f32 %v209, 0.0
  %v272 = vmax.f32 %v214, 0.0
  %v273 = vmax.f32 %v219, 0.0
  %v274 = vmax.f32 %v224, 0.0
  %v275 = vmax.f32 %v229, 0.0
  %v276 = vmax.f32 %v234, 0.0
  %v277 = vmax.f32 %v239, 0.0
  %v278 = vmax.f32 %v244, 0.0
  %v279 = vmax.f32 %v249, 0.0
  %v280 = vmax.f32 %v254, 0.0
  %v281 = vmax.f32 %v259, 0.0
  %v282 = vmax.f32 %v264, 0.0
  %v283 = vld [vmem:[%s4] sm:$0xff]
  %v284 = vld [vmem:[%s4 + $0x8] sm:$0xff]
  %v285 = vld [vmem:[%s4 + $0x10] sm:$0xff]
  %v286 = vld [vmem:[%s4 + $0x18] sm:$0xff]
  %v287 = vld [vmem:[%s4 + $0x20] sm:$0xff]
  %v288 = vld [vmem:[%s4 + $0x28] sm:$0xff]
  %v289 = vld [vmem:[%s4 + $0x30] sm:$0xff]
  %v290 = vld [vmem:[%s4 + $0x38] sm:$0xff]
  %292 = vset.pattern.permute.xlu0 0
  %293 = vperm.xlu0 %292, %v267
  %v294 = vpop.permute.xlu0 %293
  %297 = vset.pattern.permute.xlu0 0
  %298 = vperm.xlu0 %297, %v268
  %v299 = vpop.permute.xlu0 %298
  %302 = vset.pattern.permute.xlu0 0
  %303 = vperm.xlu0 %302, %v269
  %v304 = vpop.permute.xlu0 %303
  %307 = vset.pattern.permute.xlu0 0
  %308 = vperm.xlu0 %307, %v270
  %v309 = vpop.permute.xlu0 %308
  %312 = vset.pattern.permute.xlu0 0
  %313 = vperm.xlu0 %312, %v271
  %v314 = vpop.permute.xlu0 %313
  %317 = vset.pattern.permute.xlu0 0
  %318 = vperm.xlu0 %317, %v272
  %v319 = vpop.permute.xlu0 %318
  %322 = vset.pattern.permute.xlu0 0
  %323 = vperm.xlu0 %322, %v273
  %v324 = vpop.permute.xlu0 %323
  %327 = vset.pattern.permute.xlu0 0
  %328 = vperm.xlu0 %327, %v274
  %v329 = vpop.permute.xlu0 %328
  %v331 = vmul.f32 %v294, %v283
  %v332 = vmul.f32 %v299, %v284
  %v333 = vmul.f32 %v304, %v285
  %v334 = vmul.f32 %v309, %v286
  %v335 = vmul.f32 %v314, %v287
  %v336 = vmul.f32 %v319, %v288
  %v337 = vmul.f32 %v324, %v289
  %v338 = vmul.f32 %v329, %v290
  %v339 = vadd.f32 %v331, 0.0
  %v340 = vadd.f32 %v332, 0.0
  %v341 = vadd.f32 %v333, 0.0
  %v342 = vadd.f32 %v334, 0.0
  %v343 = vadd.f32 %v335, 0.0
  %v344 = vadd.f32 %v336, 0.0
  %v345 = vadd.f32 %v337, 0.0
  %v346 = vadd.f32 %v338, 0.0
  %s347 = scalar_lea.vmem %s4, 64
  %v348 = vld [vmem:[%s347] sm:$0xff]
  %v349 = vld [vmem:[%s347 + $0x8] sm:$0xff]
  %v350 = vld [vmem:[%s347 + $0x10] sm:$0xff]
  %v351 = vld [vmem:[%s347 + $0x18] sm:$0xff]
  %v352 = vld [vmem:[%s347 + $0x20] sm:$0xff]
  %v353 = vld [vmem:[%s347 + $0x28] sm:$0xff]
  %v354 = vld [vmem:[%s347 + $0x30] sm:$0xff]
  %v355 = vld [vmem:[%s347 + $0x38] sm:$0xff]
  %356 = vset.pattern.permute.xlu0 1
  %357 = vperm.xlu0 %356, %v267
  %v358 = vpop.permute.xlu0 %357
  %360 = vset.pattern.permute.xlu0 1
  %361 = vperm.xlu0 %360, %v268
  %v362 = vpop.permute.xlu0 %361
  %364 = vset.pattern.permute.xlu0 1
  %365 = vperm.xlu0 %364, %v269
  %v366 = vpop.permute.xlu0 %365
  %368 = vset.pattern.permute.xlu0 1
  %369 = vperm.xlu0 %368, %v270
  %v370 = vpop.permute.xlu0 %369
  %372 = vset.pattern.permute.xlu0 1
  %373 = vperm.xlu0 %372, %v271
  %v374 = vpop.permute.xlu0 %373
  %376 = vset.pattern.permute.xlu0 1
  %377 = vperm.xlu0 %376, %v272
  %v378 = vpop.permute.xlu0 %377
  %380 = vset.pattern.permute.xlu0 1
  %381 = vperm.xlu0 %380, %v273
  %v382 = vpop.permute.xlu0 %381
  %384 = vset.pattern.permute.xlu0 1
  %385 = vperm.xlu0 %384, %v274
  %v386 = vpop.permute.xlu0 %385
  %v388 = vmul.f32 %v358, %v348
  %v389 = vmul.f32 %v362, %v349
  %v390 = vmul.f32 %v366, %v350
  %v391 = vmul.f32 %v370, %v351
  %v392 = vmul.f32 %v374, %v352
  %v393 = vmul.f32 %v378, %v353
  %v394 = vmul.f32 %v382, %v354
  %v395 = vmul.f32 %v386, %v355
  %v396 = vadd.f32 %v339, %v388
  %v397 = vadd.f32 %v340, %v389
  %v398 = vadd.f32 %v341, %v390
  %v399 = vadd.f32 %v342, %v391
  %v400 = vadd.f32 %v343, %v392
  %v401 = vadd.f32 %v344, %v393
  %v402 = vadd.f32 %v345, %v394
  %v403 = vadd.f32 %v346, %v395
  %s404 = scalar_lea.vmem %s4, 128
  %v405 = vld [vmem:[%s404] sm:$0xff]
  %v406 = vld [vmem:[%s404 + $0x8] sm:$0xff]
  %v407 = vld [vmem:[%s404 + $0x10] sm:$0xff]
  %v408 = vld [vmem:[%s404 + $0x18] sm:$0xff]
  %v409 = vld [vmem:[%s404 + $0x20] sm:$0xff]
  %v410 = vld [vmem:[%s404 + $0x28] sm:$0xff]
  %v411 = vld [vmem:[%s404 + $0x30] sm:$0xff]
  %v412 = vld [vmem:[%s404 + $0x38] sm:$0xff]
  %413 = vset.pattern.permute.xlu0 2
  %414 = vperm.xlu0 %413, %v267
  %v415 = vpop.permute.xlu0 %414
  %417 = vset.pattern.permute.xlu0 2
  %418 = vperm.xlu0 %417, %v268
  %v419 = vpop.permute.xlu0 %418
  %421 = vset.pattern.permute.xlu0 2
  %422 = vperm.xlu0 %421, %v269
  %v423 = vpop.permute.xlu0 %422
  %425 = vset.pattern.permute.xlu0 2
  %426 = vperm.xlu0 %425, %v270
  %v427 = vpop.permute.xlu0 %426
  %429 = vset.pattern.permute.xlu0 2
  %430 = vperm.xlu0 %429, %v271
  %v431 = vpop.permute.xlu0 %430
  %433 = vset.pattern.permute.xlu0 2
  %434 = vperm.xlu0 %433, %v272
  %v435 = vpop.permute.xlu0 %434
  %437 = vset.pattern.permute.xlu0 2
  %438 = vperm.xlu0 %437, %v273
  %v439 = vpop.permute.xlu0 %438
  %441 = vset.pattern.permute.xlu0 2
  %442 = vperm.xlu0 %441, %v274
  %v443 = vpop.permute.xlu0 %442
  %v445 = vmul.f32 %v415, %v405
  %v446 = vmul.f32 %v419, %v406
  %v447 = vmul.f32 %v423, %v407
  %v448 = vmul.f32 %v427, %v408
  %v449 = vmul.f32 %v431, %v409
  %v450 = vmul.f32 %v435, %v410
  %v451 = vmul.f32 %v439, %v411
  %v452 = vmul.f32 %v443, %v412
  %v453 = vadd.f32 %v396, %v445
  %v454 = vadd.f32 %v397, %v446
  %v455 = vadd.f32 %v398, %v447
  %v456 = vadd.f32 %v399, %v448
  %v457 = vadd.f32 %v400, %v449
  %v458 = vadd.f32 %v401, %v450
  %v459 = vadd.f32 %v402, %v451
  %v460 = vadd.f32 %v403, %v452
  %s461 = scalar_lea.vmem %s4, 192
  %v462 = vld [vmem:[%s461] sm:$0xff]
  %v463 = vld [vmem:[%s461 + $0x8] sm:$0xff]
  %v464 = vld [vmem:[%s461 + $0x10] sm:$0xff]
  %v465 = vld [vmem:[%s461 + $0x18] sm:$0xff]
  %v466 = vld [vmem:[%s461 + $0x20] sm:$0xff]
  %v467 = vld [vmem:[%s461 + $0x28] sm:$0xff]
  %v468 = vld [vmem:[%s461 + $0x30] sm:$0xff]
  %v469 = vld [vmem:[%s461 + $0x38] sm:$0xff]
  %470 = vset.pattern.permute.xlu0 3
  %471 = vperm.xlu0 %470, %v267
  %v472 = vpop.permute.xlu0 %471
  %474 = vset.pattern.permute.xlu0 3
  %475 = vperm.xlu0 %474, %v268
  %v476 = vpop.permute.xlu0 %475
  %478 = vset.pattern.permute.xlu0 3
  %479 = vperm.xlu0 %478, %v269
  %v480 = vpop.permute.xlu0 %479
  %482 = vset.pattern.permute.xlu0 3
  %483 = vperm.xlu0 %482, %v270
  %v484 = vpop.permute.xlu0 %483
  %486 = vset.pattern.permute.xlu0 3
  %487 = vperm.xlu0 %486, %v271
  %v488 = vpop.permute.xlu0 %487
  %490 = vset.pattern.permute.xlu0 3
  %491 = vperm.xlu0 %490, %v272
  %v492 = vpop.permute.xlu0 %491
  %494 = vset.pattern.permute.xlu0 3
  %495 = vperm.xlu0 %494, %v273
  %v496 = vpop.permute.xlu0 %495
  %498 = vset.pattern.permute.xlu0 3
  %499 = vperm.xlu0 %498, %v274
  %v500 = vpop.permute.xlu0 %499
  %v502 = vmul.f32 %v472, %v462
  %v503 = vmul.f32 %v476, %v463
  %v504 = vmul.f32 %v480, %v464
  %v505 = vmul.f32 %v484, %v465
  %v506 = vmul.f32 %v488, %v466
  %v507 = vmul.f32 %v492, %v467
  %v508 = vmul.f32 %v496, %v468
  %v509 = vmul.f32 %v500, %v469
  %v510 = vadd.f32 %v453, %v502
  %v511 = vadd.f32 %v454, %v503
  %v512 = vadd.f32 %v455, %v504
  %v513 = vadd.f32 %v456, %v505
  %v514 = vadd.f32 %v457, %v506
  %v515 = vadd.f32 %v458, %v507
  %v516 = vadd.f32 %v459, %v508
  %v517 = vadd.f32 %v460, %v509
  %s518 = scalar_lea.vmem %s4, 256
  %v519 = vld [vmem:[%s518] sm:$0xff]
  %v520 = vld [vmem:[%s518 + $0x8] sm:$0xff]
  %v521 = vld [vmem:[%s518 + $0x10] sm:$0xff]
  %v522 = vld [vmem:[%s518 + $0x18] sm:$0xff]
  %v523 = vld [vmem:[%s518 + $0x20] sm:$0xff]
  %v524 = vld [vmem:[%s518 + $0x28] sm:$0xff]
  %v525 = vld [vmem:[%s518 + $0x30] sm:$0xff]
  %v526 = vld [vmem:[%s518 + $0x38] sm:$0xff]
  %527 = vset.pattern.permute.xlu0 4
  %528 = vperm.xlu0 %527, %v267
  %v529 = vpop.permute.xlu0 %528
  %531 = vset.pattern.permute.xlu0 4
  %532 = vperm.xlu0 %531, %v268
  %v533 = vpop.permute.xlu0 %532
  %535 = vset.pattern.permute.xlu0 4
  %536 = vperm.xlu0 %535, %v269
  %v537 = vpop.permute.xlu0 %536
  %539 = vset.pattern.permute.xlu0 4
  %540 = vperm.xlu0 %539, %v270
  %v541 = vpop.permute.xlu0 %540
  %543 = vset.pattern.permute.xlu0 4
  %544 = vperm.xlu0 %543, %v271
  %v545 = vpop.permute.xlu0 %544
  %547 = vset.pattern.permute.xlu0 4
  %548 = vperm.xlu0 %547, %v272
  %v549 = vpop.permute.xlu0 %548
  %551 = vset.pattern.permute.xlu0 4
  %552 = vperm.xlu0 %551, %v273
  %v553 = vpop.permute.xlu0 %552
  %555 = vset.pattern.permute.xlu0 4
  %556 = vperm.xlu0 %555, %v274
  %v557 = vpop.permute.xlu0 %556
  %v559 = vmul.f32 %v529, %v519
  %v560 = vmul.f32 %v533, %v520
  %v561 = vmul.f32 %v537, %v521
  %v562 = vmul.f32 %v541, %v522
  %v563 = vmul.f32 %v545, %v523
  %v564 = vmul.f32 %v549, %v524
  %v565 = vmul.f32 %v553, %v525
  %v566 = vmul.f32 %v557, %v526
  %v567 = vadd.f32 %v510, %v559
  %v568 = vadd.f32 %v511, %v560
  %v569 = vadd.f32 %v512, %v561
  %v570 = vadd.f32 %v513, %v562
  %v571 = vadd.f32 %v514, %v563
  %v572 = vadd.f32 %v515, %v564
  %v573 = vadd.f32 %v516, %v565
  %v574 = vadd.f32 %v517, %v566
  %s575 = scalar_lea.vmem %s4, 320
  %v576 = vld [vmem:[%s575] sm:$0xff]
  %v577 = vld [vmem:[%s575 + $0x8] sm:$0xff]
  %v578 = vld [vmem:[%s575 + $0x10] sm:$0xff]
  %v579 = vld [vmem:[%s575 + $0x18] sm:$0xff]
  %v580 = vld [vmem:[%s575 + $0x20] sm:$0xff]
  %v581 = vld [vmem:[%s575 + $0x28] sm:$0xff]
  %v582 = vld [vmem:[%s575 + $0x30] sm:$0xff]
  %v583 = vld [vmem:[%s575 + $0x38] sm:$0xff]
  %584 = vset.pattern.permute.xlu0 5
  %585 = vperm.xlu0 %584, %v267
  %v586 = vpop.permute.xlu0 %585
  %588 = vset.pattern.permute.xlu0 5
  %589 = vperm.xlu0 %588, %v268
  %v590 = vpop.permute.xlu0 %589
  %592 = vset.pattern.permute.xlu0 5
  %593 = vperm.xlu0 %592, %v269
  %v594 = vpop.permute.xlu0 %593
  %596 = vset.pattern.permute.xlu0 5
  %597 = vperm.xlu0 %596, %v270
  %v598 = vpop.permute.xlu0 %597
  %600 = vset.pattern.permute.xlu0 5
  %601 = vperm.xlu0 %600, %v271
  %v602 = vpop.permute.xlu0 %601
  %604 = vset.pattern.permute.xlu0 5
  %605 = vperm.xlu0 %604, %v272
  %v606 = vpop.permute.xlu0 %605
  %608 = vset.pattern.permute.xlu0 5
  %609 = vperm.xlu0 %608, %v273
  %v610 = vpop.permute.xlu0 %609
  %612 = vset.pattern.permute.xlu0 5
  %613 = vperm.xlu0 %612, %v274
  %v614 = vpop.permute.xlu0 %613
  %v616 = vmul.f32 %v586, %v576
  %v617 = vmul.f32 %v590, %v577
  %v618 = vmul.f32 %v594, %v578
  %v619 = vmul.f32 %v598, %v579
  %v620 = vmul.f32 %v602, %v580
  %v621 = vmul.f32 %v606, %v581
  %v622 = vmul.f32 %v610, %v582
  %v623 = vmul.f32 %v614, %v583
  %v624 = vadd.f32 %v567, %v616
  %v625 = vadd.f32 %v568, %v617
  %v626 = vadd.f32 %v569, %v618
  %v627 = vadd.f32 %v570, %v619
  %v628 = vadd.f32 %v571, %v620
  %v629 = vadd.f32 %v572, %v621
  %v630 = vadd.f32 %v573, %v622
  %v631 = vadd.f32 %v574, %v623
  %s632 = scalar_lea.vmem %s4, 384
  %v633 = vld [vmem:[%s632] sm:$0xff]
  %v634 = vld [vmem:[%s632 + $0x8] sm:$0xff]
  %v635 = vld [vmem:[%s632 + $0x10] sm:$0xff]
  %v636 = vld [vmem:[%s632 + $0x18] sm:$0xff]
  %v637 = vld [vmem:[%s632 + $0x20] sm:$0xff]
  %v638 = vld [vmem:[%s632 + $0x28] sm:$0xff]
  %v639 = vld [vmem:[%s632 + $0x30] sm:$0xff]
  %v640 = vld [vmem:[%s632 + $0x38] sm:$0xff]
  %641 = vset.pattern.permute.xlu0 6
  %642 = vperm.xlu0 %641, %v267
  %v643 = vpop.permute.xlu0 %642
  %645 = vset.pattern.permute.xlu0 6
  %646 = vperm.xlu0 %645, %v268
  %v647 = vpop.permute.xlu0 %646
  %649 = vset.pattern.permute.xlu0 6
  %650 = vperm.xlu0 %649, %v269
  %v651 = vpop.permute.xlu0 %650
  %653 = vset.pattern.permute.xlu0 6
  %654 = vperm.xlu0 %653, %v270
  %v655 = vpop.permute.xlu0 %654
  %657 = vset.pattern.permute.xlu0 6
  %658 = vperm.xlu0 %657, %v271
  %v659 = vpop.permute.xlu0 %658
  %661 = vset.pattern.permute.xlu0 6
  %662 = vperm.xlu0 %661, %v272
  %v663 = vpop.permute.xlu0 %662
  %665 = vset.pattern.permute.xlu0 6
  %666 = vperm.xlu0 %665, %v273
  %v667 = vpop.permute.xlu0 %666
  %669 = vset.pattern.permute.xlu0 6
  %670 = vperm.xlu0 %669, %v274
  %v671 = vpop.permute.xlu0 %670
  %v673 = vmul.f32 %v643, %v633
  %v674 = vmul.f32 %v647, %v634
  %v675 = vmul.f32 %v651, %v635
  %v676 = vmul.f32 %v655, %v636
  %v677 = vmul.f32 %v659, %v637
  %v678 = vmul.f32 %v663, %v638
  %v679 = vmul.f32 %v667, %v639
  %v680 = vmul.f32 %v671, %v640
  %v681 = vadd.f32 %v624, %v673
  %v682 = vadd.f32 %v625, %v674
  %v683 = vadd.f32 %v626, %v675
  %v684 = vadd.f32 %v627, %v676
  %v685 = vadd.f32 %v628, %v677
  %v686 = vadd.f32 %v629, %v678
  %v687 = vadd.f32 %v630, %v679
  %v688 = vadd.f32 %v631, %v680
  %s689 = scalar_lea.vmem %s4, 448
  %v690 = vld [vmem:[%s689] sm:$0xff]
  %v691 = vld [vmem:[%s689 + $0x8] sm:$0xff]
  %v692 = vld [vmem:[%s689 + $0x10] sm:$0xff]
  %v693 = vld [vmem:[%s689 + $0x18] sm:$0xff]
  %v694 = vld [vmem:[%s689 + $0x20] sm:$0xff]
  %v695 = vld [vmem:[%s689 + $0x28] sm:$0xff]
  %v696 = vld [vmem:[%s689 + $0x30] sm:$0xff]
  %v697 = vld [vmem:[%s689 + $0x38] sm:$0xff]
  %698 = vset.pattern.permute.xlu0 7
  %699 = vperm.xlu0 %698, %v267
  %v700 = vpop.permute.xlu0 %699
  %702 = vset.pattern.permute.xlu0 7
  %703 = vperm.xlu0 %702, %v268
  %v704 = vpop.permute.xlu0 %703
  %706 = vset.pattern.permute.xlu0 7
  %707 = vperm.xlu0 %706, %v269
  %v708 = vpop.permute.xlu0 %707
  %710 = vset.pattern.permute.xlu0 7
  %711 = vperm.xlu0 %710, %v270
  %v712 = vpop.permute.xlu0 %711
  %714 = vset.pattern.permute.xlu0 7
  %715 = vperm.xlu0 %714, %v271
  %v716 = vpop.permute.xlu0 %715
  %718 = vset.pattern.permute.xlu0 7
  %719 = vperm.xlu0 %718, %v272
  %v720 = vpop.permute.xlu0 %719
  %722 = vset.pattern.permute.xlu0 7
  %723 = vperm.xlu0 %722, %v273
  %v724 = vpop.permute.xlu0 %723
  %726 = vset.pattern.permute.xlu0 7
  %727 = vperm.xlu0 %726, %v274
  %v728 = vpop.permute.xlu0 %727
  %v730 = vmul.f32 %v700, %v690
  %v731 = vmul.f32 %v704, %v691
  %v732 = vmul.f32 %v708, %v692
  %v733 = vmul.f32 %v712, %v693
  %v734 = vmul.f32 %v716, %v694
  %v735 = vmul.f32 %v720, %v695
  %v736 = vmul.f32 %v724, %v696
  %v737 = vmul.f32 %v728, %v697
  %v738 = vadd.f32 %v681, %v730
  %v739 = vadd.f32 %v682, %v731
  %v740 = vadd.f32 %v683, %v732
  %v741 = vadd.f32 %v684, %v733
  %v742 = vadd.f32 %v685, %v734
  %v743 = vadd.f32 %v686, %v735
  %v744 = vadd.f32 %v687, %v736
  %v745 = vadd.f32 %v688, %v737
  %s746 = scalar_lea.vmem %s4, 512
  %v747 = vld [vmem:[%s746] sm:$0xff]
  %v748 = vld [vmem:[%s746 + $0x8] sm:$0xff]
  %v749 = vld [vmem:[%s746 + $0x10] sm:$0xff]
  %v750 = vld [vmem:[%s746 + $0x18] sm:$0xff]
  %v751 = vld [vmem:[%s746 + $0x20] sm:$0xff]
  %v752 = vld [vmem:[%s746 + $0x28] sm:$0xff]
  %v753 = vld [vmem:[%s746 + $0x30] sm:$0xff]
  %v754 = vld [vmem:[%s746 + $0x38] sm:$0xff]
  %755 = vset.pattern.permute.xlu0 8
  %756 = vperm.xlu0 %755, %v267
  %v757 = vpop.permute.xlu0 %756
  %759 = vset.pattern.permute.xlu0 8
  %760 = vperm.xlu0 %759, %v268
  %v761 = vpop.permute.xlu0 %760
  %763 = vset.pattern.permute.xlu0 8
  %764 = vperm.xlu0 %763, %v269
  %v765 = vpop.permute.xlu0 %764
  %767 = vset.pattern.permute.xlu0 8
  %768 = vperm.xlu0 %767, %v270
  %v769 = vpop.permute.xlu0 %768
  %771 = vset.pattern.permute.xlu0 8
  %772 = vperm.xlu0 %771, %v271
  %v773 = vpop.permute.xlu0 %772
  %775 = vset.pattern.permute.xlu0 8
  %776 = vperm.xlu0 %775, %v272
  %v777 = vpop.permute.xlu0 %776
  %779 = vset.pattern.permute.xlu0 8
  %780 = vperm.xlu0 %779, %v273
  %v781 = vpop.permute.xlu0 %780
  %783 = vset.pattern.permute.xlu0 8
  %784 = vperm.xlu0 %783, %v274
  %v785 = vpop.permute.xlu0 %784
  %v787 = vmul.f32 %v757, %v747
  %v788 = vmul.f32 %v761, %v748
  %v789 = vmul.f32 %v765, %v749
  %v790 = vmul.f32 %v769, %v750
  %v791 = vmul.f32 %v773, %v751
  %v792 = vmul.f32 %v777, %v752
  %v793 = vmul.f32 %v781, %v753
  %v794 = vmul.f32 %v785, %v754
  %v795 = vadd.f32 %v738, %v787
  %v796 = vadd.f32 %v739, %v788
  %v797 = vadd.f32 %v740, %v789
  %v798 = vadd.f32 %v741, %v790
  %v799 = vadd.f32 %v742, %v791
  %v800 = vadd.f32 %v743, %v792
  %v801 = vadd.f32 %v744, %v793
  %v802 = vadd.f32 %v745, %v794
  %s803 = scalar_lea.vmem %s4, 576
  %v804 = vld [vmem:[%s803] sm:$0xff]
  %v805 = vld [vmem:[%s803 + $0x8] sm:$0xff]
  %v806 = vld [vmem:[%s803 + $0x10] sm:$0xff]
  %v807 = vld [vmem:[%s803 + $0x18] sm:$0xff]
  %v808 = vld [vmem:[%s803 + $0x20] sm:$0xff]
  %v809 = vld [vmem:[%s803 + $0x28] sm:$0xff]
  %v810 = vld [vmem:[%s803 + $0x30] sm:$0xff]
  %v811 = vld [vmem:[%s803 + $0x38] sm:$0xff]
  %812 = vset.pattern.permute.xlu0 9
  %813 = vperm.xlu0 %812, %v267
  %v814 = vpop.permute.xlu0 %813
  %816 = vset.pattern.permute.xlu0 9
  %817 = vperm.xlu0 %816, %v268
  %v818 = vpop.permute.xlu0 %817
  %820 = vset.pattern.permute.xlu0 9
  %821 = vperm.xlu0 %820, %v269
  %v822 = vpop.permute.xlu0 %821
  %824 = vset.pattern.permute.xlu0 9
  %825 = vperm.xlu0 %824, %v270
  %v826 = vpop.permute.xlu0 %825
  %828 = vset.pattern.permute.xlu0 9
  %829 = vperm.xlu0 %828, %v271
  %v830 = vpop.permute.xlu0 %829
  %832 = vset.pattern.permute.xlu0 9
  %833 = vperm.xlu0 %832, %v272
  %v834 = vpop.permute.xlu0 %833
  %836 = vset.pattern.permute.xlu0 9
  %837 = vperm.xlu0 %836, %v273
  %v838 = vpop.permute.xlu0 %837
  %840 = vset.pattern.permute.xlu0 9
  %841 = vperm.xlu0 %840, %v274
  %v842 = vpop.permute.xlu0 %841
  %v844 = vmul.f32 %v814, %v804
  %v845 = vmul.f32 %v818, %v805
  %v846 = vmul.f32 %v822, %v806
  %v847 = vmul.f32 %v826, %v807
  %v848 = vmul.f32 %v830, %v808
  %v849 = vmul.f32 %v834, %v809
  %v850 = vmul.f32 %v838, %v810
  %v851 = vmul.f32 %v842, %v811
  %v852 = vadd.f32 %v795, %v844
  %v853 = vadd.f32 %v796, %v845
  %v854 = vadd.f32 %v797, %v846
  %v855 = vadd.f32 %v798, %v847
  %v856 = vadd.f32 %v799, %v848
  %v857 = vadd.f32 %v800, %v849
  %v858 = vadd.f32 %v801, %v850
  %v859 = vadd.f32 %v802, %v851
  %s860 = scalar_lea.vmem %s4, 640
  %v861 = vld [vmem:[%s860] sm:$0xff]
  %v862 = vld [vmem:[%s860 + $0x8] sm:$0xff]
  %v863 = vld [vmem:[%s860 + $0x10] sm:$0xff]
  %v864 = vld [vmem:[%s860 + $0x18] sm:$0xff]
  %v865 = vld [vmem:[%s860 + $0x20] sm:$0xff]
  %v866 = vld [vmem:[%s860 + $0x28] sm:$0xff]
  %v867 = vld [vmem:[%s860 + $0x30] sm:$0xff]
  %v868 = vld [vmem:[%s860 + $0x38] sm:$0xff]
  %869 = vset.pattern.permute.xlu0 10
  %870 = vperm.xlu0 %869, %v267
  %v871 = vpop.permute.xlu0 %870
  %873 = vset.pattern.permute.xlu0 10
  %874 = vperm.xlu0 %873, %v268
  %v875 = vpop.permute.xlu0 %874
  %877 = vset.pattern.permute.xlu0 10
  %878 = vperm.xlu0 %877, %v269
  %v879 = vpop.permute.xlu0 %878
  %881 = vset.pattern.permute.xlu0 10
  %882 = vperm.xlu0 %881, %v270
  %v883 = vpop.permute.xlu0 %882
  %885 = vset.pattern.permute.xlu0 10
  %886 = vperm.xlu0 %885, %v271
  %v887 = vpop.permute.xlu0 %886
  %889 = vset.pattern.permute.xlu0 10
  %890 = vperm.xlu0 %889, %v272
  %v891 = vpop.permute.xlu0 %890
  %893 = vset.pattern.permute.xlu0 10
  %894 = vperm.xlu0 %893, %v273
  %v895 = vpop.permute.xlu0 %894
  %897 = vset.pattern.permute.xlu0 10
  %898 = vperm.xlu0 %897, %v274
  %v899 = vpop.permute.xlu0 %898
  %v901 = vmul.f32 %v871, %v861
  %v902 = vmul.f32 %v875, %v862
  %v903 = vmul.f32 %v879, %v863
  %v904 = vmul.f32 %v883, %v864
  %v905 = vmul.f32 %v887, %v865
  %v906 = vmul.f32 %v891, %v866
  %v907 = vmul.f32 %v895, %v867
  %v908 = vmul.f32 %v899, %v868
  %v909 = vadd.f32 %v852, %v901
  %v910 = vadd.f32 %v853, %v902
  %v911 = vadd.f32 %v854, %v903
  %v912 = vadd.f32 %v855, %v904
  %v913 = vadd.f32 %v856, %v905
  %v914 = vadd.f32 %v857, %v906
  %v915 = vadd.f32 %v858, %v907
  %v916 = vadd.f32 %v859, %v908
  %s917 = scalar_lea.vmem %s4, 704
  %v918 = vld [vmem:[%s917] sm:$0xff]
  %v919 = vld [vmem:[%s917 + $0x8] sm:$0xff]
  %v920 = vld [vmem:[%s917 + $0x10] sm:$0xff]
  %v921 = vld [vmem:[%s917 + $0x18] sm:$0xff]
  %v922 = vld [vmem:[%s917 + $0x20] sm:$0xff]
  %v923 = vld [vmem:[%s917 + $0x28] sm:$0xff]
  %v924 = vld [vmem:[%s917 + $0x30] sm:$0xff]
  %v925 = vld [vmem:[%s917 + $0x38] sm:$0xff]
  %926 = vset.pattern.permute.xlu0 11
  %927 = vperm.xlu0 %926, %v267
  %v928 = vpop.permute.xlu0 %927
  %930 = vset.pattern.permute.xlu0 11
  %931 = vperm.xlu0 %930, %v268
  %v932 = vpop.permute.xlu0 %931
  %934 = vset.pattern.permute.xlu0 11
  %935 = vperm.xlu0 %934, %v269
  %v936 = vpop.permute.xlu0 %935
  %938 = vset.pattern.permute.xlu0 11
  %939 = vperm.xlu0 %938, %v270
  %v940 = vpop.permute.xlu0 %939
  %942 = vset.pattern.permute.xlu0 11
  %943 = vperm.xlu0 %942, %v271
  %v944 = vpop.permute.xlu0 %943
  %946 = vset.pattern.permute.xlu0 11
  %947 = vperm.xlu0 %946, %v272
  %v948 = vpop.permute.xlu0 %947
  %950 = vset.pattern.permute.xlu0 11
  %951 = vperm.xlu0 %950, %v273
  %v952 = vpop.permute.xlu0 %951
  %954 = vset.pattern.permute.xlu0 11
  %955 = vperm.xlu0 %954, %v274
  %v956 = vpop.permute.xlu0 %955
  %v958 = vmul.f32 %v928, %v918
  %v959 = vmul.f32 %v932, %v919
  %v960 = vmul.f32 %v936, %v920
  %v961 = vmul.f32 %v940, %v921
  %v962 = vmul.f32 %v944, %v922
  %v963 = vmul.f32 %v948, %v923
  %v964 = vmul.f32 %v952, %v924
  %v965 = vmul.f32 %v956, %v925
  %v966 = vadd.f32 %v909, %v958
  %v967 = vadd.f32 %v910, %v959
  %v968 = vadd.f32 %v911, %v960
  %v969 = vadd.f32 %v912, %v961
  %v970 = vadd.f32 %v913, %v962
  %v971 = vadd.f32 %v914, %v963
  %v972 = vadd.f32 %v915, %v964
  %v973 = vadd.f32 %v916, %v965
  %s974 = scalar_lea.vmem %s4, 768
  %v975 = vld [vmem:[%s974] sm:$0xff]
  %v976 = vld [vmem:[%s974 + $0x8] sm:$0xff]
  %v977 = vld [vmem:[%s974 + $0x10] sm:$0xff]
  %v978 = vld [vmem:[%s974 + $0x18] sm:$0xff]
  %v979 = vld [vmem:[%s974 + $0x20] sm:$0xff]
  %v980 = vld [vmem:[%s974 + $0x28] sm:$0xff]
  %v981 = vld [vmem:[%s974 + $0x30] sm:$0xff]
  %v982 = vld [vmem:[%s974 + $0x38] sm:$0xff]
  %983 = vset.pattern.permute.xlu0 12
  %984 = vperm.xlu0 %983, %v267
  %v985 = vpop.permute.xlu0 %984
  %987 = vset.pattern.permute.xlu0 12
  %988 = vperm.xlu0 %987, %v268
  %v989 = vpop.permute.xlu0 %988
  %991 = vset.pattern.permute.xlu0 12
  %992 = vperm.xlu0 %991, %v269
  %v993 = vpop.permute.xlu0 %992
  %995 = vset.pattern.permute.xlu0 12
  %996 = vperm.xlu0 %995, %v270
  %v997 = vpop.permute.xlu0 %996
  %999 = vset.pattern.permute.xlu0 12
  %1000 = vperm.xlu0 %999, %v271
  %v1001 = vpop.permute.xlu0 %1000
  %1003 = vset.pattern.permute.xlu0 12
  %1004 = vperm.xlu0 %1003, %v272
  %v1005 = vpop.permute.xlu0 %1004
  %1007 = vset.pattern.permute.xlu0 12
  %1008 = vperm.xlu0 %1007, %v273
  %v1009 = vpop.permute.xlu0 %1008
  %1011 = vset.pattern.permute.xlu0 12
  %1012 = vperm.xlu0 %1011, %v274
  %v1013 = vpop.permute.xlu0 %1012
  %v1015 = vmul.f32 %v985, %v975
  %v1016 = vmul.f32 %v989, %v976
  %v1017 = vmul.f32 %v993, %v977
  %v1018 = vmul.f32 %v997, %v978
  %v1019 = vmul.f32 %v1001, %v979
  %v1020 = vmul.f32 %v1005, %v980
  %v1021 = vmul.f32 %v1009, %v981
  %v1022 = vmul.f32 %v1013, %v982
  %v1023 = vadd.f32 %v966, %v1015
  %v1024 = vadd.f32 %v967, %v1016
  %v1025 = vadd.f32 %v968, %v1017
  %v1026 = vadd.f32 %v969, %v1018
  %v1027 = vadd.f32 %v970, %v1019
  %v1028 = vadd.f32 %v971, %v1020
  %v1029 = vadd.f32 %v972, %v1021
  %v1030 = vadd.f32 %v973, %v1022
  %s1031 = scalar_lea.vmem %s4, 832
  %v1032 = vld [vmem:[%s1031] sm:$0xff]
  %v1033 = vld [vmem:[%s1031 + $0x8] sm:$0xff]
  %v1034 = vld [vmem:[%s1031 + $0x10] sm:$0xff]
  %v1035 = vld [vmem:[%s1031 + $0x18] sm:$0xff]
  %v1036 = vld [vmem:[%s1031 + $0x20] sm:$0xff]
  %v1037 = vld [vmem:[%s1031 + $0x28] sm:$0xff]
  %v1038 = vld [vmem:[%s1031 + $0x30] sm:$0xff]
  %v1039 = vld [vmem:[%s1031 + $0x38] sm:$0xff]
  %1040 = vset.pattern.permute.xlu0 13
  %1041 = vperm.xlu0 %1040, %v267
  %v1042 = vpop.permute.xlu0 %1041
  %1044 = vset.pattern.permute.xlu0 13
  %1045 = vperm.xlu0 %1044, %v268
  %v1046 = vpop.permute.xlu0 %1045
  %1048 = vset.pattern.permute.xlu0 13
  %1049 = vperm.xlu0 %1048, %v269
  %v1050 = vpop.permute.xlu0 %1049
  %1052 = vset.pattern.permute.xlu0 13
  %1053 = vperm.xlu0 %1052, %v270
  %v1054 = vpop.permute.xlu0 %1053
  %1056 = vset.pattern.permute.xlu0 13
  %1057 = vperm.xlu0 %1056, %v271
  %v1058 = vpop.permute.xlu0 %1057
  %1060 = vset.pattern.permute.xlu0 13
  %1061 = vperm.xlu0 %1060, %v272
  %v1062 = vpop.permute.xlu0 %1061
  %1064 = vset.pattern.permute.xlu0 13
  %1065 = vperm.xlu0 %1064, %v273
  %v1066 = vpop.permute.xlu0 %1065
  %1068 = vset.pattern.permute.xlu0 13
  %1069 = vperm.xlu0 %1068, %v274
  %v1070 = vpop.permute.xlu0 %1069
  %v1072 = vmul.f32 %v1042, %v1032
  %v1073 = vmul.f32 %v1046, %v1033
  %v1074 = vmul.f32 %v1050, %v1034
  %v1075 = vmul.f32 %v1054, %v1035
  %v1076 = vmul.f32 %v1058, %v1036
  %v1077 = vmul.f32 %v1062, %v1037
  %v1078 = vmul.f32 %v1066, %v1038
  %v1079 = vmul.f32 %v1070, %v1039
  %v1080 = vadd.f32 %v1023, %v1072
  %v1081 = vadd.f32 %v1024, %v1073
  %v1082 = vadd.f32 %v1025, %v1074
  %v1083 = vadd.f32 %v1026, %v1075
  %v1084 = vadd.f32 %v1027, %v1076
  %v1085 = vadd.f32 %v1028, %v1077
  %v1086 = vadd.f32 %v1029, %v1078
  %v1087 = vadd.f32 %v1030, %v1079
  %s1088 = scalar_lea.vmem %s4, 896
  %v1089 = vld [vmem:[%s1088] sm:$0xff]
  %v1090 = vld [vmem:[%s1088 + $0x8] sm:$0xff]
  %v1091 = vld [vmem:[%s1088 + $0x10] sm:$0xff]
  %v1092 = vld [vmem:[%s1088 + $0x18] sm:$0xff]
  %v1093 = vld [vmem:[%s1088 + $0x20] sm:$0xff]
  %v1094 = vld [vmem:[%s1088 + $0x28] sm:$0xff]
  %v1095 = vld [vmem:[%s1088 + $0x30] sm:$0xff]
  %v1096 = vld [vmem:[%s1088 + $0x38] sm:$0xff]
  %1097 = vset.pattern.permute.xlu0 14
  %1098 = vperm.xlu0 %1097, %v267
  %v1099 = vpop.permute.xlu0 %1098
  %1101 = vset.pattern.permute.xlu0 14
  %1102 = vperm.xlu0 %1101, %v268
  %v1103 = vpop.permute.xlu0 %1102
  %1105 = vset.pattern.permute.xlu0 14
  %1106 = vperm.xlu0 %1105, %v269
  %v1107 = vpop.permute.xlu0 %1106
  %1109 = vset.pattern.permute.xlu0 14
  %1110 = vperm.xlu0 %1109, %v270
  %v1111 = vpop.permute.xlu0 %1110
  %1113 = vset.pattern.permute.xlu0 14
  %1114 = vperm.xlu0 %1113, %v271
  %v1115 = vpop.permute.xlu0 %1114
  %1117 = vset.pattern.permute.xlu0 14
  %1118 = vperm.xlu0 %1117, %v272
  %v1119 = vpop.permute.xlu0 %1118
  %1121 = vset.pattern.permute.xlu0 14
  %1122 = vperm.xlu0 %1121, %v273
  %v1123 = vpop.permute.xlu0 %1122
  %1125 = vset.pattern.permute.xlu0 14
  %1126 = vperm.xlu0 %1125, %v274
  %v1127 = vpop.permute.xlu0 %1126
  %v1129 = vmul.f32 %v1099, %v1089
  %v1130 = vmul.f32 %v1103, %v1090
  %v1131 = vmul.f32 %v1107, %v1091
  %v1132 = vmul.f32 %v1111, %v1092
  %v1133 = vmul.f32 %v1115, %v1093
  %v1134 = vmul.f32 %v1119, %v1094
  %v1135 = vmul.f32 %v1123, %v1095
  %v1136 = vmul.f32 %v1127, %v1096
  %v1137 = vadd.f32 %v1080, %v1129
  %v1138 = vadd.f32 %v1081, %v1130
  %v1139 = vadd.f32 %v1082, %v1131
  %v1140 = vadd.f32 %v1083, %v1132
  %v1141 = vadd.f32 %v1084, %v1133
  %v1142 = vadd.f32 %v1085, %v1134
  %v1143 = vadd.f32 %v1086, %v1135
  %v1144 = vadd.f32 %v1087, %v1136
  %s1145 = scalar_lea.vmem %s4, 960
  %v1146 = vld [vmem:[%s1145] sm:$0xff]
  %v1147 = vld [vmem:[%s1145 + $0x8] sm:$0xff]
  %v1148 = vld [vmem:[%s1145 + $0x10] sm:$0xff]
  %v1149 = vld [vmem:[%s1145 + $0x18] sm:$0xff]
  %v1150 = vld [vmem:[%s1145 + $0x20] sm:$0xff]
  %v1151 = vld [vmem:[%s1145 + $0x28] sm:$0xff]
  %v1152 = vld [vmem:[%s1145 + $0x30] sm:$0xff]
  %v1153 = vld [vmem:[%s1145 + $0x38] sm:$0xff]
  %1154 = vset.pattern.permute.xlu0 15
  %1155 = vperm.xlu0 %1154, %v267
  %v1156 = vpop.permute.xlu0 %1155
  %1158 = vset.pattern.permute.xlu0 15
  %1159 = vperm.xlu0 %1158, %v268
  %v1160 = vpop.permute.xlu0 %1159
  %1162 = vset.pattern.permute.xlu0 15
  %1163 = vperm.xlu0 %1162, %v269
  %v1164 = vpop.permute.xlu0 %1163
  %1166 = vset.pattern.permute.xlu0 15
  %1167 = vperm.xlu0 %1166, %v270
  %v1168 = vpop.permute.xlu0 %1167
  %1170 = vset.pattern.permute.xlu0 15
  %1171 = vperm.xlu0 %1170, %v271
  %v1172 = vpop.permute.xlu0 %1171
  %1174 = vset.pattern.permute.xlu0 15
  %1175 = vperm.xlu0 %1174, %v272
  %v1176 = vpop.permute.xlu0 %1175
  %1178 = vset.pattern.permute.xlu0 15
  %1179 = vperm.xlu0 %1178, %v273
  %v1180 = vpop.permute.xlu0 %1179
  %1182 = vset.pattern.permute.xlu0 15
  %1183 = vperm.xlu0 %1182, %v274
  %v1184 = vpop.permute.xlu0 %1183
  %v1186 = vmul.f32 %v1156, %v1146
  %v1187 = vmul.f32 %v1160, %v1147
  %v1188 = vmul.f32 %v1164, %v1148
  %v1189 = vmul.f32 %v1168, %v1149
  %v1190 = vmul.f32 %v1172, %v1150
  %v1191 = vmul.f32 %v1176, %v1151
  %v1192 = vmul.f32 %v1180, %v1152
  %v1193 = vmul.f32 %v1184, %v1153
  %v1194 = vadd.f32 %v1137, %v1186
  %v1195 = vadd.f32 %v1138, %v1187
  %v1196 = vadd.f32 %v1139, %v1188
  %v1197 = vadd.f32 %v1140, %v1189
  %v1198 = vadd.f32 %v1141, %v1190
  %v1199 = vadd.f32 %v1142, %v1191
  %v1200 = vadd.f32 %v1143, %v1192
  %v1201 = vadd.f32 %v1144, %v1193
  %vm1202 = vcmask 261120
  %v1203 = vsel %vm1202, %v1194, 0.0
  %v1204 = vsel %vm1202, %v1195, 0.0
  %v1205 = vadd.f32 %v1203, %v1204
  %v1206 = vsel %vm1202, %v1196, 0.0
  %v1207 = vadd.f32 %v1205, %v1206
  %v1208 = vsel %vm1202, %v1197, 0.0
  %v1209 = vadd.f32 %v1207, %v1208
  %v1210 = vsel %vm1202, %v1198, 0.0
  %v1211 = vadd.f32 %v1209, %v1210
  %v1212 = vsel %vm1202, %v1199, 0.0
  %v1213 = vadd.f32 %v1211, %v1212
  %v1214 = vsel %vm1202, %v1200, 0.0
  %v1215 = vadd.f32 %v1213, %v1214
  %v1216 = vsel %vm1202, %v1201, 0.0
  %v1217 = vadd.f32 %v1215, %v1216
  %v1218 = vrot.slane %v1217, 4
  %v1219 = vadd.f32 %v1217, %v1218
  %v1220 = vrot.slane %v1219, 2
  %v1221 = vadd.f32 %v1219, %v1220
  %v1222 = vrot.slane %v1221, 1
  %v1223 = vadd.f32 %v1221, %v1222
  %1225 = vset.pattern.permute.xlu0 0
  %1226 = vperm.xlu0 %1225, %v275
  %v1227 = vpop.permute.xlu0 %1226
  %1230 = vset.pattern.permute.xlu0 0
  %1231 = vperm.xlu0 %1230, %v276
  %v1232 = vpop.permute.xlu0 %1231
  %1235 = vset.pattern.permute.xlu0 0
  %1236 = vperm.xlu0 %1235, %v277
  %v1237 = vpop.permute.xlu0 %1236
  %1240 = vset.pattern.permute.xlu0 0
  %1241 = vperm.xlu0 %1240, %v278
  %v1242 = vpop.permute.xlu0 %1241
  %1245 = vset.pattern.permute.xlu0 0
  %1246 = vperm.xlu0 %1245, %v279
  %v1247 = vpop.permute.xlu0 %1246
  %1250 = vset.pattern.permute.xlu0 0
  %1251 = vperm.xlu0 %1250, %v280
  %v1252 = vpop.permute.xlu0 %1251
  %1255 = vset.pattern.permute.xlu0 0
  %1256 = vperm.xlu0 %1255, %v281
  %v1257 = vpop.permute.xlu0 %1256
  %1260 = vset.pattern.permute.xlu0 0
  %1261 = vperm.xlu0 %1260, %v282
  %v1262 = vpop.permute.xlu0 %1261
  %v1264 = vmul.f32 %v1227, %v283
  %v1265 = vmul.f32 %v1232, %v284
  %v1266 = vmul.f32 %v1237, %v285
  %v1267 = vmul.f32 %v1242, %v286
  %v1268 = vmul.f32 %v1247, %v287
  %v1269 = vmul.f32 %v1252, %v288
  %v1270 = vmul.f32 %v1257, %v289
  %v1271 = vmul.f32 %v1262, %v290
  %v1272 = vadd.f32 %v1264, 0.0
  %v1273 = vadd.f32 %v1265, 0.0
  %v1274 = vadd.f32 %v1266, 0.0
  %v1275 = vadd.f32 %v1267, 0.0
  %v1276 = vadd.f32 %v1268, 0.0
  %v1277 = vadd.f32 %v1269, 0.0
  %v1278 = vadd.f32 %v1270, 0.0
  %v1279 = vadd.f32 %v1271, 0.0
  %1280 = vset.pattern.permute.xlu0 1
  %1281 = vperm.xlu0 %1280, %v275
  %v1282 = vpop.permute.xlu0 %1281
  %1284 = vset.pattern.permute.xlu0 1
  %1285 = vperm.xlu0 %1284, %v276
  %v1286 = vpop.permute.xlu0 %1285
  %1288 = vset.pattern.permute.xlu0 1
  %1289 = vperm.xlu0 %1288, %v277
  %v1290 = vpop.permute.xlu0 %1289
  %1292 = vset.pattern.permute.xlu0 1
  %1293 = vperm.xlu0 %1292, %v278
  %v1294 = vpop.permute.xlu0 %1293
  %1296 = vset.pattern.permute.xlu0 1
  %1297 = vperm.xlu0 %1296, %v279
  %v1298 = vpop.permute.xlu0 %1297
  %1300 = vset.pattern.permute.xlu0 1
  %1301 = vperm.xlu0 %1300, %v280
  %v1302 = vpop.permute.xlu0 %1301
  %1304 = vset.pattern.permute.xlu0 1
  %1305 = vperm.xlu0 %1304, %v281
  %v1306 = vpop.permute.xlu0 %1305
  %1308 = vset.pattern.permute.xlu0 1
  %1309 = vperm.xlu0 %1308, %v282
  %v1310 = vpop.permute.xlu0 %1309
  %v1312 = vmul.f32 %v1282, %v348
  %v1313 = vmul.f32 %v1286, %v349
  %v1314 = vmul.f32 %v1290, %v350
  %v1315 = vmul.f32 %v1294, %v351
  %v1316 = vmul.f32 %v1298, %v352
  %v1317 = vmul.f32 %v1302, %v353
  %v1318 = vmul.f32 %v1306, %v354
  %v1319 = vmul.f32 %v1310, %v355
  %v1320 = vadd.f32 %v1272, %v1312
  %v1321 = vadd.f32 %v1273, %v1313
  %v1322 = vadd.f32 %v1274, %v1314
  %v1323 = vadd.f32 %v1275, %v1315
  %v1324 = vadd.f32 %v1276, %v1316
  %v1325 = vadd.f32 %v1277, %v1317
  %v1326 = vadd.f32 %v1278, %v1318
  %v1327 = vadd.f32 %v1279, %v1319
  %1328 = vset.pattern.permute.xlu0 2
  %1329 = vperm.xlu0 %1328, %v275
  %v1330 = vpop.permute.xlu0 %1329
  %1332 = vset.pattern.permute.xlu0 2
  %1333 = vperm.xlu0 %1332, %v276
  %v1334 = vpop.permute.xlu0 %1333
  %1336 = vset.pattern.permute.xlu0 2
  %1337 = vperm.xlu0 %1336, %v277
  %v1338 = vpop.permute.xlu0 %1337
  %1340 = vset.pattern.permute.xlu0 2
  %1341 = vperm.xlu0 %1340, %v278
  %v1342 = vpop.permute.xlu0 %1341
  %1344 = vset.pattern.permute.xlu0 2
  %1345 = vperm.xlu0 %1344, %v279
  %v1346 = vpop.permute.xlu0 %1345
  %1348 = vset.pattern.permute.xlu0 2
  %1349 = vperm.xlu0 %1348, %v280
  %v1350 = vpop.permute.xlu0 %1349
  %1352 = vset.pattern.permute.xlu0 2
  %1353 = vperm.xlu0 %1352, %v281
  %v1354 = vpop.permute.xlu0 %1353
  %1356 = vset.pattern.permute.xlu0 2
  %1357 = vperm.xlu0 %1356, %v282
  %v1358 = vpop.permute.xlu0 %1357
  %v1360 = vmul.f32 %v1330, %v405
  %v1361 = vmul.f32 %v1334, %v406
  %v1362 = vmul.f32 %v1338, %v407
  %v1363 = vmul.f32 %v1342, %v408
  %v1364 = vmul.f32 %v1346, %v409
  %v1365 = vmul.f32 %v1350, %v410
  %v1366 = vmul.f32 %v1354, %v411
  %v1367 = vmul.f32 %v1358, %v412
  %v1368 = vadd.f32 %v1320, %v1360
  %v1369 = vadd.f32 %v1321, %v1361
  %v1370 = vadd.f32 %v1322, %v1362
  %v1371 = vadd.f32 %v1323, %v1363
  %v1372 = vadd.f32 %v1324, %v1364
  %v1373 = vadd.f32 %v1325, %v1365
  %v1374 = vadd.f32 %v1326, %v1366
  %v1375 = vadd.f32 %v1327, %v1367
  %1376 = vset.pattern.permute.xlu0 3
  %1377 = vperm.xlu0 %1376, %v275
  %v1378 = vpop.permute.xlu0 %1377
  %1380 = vset.pattern.permute.xlu0 3
  %1381 = vperm.xlu0 %1380, %v276
  %v1382 = vpop.permute.xlu0 %1381
  %1384 = vset.pattern.permute.xlu0 3
  %1385 = vperm.xlu0 %1384, %v277
  %v1386 = vpop.permute.xlu0 %1385
  %1388 = vset.pattern.permute.xlu0 3
  %1389 = vperm.xlu0 %1388, %v278
  %v1390 = vpop.permute.xlu0 %1389
  %1392 = vset.pattern.permute.xlu0 3
  %1393 = vperm.xlu0 %1392, %v279
  %v1394 = vpop.permute.xlu0 %1393
  %1396 = vset.pattern.permute.xlu0 3
  %1397 = vperm.xlu0 %1396, %v280
  %v1398 = vpop.permute.xlu0 %1397
  %1400 = vset.pattern.permute.xlu0 3
  %1401 = vperm.xlu0 %1400, %v281
  %v1402 = vpop.permute.xlu0 %1401
  %1404 = vset.pattern.permute.xlu0 3
  %1405 = vperm.xlu0 %1404, %v282
  %v1406 = vpop.permute.xlu0 %1405
  %v1408 = vmul.f32 %v1378, %v462
  %v1409 = vmul.f32 %v1382, %v463
  %v1410 = vmul.f32 %v1386, %v464
  %v1411 = vmul.f32 %v1390, %v465
  %v1412 = vmul.f32 %v1394, %v466
  %v1413 = vmul.f32 %v1398, %v467
  %v1414 = vmul.f32 %v1402, %v468
  %v1415 = vmul.f32 %v1406, %v469
  %v1416 = vadd.f32 %v1368, %v1408
  %v1417 = vadd.f32 %v1369, %v1409
  %v1418 = vadd.f32 %v1370, %v1410
  %v1419 = vadd.f32 %v1371, %v1411
  %v1420 = vadd.f32 %v1372, %v1412
  %v1421 = vadd.f32 %v1373, %v1413
  %v1422 = vadd.f32 %v1374, %v1414
  %v1423 = vadd.f32 %v1375, %v1415
  %1424 = vset.pattern.permute.xlu0 4
  %1425 = vperm.xlu0 %1424, %v275
  %v1426 = vpop.permute.xlu0 %1425
  %1428 = vset.pattern.permute.xlu0 4
  %1429 = vperm.xlu0 %1428, %v276
  %v1430 = vpop.permute.xlu0 %1429
  %1432 = vset.pattern.permute.xlu0 4
  %1433 = vperm.xlu0 %1432, %v277
  %v1434 = vpop.permute.xlu0 %1433
  %1436 = vset.pattern.permute.xlu0 4
  %1437 = vperm.xlu0 %1436, %v278
  %v1438 = vpop.permute.xlu0 %1437
  %1440 = vset.pattern.permute.xlu0 4
  %1441 = vperm.xlu0 %1440, %v279
  %v1442 = vpop.permute.xlu0 %1441
  %1444 = vset.pattern.permute.xlu0 4
  %1445 = vperm.xlu0 %1444, %v280
  %v1446 = vpop.permute.xlu0 %1445
  %1448 = vset.pattern.permute.xlu0 4
  %1449 = vperm.xlu0 %1448, %v281
  %v1450 = vpop.permute.xlu0 %1449
  %1452 = vset.pattern.permute.xlu0 4
  %1453 = vperm.xlu0 %1452, %v282
  %v1454 = vpop.permute.xlu0 %1453
  %v1456 = vmul.f32 %v1426, %v519
  %v1457 = vmul.f32 %v1430, %v520
  %v1458 = vmul.f32 %v1434, %v521
  %v1459 = vmul.f32 %v1438, %v522
  %v1460 = vmul.f32 %v1442, %v523
  %v1461 = vmul.f32 %v1446, %v524
  %v1462 = vmul.f32 %v1450, %v525
  %v1463 = vmul.f32 %v1454, %v526
  %v1464 = vadd.f32 %v1416, %v1456
  %v1465 = vadd.f32 %v1417, %v1457
  %v1466 = vadd.f32 %v1418, %v1458
  %v1467 = vadd.f32 %v1419, %v1459
  %v1468 = vadd.f32 %v1420, %v1460
  %v1469 = vadd.f32 %v1421, %v1461
  %v1470 = vadd.f32 %v1422, %v1462
  %v1471 = vadd.f32 %v1423, %v1463
  %1472 = vset.pattern.permute.xlu0 5
  %1473 = vperm.xlu0 %1472, %v275
  %v1474 = vpop.permute.xlu0 %1473
  %1476 = vset.pattern.permute.xlu0 5
  %1477 = vperm.xlu0 %1476, %v276
  %v1478 = vpop.permute.xlu0 %1477
  %1480 = vset.pattern.permute.xlu0 5
  %1481 = vperm.xlu0 %1480, %v277
  %v1482 = vpop.permute.xlu0 %1481
  %1484 = vset.pattern.permute.xlu0 5
  %1485 = vperm.xlu0 %1484, %v278
  %v1486 = vpop.permute.xlu0 %1485
  %1488 = vset.pattern.permute.xlu0 5
  %1489 = vperm.xlu0 %1488, %v279
  %v1490 = vpop.permute.xlu0 %1489
  %1492 = vset.pattern.permute.xlu0 5
  %1493 = vperm.xlu0 %1492, %v280
  %v1494 = vpop.permute.xlu0 %1493
  %1496 = vset.pattern.permute.xlu0 5
  %1497 = vperm.xlu0 %1496, %v281
  %v1498 = vpop.permute.xlu0 %1497
  %1500 = vset.pattern.permute.xlu0 5
  %1501 = vperm.xlu0 %1500, %v282
  %v1502 = vpop.permute.xlu0 %1501
  %v1504 = vmul.f32 %v1474, %v576
  %v1505 = vmul.f32 %v1478, %v577
  %v1506 = vmul.f32 %v1482, %v578
  %v1507 = vmul.f32 %v1486, %v579
  %v1508 = vmul.f32 %v1490, %v580
  %v1509 = vmul.f32 %v1494, %v581
  %v1510 = vmul.f32 %v1498, %v582
  %v1511 = vmul.f32 %v1502, %v583
  %v1512 = vadd.f32 %v1464, %v1504
  %v1513 = vadd.f32 %v1465, %v1505
  %v1514 = vadd.f32 %v1466, %v1506
  %v1515 = vadd.f32 %v1467, %v1507
  %v1516 = vadd.f32 %v1468, %v1508
  %v1517 = vadd.f32 %v1469, %v1509
  %v1518 = vadd.f32 %v1470, %v1510
  %v1519 = vadd.f32 %v1471, %v1511
  %1520 = vset.pattern.permute.xlu0 6
  %1521 = vperm.xlu0 %1520, %v275
  %v1522 = vpop.permute.xlu0 %1521
  %1524 = vset.pattern.permute.xlu0 6
  %1525 = vperm.xlu0 %1524, %v276
  %v1526 = vpop.permute.xlu0 %1525
  %1528 = vset.pattern.permute.xlu0 6
  %1529 = vperm.xlu0 %1528, %v277
  %v1530 = vpop.permute.xlu0 %1529
  %1532 = vset.pattern.permute.xlu0 6
  %1533 = vperm.xlu0 %1532, %v278
  %v1534 = vpop.permute.xlu0 %1533
  %1536 = vset.pattern.permute.xlu0 6
  %1537 = vperm.xlu0 %1536, %v279
  %v1538 = vpop.permute.xlu0 %1537
  %1540 = vset.pattern.permute.xlu0 6
  %1541 = vperm.xlu0 %1540, %v280
  %v1542 = vpop.permute.xlu0 %1541
  %1544 = vset.pattern.permute.xlu0 6
  %1545 = vperm.xlu0 %1544, %v281
  %v1546 = vpop.permute.xlu0 %1545
  %1548 = vset.pattern.permute.xlu0 6
  %1549 = vperm.xlu0 %1548, %v282
  %v1550 = vpop.permute.xlu0 %1549
  %v1552 = vmul.f32 %v1522, %v633
  %v1553 = vmul.f32 %v1526, %v634
  %v1554 = vmul.f32 %v1530, %v635
  %v1555 = vmul.f32 %v1534, %v636
  %v1556 = vmul.f32 %v1538, %v637
  %v1557 = vmul.f32 %v1542, %v638
  %v1558 = vmul.f32 %v1546, %v639
  %v1559 = vmul.f32 %v1550, %v640
  %v1560 = vadd.f32 %v1512, %v1552
  %v1561 = vadd.f32 %v1513, %v1553
  %v1562 = vadd.f32 %v1514, %v1554
  %v1563 = vadd.f32 %v1515, %v1555
  %v1564 = vadd.f32 %v1516, %v1556
  %v1565 = vadd.f32 %v1517, %v1557
  %v1566 = vadd.f32 %v1518, %v1558
  %v1567 = vadd.f32 %v1519, %v1559
  %1568 = vset.pattern.permute.xlu0 7
  %1569 = vperm.xlu0 %1568, %v275
  %v1570 = vpop.permute.xlu0 %1569
  %1572 = vset.pattern.permute.xlu0 7
  %1573 = vperm.xlu0 %1572, %v276
  %v1574 = vpop.permute.xlu0 %1573
  %1576 = vset.pattern.permute.xlu0 7
  %1577 = vperm.xlu0 %1576, %v277
  %v1578 = vpop.permute.xlu0 %1577
  %1580 = vset.pattern.permute.xlu0 7
  %1581 = vperm.xlu0 %1580, %v278
  %v1582 = vpop.permute.xlu0 %1581
  %1584 = vset.pattern.permute.xlu0 7
  %1585 = vperm.xlu0 %1584, %v279
  %v1586 = vpop.permute.xlu0 %1585
  %1588 = vset.pattern.permute.xlu0 7
  %1589 = vperm.xlu0 %1588, %v280
  %v1590 = vpop.permute.xlu0 %1589
  %1592 = vset.pattern.permute.xlu0 7
  %1593 = vperm.xlu0 %1592, %v281
  %v1594 = vpop.permute.xlu0 %1593
  %1596 = vset.pattern.permute.xlu0 7
  %1597 = vperm.xlu0 %1596, %v282
  %v1598 = vpop.permute.xlu0 %1597
  %v1600 = vmul.f32 %v1570, %v690
  %v1601 = vmul.f32 %v1574, %v691
  %v1602 = vmul.f32 %v1578, %v692
  %v1603 = vmul.f32 %v1582, %v693
  %v1604 = vmul.f32 %v1586, %v694
  %v1605 = vmul.f32 %v1590, %v695
  %v1606 = vmul.f32 %v1594, %v696
  %v1607 = vmul.f32 %v1598, %v697
  %v1608 = vadd.f32 %v1560, %v1600
  %v1609 = vadd.f32 %v1561, %v1601
  %v1610 = vadd.f32 %v1562, %v1602
  %v1611 = vadd.f32 %v1563, %v1603
  %v1612 = vadd.f32 %v1564, %v1604
  %v1613 = vadd.f32 %v1565, %v1605
  %v1614 = vadd.f32 %v1566, %v1606
  %v1615 = vadd.f32 %v1567, %v1607
  %1616 = vset.pattern.permute.xlu0 8
  %1617 = vperm.xlu0 %1616, %v275
  %v1618 = vpop.permute.xlu0 %1617
  %1620 = vset.pattern.permute.xlu0 8
  %1621 = vperm.xlu0 %1620, %v276
  %v1622 = vpop.permute.xlu0 %1621
  %1624 = vset.pattern.permute.xlu0 8
  %1625 = vperm.xlu0 %1624, %v277
  %v1626 = vpop.permute.xlu0 %1625
  %1628 = vset.pattern.permute.xlu0 8
  %1629 = vperm.xlu0 %1628, %v278
  %v1630 = vpop.permute.xlu0 %1629
  %1632 = vset.pattern.permute.xlu0 8
  %1633 = vperm.xlu0 %1632, %v279
  %v1634 = vpop.permute.xlu0 %1633
  %1636 = vset.pattern.permute.xlu0 8
  %1637 = vperm.xlu0 %1636, %v280
  %v1638 = vpop.permute.xlu0 %1637
  %1640 = vset.pattern.permute.xlu0 8
  %1641 = vperm.xlu0 %1640, %v281
  %v1642 = vpop.permute.xlu0 %1641
  %1644 = vset.pattern.permute.xlu0 8
  %1645 = vperm.xlu0 %1644, %v282
  %v1646 = vpop.permute.xlu0 %1645
  %v1648 = vmul.f32 %v1618, %v747
  %v1649 = vmul.f32 %v1622, %v748
  %v1650 = vmul.f32 %v1626, %v749
  %v1651 = vmul.f32 %v1630, %v750
  %v1652 = vmul.f32 %v1634, %v751
  %v1653 = vmul.f32 %v1638, %v752
  %v1654 = vmul.f32 %v1642, %v753
  %v1655 = vmul.f32 %v1646, %v754
  %v1656 = vadd.f32 %v1608, %v1648
  %v1657 = vadd.f32 %v1609, %v1649
  %v1658 = vadd.f32 %v1610, %v1650
  %v1659 = vadd.f32 %v1611, %v1651
  %v1660 = vadd.f32 %v1612, %v1652
  %v1661 = vadd.f32 %v1613, %v1653
  %v1662 = vadd.f32 %v1614, %v1654
  %v1663 = vadd.f32 %v1615, %v1655
  %1664 = vset.pattern.permute.xlu0 9
  %1665 = vperm.xlu0 %1664, %v275
  %v1666 = vpop.permute.xlu0 %1665
  %1668 = vset.pattern.permute.xlu0 9
  %1669 = vperm.xlu0 %1668, %v276
  %v1670 = vpop.permute.xlu0 %1669
  %1672 = vset.pattern.permute.xlu0 9
  %1673 = vperm.xlu0 %1672, %v277
  %v1674 = vpop.permute.xlu0 %1673
  %1676 = vset.pattern.permute.xlu0 9
  %1677 = vperm.xlu0 %1676, %v278
  %v1678 = vpop.permute.xlu0 %1677
  %1680 = vset.pattern.permute.xlu0 9
  %1681 = vperm.xlu0 %1680, %v279
  %v1682 = vpop.permute.xlu0 %1681
  %1684 = vset.pattern.permute.xlu0 9
  %1685 = vperm.xlu0 %1684, %v280
  %v1686 = vpop.permute.xlu0 %1685
  %1688 = vset.pattern.permute.xlu0 9
  %1689 = vperm.xlu0 %1688, %v281
  %v1690 = vpop.permute.xlu0 %1689
  %1692 = vset.pattern.permute.xlu0 9
  %1693 = vperm.xlu0 %1692, %v282
  %v1694 = vpop.permute.xlu0 %1693
  %v1696 = vmul.f32 %v1666, %v804
  %v1697 = vmul.f32 %v1670, %v805
  %v1698 = vmul.f32 %v1674, %v806
  %v1699 = vmul.f32 %v1678, %v807
  %v1700 = vmul.f32 %v1682, %v808
  %v1701 = vmul.f32 %v1686, %v809
  %v1702 = vmul.f32 %v1690, %v810
  %v1703 = vmul.f32 %v1694, %v811
  %v1704 = vadd.f32 %v1656, %v1696
  %v1705 = vadd.f32 %v1657, %v1697
  %v1706 = vadd.f32 %v1658, %v1698
  %v1707 = vadd.f32 %v1659, %v1699
  %v1708 = vadd.f32 %v1660, %v1700
  %v1709 = vadd.f32 %v1661, %v1701
  %v1710 = vadd.f32 %v1662, %v1702
  %v1711 = vadd.f32 %v1663, %v1703
  %1712 = vset.pattern.permute.xlu0 10
  %1713 = vperm.xlu0 %1712, %v275
  %v1714 = vpop.permute.xlu0 %1713
  %1716 = vset.pattern.permute.xlu0 10
  %1717 = vperm.xlu0 %1716, %v276
  %v1718 = vpop.permute.xlu0 %1717
  %1720 = vset.pattern.permute.xlu0 10
  %1721 = vperm.xlu0 %1720, %v277
  %v1722 = vpop.permute.xlu0 %1721
  %1724 = vset.pattern.permute.xlu0 10
  %1725 = vperm.xlu0 %1724, %v278
  %v1726 = vpop.permute.xlu0 %1725
  %1728 = vset.pattern.permute.xlu0 10
  %1729 = vperm.xlu0 %1728, %v279
  %v1730 = vpop.permute.xlu0 %1729
  %1732 = vset.pattern.permute.xlu0 10
  %1733 = vperm.xlu0 %1732, %v280
  %v1734 = vpop.permute.xlu0 %1733
  %1736 = vset.pattern.permute.xlu0 10
  %1737 = vperm.xlu0 %1736, %v281
  %v1738 = vpop.permute.xlu0 %1737
  %1740 = vset.pattern.permute.xlu0 10
  %1741 = vperm.xlu0 %1740, %v282
  %v1742 = vpop.permute.xlu0 %1741
  %v1744 = vmul.f32 %v1714, %v861
  %v1745 = vmul.f32 %v1718, %v862
  %v1746 = vmul.f32 %v1722, %v863
  %v1747 = vmul.f32 %v1726, %v864
  %v1748 = vmul.f32 %v1730, %v865
  %v1749 = vmul.f32 %v1734, %v866
  %v1750 = vmul.f32 %v1738, %v867
  %v1751 = vmul.f32 %v1742, %v868
  %v1752 = vadd.f32 %v1704, %v1744
  %v1753 = vadd.f32 %v1705, %v1745
  %v1754 = vadd.f32 %v1706, %v1746
  %v1755 = vadd.f32 %v1707, %v1747
  %v1756 = vadd.f32 %v1708, %v1748
  %v1757 = vadd.f32 %v1709, %v1749
  %v1758 = vadd.f32 %v1710, %v1750
  %v1759 = vadd.f32 %v1711, %v1751
  %1760 = vset.pattern.permute.xlu0 11
  %1761 = vperm.xlu0 %1760, %v275
  %v1762 = vpop.permute.xlu0 %1761
  %1764 = vset.pattern.permute.xlu0 11
  %1765 = vperm.xlu0 %1764, %v276
  %v1766 = vpop.permute.xlu0 %1765
  %1768 = vset.pattern.permute.xlu0 11
  %1769 = vperm.xlu0 %1768, %v277
  %v1770 = vpop.permute.xlu0 %1769
  %1772 = vset.pattern.permute.xlu0 11
  %1773 = vperm.xlu0 %1772, %v278
  %v1774 = vpop.permute.xlu0 %1773
  %1776 = vset.pattern.permute.xlu0 11
  %1777 = vperm.xlu0 %1776, %v279
  %v1778 = vpop.permute.xlu0 %1777
  %1780 = vset.pattern.permute.xlu0 11
  %1781 = vperm.xlu0 %1780, %v280
  %v1782 = vpop.permute.xlu0 %1781
  %1784 = vset.pattern.permute.xlu0 11
  %1785 = vperm.xlu0 %1784, %v281
  %v1786 = vpop.permute.xlu0 %1785
  %1788 = vset.pattern.permute.xlu0 11
  %1789 = vperm.xlu0 %1788, %v282
  %v1790 = vpop.permute.xlu0 %1789
  %v1792 = vmul.f32 %v1762, %v918
  %v1793 = vmul.f32 %v1766, %v919
  %v1794 = vmul.f32 %v1770, %v920
  %v1795 = vmul.f32 %v1774, %v921
  %v1796 = vmul.f32 %v1778, %v922
  %v1797 = vmul.f32 %v1782, %v923
  %v1798 = vmul.f32 %v1786, %v924
  %v1799 = vmul.f32 %v1790, %v925
  %v1800 = vadd.f32 %v1752, %v1792
  %v1801 = vadd.f32 %v1753, %v1793
  %v1802 = vadd.f32 %v1754, %v1794
  %v1803 = vadd.f32 %v1755, %v1795
  %v1804 = vadd.f32 %v1756, %v1796
  %v1805 = vadd.f32 %v1757, %v1797
  %v1806 = vadd.f32 %v1758, %v1798
  %v1807 = vadd.f32 %v1759, %v1799
  %1808 = vset.pattern.permute.xlu0 12
  %1809 = vperm.xlu0 %1808, %v275
  %v1810 = vpop.permute.xlu0 %1809
  %1812 = vset.pattern.permute.xlu0 12
  %1813 = vperm.xlu0 %1812, %v276
  %v1814 = vpop.permute.xlu0 %1813
  %1816 = vset.pattern.permute.xlu0 12
  %1817 = vperm.xlu0 %1816, %v277
  %v1818 = vpop.permute.xlu0 %1817
  %1820 = vset.pattern.permute.xlu0 12
  %1821 = vperm.xlu0 %1820, %v278
  %v1822 = vpop.permute.xlu0 %1821
  %1824 = vset.pattern.permute.xlu0 12
  %1825 = vperm.xlu0 %1824, %v279
  %v1826 = vpop.permute.xlu0 %1825
  %1828 = vset.pattern.permute.xlu0 12
  %1829 = vperm.xlu0 %1828, %v280
  %v1830 = vpop.permute.xlu0 %1829
  %1832 = vset.pattern.permute.xlu0 12
  %1833 = vperm.xlu0 %1832, %v281
  %v1834 = vpop.permute.xlu0 %1833
  %1836 = vset.pattern.permute.xlu0 12
  %1837 = vperm.xlu0 %1836, %v282
  %v1838 = vpop.permute.xlu0 %1837
  %v1840 = vmul.f32 %v1810, %v975
  %v1841 = vmul.f32 %v1814, %v976
  %v1842 = vmul.f32 %v1818, %v977
  %v1843 = vmul.f32 %v1822, %v978
  %v1844 = vmul.f32 %v1826, %v979
  %v1845 = vmul.f32 %v1830, %v980
  %v1846 = vmul.f32 %v1834, %v981
  %v1847 = vmul.f32 %v1838, %v982
  %v1848 = vadd.f32 %v1800, %v1840
  %v1849 = vadd.f32 %v1801, %v1841
  %v1850 = vadd.f32 %v1802, %v1842
  %v1851 = vadd.f32 %v1803, %v1843
  %v1852 = vadd.f32 %v1804, %v1844
  %v1853 = vadd.f32 %v1805, %v1845
  %v1854 = vadd.f32 %v1806, %v1846
  %v1855 = vadd.f32 %v1807, %v1847
  %1856 = vset.pattern.permute.xlu0 13
  %1857 = vperm.xlu0 %1856, %v275
  %v1858 = vpop.permute.xlu0 %1857
  %1860 = vset.pattern.permute.xlu0 13
  %1861 = vperm.xlu0 %1860, %v276
  %v1862 = vpop.permute.xlu0 %1861
  %1864 = vset.pattern.permute.xlu0 13
  %1865 = vperm.xlu0 %1864, %v277
  %v1866 = vpop.permute.xlu0 %1865
  %1868 = vset.pattern.permute.xlu0 13
  %1869 = vperm.xlu0 %1868, %v278
  %v1870 = vpop.permute.xlu0 %1869
  %1872 = vset.pattern.permute.xlu0 13
  %1873 = vperm.xlu0 %1872, %v279
  %v1874 = vpop.permute.xlu0 %1873
  %1876 = vset.pattern.permute.xlu0 13
  %1877 = vperm.xlu0 %1876, %v280
  %v1878 = vpop.permute.xlu0 %1877
  %1880 = vset.pattern.permute.xlu0 13
  %1881 = vperm.xlu0 %1880, %v281
  %v1882 = vpop.permute.xlu0 %1881
  %1884 = vset.pattern.permute.xlu0 13
  %1885 = vperm.xlu0 %1884, %v282
  %v1886 = vpop.permute.xlu0 %1885
  %v1888 = vmul.f32 %v1858, %v1032
  %v1889 = vmul.f32 %v1862, %v1033
  %v1890 = vmul.f32 %v1866, %v1034
  %v1891 = vmul.f32 %v1870, %v1035
  %v1892 = vmul.f32 %v1874, %v1036
  %v1893 = vmul.f32 %v1878, %v1037
  %v1894 = vmul.f32 %v1882, %v1038
  %v1895 = vmul.f32 %v1886, %v1039
  %v1896 = vadd.f32 %v1848, %v1888
  %v1897 = vadd.f32 %v1849, %v1889
  %v1898 = vadd.f32 %v1850, %v1890
  %v1899 = vadd.f32 %v1851, %v1891
  %v1900 = vadd.f32 %v1852, %v1892
  %v1901 = vadd.f32 %v1853, %v1893
  %v1902 = vadd.f32 %v1854, %v1894
  %v1903 = vadd.f32 %v1855, %v1895
  %1904 = vset.pattern.permute.xlu0 14
  %1905 = vperm.xlu0 %1904, %v275
  %v1906 = vpop.permute.xlu0 %1905
  %1908 = vset.pattern.permute.xlu0 14
  %1909 = vperm.xlu0 %1908, %v276
  %v1910 = vpop.permute.xlu0 %1909
  %1912 = vset.pattern.permute.xlu0 14
  %1913 = vperm.xlu0 %1912, %v277
  %v1914 = vpop.permute.xlu0 %1913
  %1916 = vset.pattern.permute.xlu0 14
  %1917 = vperm.xlu0 %1916, %v278
  %v1918 = vpop.permute.xlu0 %1917
  %1920 = vset.pattern.permute.xlu0 14
  %1921 = vperm.xlu0 %1920, %v279
  %v1922 = vpop.permute.xlu0 %1921
  %1924 = vset.pattern.permute.xlu0 14
  %1925 = vperm.xlu0 %1924, %v280
  %v1926 = vpop.permute.xlu0 %1925
  %1928 = vset.pattern.permute.xlu0 14
  %1929 = vperm.xlu0 %1928, %v281
  %v1930 = vpop.permute.xlu0 %1929
  %1932 = vset.pattern.permute.xlu0 14
  %1933 = vperm.xlu0 %1932, %v282
  %v1934 = vpop.permute.xlu0 %1933
  %v1936 = vmul.f32 %v1906, %v1089
  %v1937 = vmul.f32 %v1910, %v1090
  %v1938 = vmul.f32 %v1914, %v1091
  %v1939 = vmul.f32 %v1918, %v1092
  %v1940 = vmul.f32 %v1922, %v1093
  %v1941 = vmul.f32 %v1926, %v1094
  %v1942 = vmul.f32 %v1930, %v1095
  %v1943 = vmul.f32 %v1934, %v1096
  %v1944 = vadd.f32 %v1896, %v1936
  %v1945 = vadd.f32 %v1897, %v1937
  %v1946 = vadd.f32 %v1898, %v1938
  %v1947 = vadd.f32 %v1899, %v1939
  %v1948 = vadd.f32 %v1900, %v1940
  %v1949 = vadd.f32 %v1901, %v1941
  %v1950 = vadd.f32 %v1902, %v1942
  %v1951 = vadd.f32 %v1903, %v1943
  %1952 = vset.pattern.permute.xlu0 15
  %1953 = vperm.xlu0 %1952, %v275
  %v1954 = vpop.permute.xlu0 %1953
  %1956 = vset.pattern.permute.xlu0 15
  %1957 = vperm.xlu0 %1956, %v276
  %v1958 = vpop.permute.xlu0 %1957
  %1960 = vset.pattern.permute.xlu0 15
  %1961 = vperm.xlu0 %1960, %v277
  %v1962 = vpop.permute.xlu0 %1961
  %1964 = vset.pattern.permute.xlu0 15
  %1965 = vperm.xlu0 %1964, %v278
  %v1966 = vpop.permute.xlu0 %1965
  %1968 = vset.pattern.permute.xlu0 15
  %1969 = vperm.xlu0 %1968, %v279
  %v1970 = vpop.permute.xlu0 %1969
  %1972 = vset.pattern.permute.xlu0 15
  %1973 = vperm.xlu0 %1972, %v280
  %v1974 = vpop.permute.xlu0 %1973
  %1976 = vset.pattern.permute.xlu0 15
  %1977 = vperm.xlu0 %1976, %v281
  %v1978 = vpop.permute.xlu0 %1977
  %1980 = vset.pattern.permute.xlu0 15
  %1981 = vperm.xlu0 %1980, %v282
  %v1982 = vpop.permute.xlu0 %1981
  %v1984 = vmul.f32 %v1954, %v1146
  %v1985 = vmul.f32 %v1958, %v1147
  %v1986 = vmul.f32 %v1962, %v1148
  %v1987 = vmul.f32 %v1966, %v1149
  %v1988 = vmul.f32 %v1970, %v1150
  %v1989 = vmul.f32 %v1974, %v1151
  %v1990 = vmul.f32 %v1978, %v1152
  %v1991 = vmul.f32 %v1982, %v1153
  %v1992 = vadd.f32 %v1944, %v1984
  %v1993 = vadd.f32 %v1945, %v1985
  %v1994 = vadd.f32 %v1946, %v1986
  %v1995 = vadd.f32 %v1947, %v1987
  %v1996 = vadd.f32 %v1948, %v1988
  %v1997 = vadd.f32 %v1949, %v1989
  %v1998 = vadd.f32 %v1950, %v1990
  %v1999 = vadd.f32 %v1951, %v1991
  %v2000 = vsel %vm1202, %v1992, 0.0
  %v2001 = vsel %vm1202, %v1993, 0.0
  %v2002 = vadd.f32 %v2000, %v2001
  %v2003 = vsel %vm1202, %v1994, 0.0
  %v2004 = vadd.f32 %v2002, %v2003
  %v2005 = vsel %vm1202, %v1995, 0.0
  %v2006 = vadd.f32 %v2004, %v2005
  %v2007 = vsel %vm1202, %v1996, 0.0
  %v2008 = vadd.f32 %v2006, %v2007
  %v2009 = vsel %vm1202, %v1997, 0.0
  %v2010 = vadd.f32 %v2008, %v2009
  %v2011 = vsel %vm1202, %v1998, 0.0
  %v2012 = vadd.f32 %v2010, %v2011
  %v2013 = vsel %vm1202, %v1999, 0.0
  %v2014 = vadd.f32 %v2012, %v2013
  %v2015 = vrot.slane %v2014, 4
  %v2016 = vadd.f32 %v2014, %v2015
  %v2017 = vrot.slane %v2016, 2
  %v2018 = vadd.f32 %v2016, %v2017
  %v2019 = vrot.slane %v2018, 1
  %v2020 = vadd.f32 %v2018, %v2019
  %vm2021 = vcmask 1040384
  %v2022 = vsel %vm2021, %v1223, %v2020
  %v2023 = vld [vmem:[%s5] sm:$0x1]
  %v2025 = vlaneseq
  %v2026 = vshrl.u32 %v2025, 7
  %v2027 = vsub.s32 0, %v2026
  %v2028 = vrot.slane %v2023, %v2027
  %v2030 = vadd.f32 %v2022, %v2028
  %v2031 = vld [vmem:[%s7] sm:$0xff]
  %v2032 = vld [vmem:[%s7 + $0x8] sm:$0xff]
  %v2033 = vld [vmem:[%s7 + $0x10] sm:$0xff]
  %v2034 = vld [vmem:[%s7 + $0x18] sm:$0xff]
  %s2035 = sld [smem:[#allocation3]]
  %s2036 = scalar_lea.vmem %s6, %s2035
  %v2037 = vld [vmem:[%s2036] sm:$0x1]
  %s2038 = sld [smem:[#allocation3 + $0x1]]
  %s2039 = scalar_lea.vmem %s6, %s2038
  %v2040 = vld [vmem:[%s2039] sm:$0x1]
  %v2042 = vrot.slane %v2040, 7
  %v2044 = vsel %vm2021, %v2037, %v2042
  %v2046 = vsel %vm1202, %v2030, 0
  %2048 = vmatprep.subr.mxu0 0.0
  %2049 = vmatpush1.msra.mxu0 %v2031
  %2050 = vmatprep.subr.mxu0 0.0
  %2051 = vmatpush1.msra.mxu0 %v2032
  %2052 = vmatprep.subr.mxu0 0.0
  %2053 = vmatpush1.msra.mxu0 %v2033
  %2054 = vmatprep.subr.mxu0 0.0
  %2055 = vmatpush1.msra.mxu0 %v2034
  %2056 = vmatprep.subr.mxu0 0.0
  %2057 = vmatpush1.msra.mxu0 0.0
  %2058 = vmatprep.subr.mxu0 0.0
  %2059 = vmatpush1.msra.mxu0 0.0
  %2060 = vmatprep.subr.mxu0 0.0
  %2061 = vmatpush1.msra.mxu0 0.0
  %2062 = vmatprep.subr.mxu0 0.0
  %2063 = vmatpush1.msra.mxu0 0.0
  %2064 = vmatprep.subr.mxu0 0.0
  %2065 = vmatpush1.msra.mxu0 0.0
  %2066 = vmatprep.subr.mxu0 0.0
  %2067 = vmatpush1.msra.mxu0 0.0
  %2068 = vmatprep.subr.mxu0 0.0
  %2069 = vmatpush1.msra.mxu0 0.0
  %2070 = vmatprep.subr.mxu0 0.0
  %2071 = vmatpush1.msra.mxu0 0.0
  %2072 = vmatprep.subr.mxu0 0.0
  %2073 = vmatpush1.msra.mxu0 0.0
  %2074 = vmatprep.subr.mxu0 0.0
  %2075 = vmatpush1.msra.mxu0 0.0
  %2076 = vmatprep.subr.mxu0 0.0
  %2077 = vmatpush1.msra.mxu0 0.0
  %2078 = vmatprep.subr.mxu0 0.0
  %2079 = vmatpush1.msra.mxu0 0.0
  %2080 = vmatprep.subr.mxu0 0.0
  %2081 = vmatpush1.msra.mxu0 0.0
  %2082 = vmatprep.subr.mxu0 0.0
  %2083 = vmatpush1.msra.mxu0 0.0
  %2084 = vmatprep.subr.mxu0 0.0
  %2085 = vmatpush1.msra.mxu0 0.0
  %2086 = vmatprep.subr.mxu0 0.0
  %2087 = vmatpush1.msra.mxu0 0.0
  %2088 = vmatprep.subr.mxu0 0.0
  %2089 = vmatpush1.msra.mxu0 0.0
  %2090 = vmatprep.subr.mxu0 0.0
  %2091 = vmatpush1.msra.mxu0 0.0
  %2092 = vmatprep.subr.mxu0 0.0
  %2093 = vmatpush1.msra.mxu0 0.0
  %2094 = vmatprep.subr.mxu0 0.0
  %2095 = vmatpush1.msra.mxu0 0.0
  %2096 = vmatprep.subr.mxu0 0.0
  %2097 = vmatpush1.msra.mxu0 0.0
  %2098 = vmatprep.subr.mxu0 0.0
  %2099 = vmatpush1.msra.mxu0 0.0
  %2100 = vmatprep.subr.mxu0 0.0
  %2101 = vmatpush1.msra.mxu0 0.0
  %2102 = vmatprep.subr.mxu0 0.0
  %2103 = vmatpush1.msra.mxu0 0.0
  %2104 = vmatprep.subr.mxu0 0.0
  %2105 = vmatpush1.msra.mxu0 0.0
  %2106 = vmatprep.subr.mxu0 0.0
  %2107 = vmatpush1.msra.mxu0 0.0
  %2108 = vmatprep.subr.mxu0 0.0
  %2109 = vmatpush1.msra.mxu0 0.0
  %2110 = vmatprep.subr.mxu0 0.0
  %2111 = vmatpush1.msra.mxu0 0.0
  %2112 = vmatprep.mubr.f32.mxu0 0.0
  %2113 = vmatmul.mubr.f32.gmra.mrb[0].mxu0 %v2046
  %v2114 = vpop.f32.mrb[0].mxu0
  %v2115 = vadd.f32 0.0, %v2114
  %v2116 = vpop.f32.mrb[0].mxu0
  %2117 = vdwg.mxu0
  %v2118 = vadd.f32 %v2044, %v2115
  %v2119 = vxor.u32 %v2118, 2147483648
  %v2120 = vmul.f32 %v2119, 1.442695
  %v2121 = vpow.pop %v2120
  %v2122 = vadd.f32 %v2121, 1.0
  %v2123 = vrcp.pop %v2122
  %v2124 = vmul.f32 1.0, %v2123
  %v2125 = vtanh.pop %v2118
  %2126 = vrot.lane.b32.xlu0 %v2030, 32
  %v2127 = vpop.permute.xlu0 %2126
  %v2129 = vmul.f32 %v2124, %v2127
  %2131 = vrot.lane.b32.xlu0 %v2125, 64
  %v2132 = vpop.permute.xlu0 %2131
  %v2134 = vmul.f32 %v2124, %v2132
  %2136 = vrot.lane.b32.xlu0 %v2134, 32
  %v2137 = vpop.permute.xlu0 %2136
  %v2139 = vadd.f32 %v2129, %v2137
  %v2140 = vtanh.pop %v2139
  %2142 = vrot.lane.b32.xlu0 %v2140, 64
  %v2143 = vpop.permute.xlu0 %2142
  %v2145 = vmul.f32 %v2124, %v2143
  %s2146 = sld [smem:[#allocation3 + $0x2]]
  %s2147 = scalar_lea.vmem %s6, %s2146
  %v2148 = vld [vmem:[%s2147] sm:$0x1]
  %s2149 = sld [smem:[#allocation3 + $0x3]]
  %s2150 = scalar_lea.vmem %s6, %s2149
  %v2151 = vld [vmem:[%s2150] sm:$0x1]
  %v2153 = vrot.slane %v2151, 7
  %v2155 = vsel %vm2021, %v2148, %v2153
  %2157 = vrot.lane.b32.xlu0 %v2145, 32
  %v2158 = vpop.permute.xlu0 %2157
  %v2159 = vsel %vm1202, %v2158, 0
  %2161 = vmatprep.subr.mxu0 0.0
  %2162 = vmatpush1.msra.mxu0 %v2031
  %2163 = vmatprep.subr.mxu0 0.0
  %2164 = vmatpush1.msra.mxu0 %v2032
  %2165 = vmatprep.subr.mxu0 0.0
  %2166 = vmatpush1.msra.mxu0 %v2033
  %2167 = vmatprep.subr.mxu0 0.0
  %2168 = vmatpush1.msra.mxu0 %v2034
  %2169 = vmatprep.subr.mxu0 0.0
  %2170 = vmatpush1.msra.mxu0 0.0
  %2171 = vmatprep.subr.mxu0 0.0
  %2172 = vmatpush1.msra.mxu0 0.0
  %2173 = vmatprep.subr.mxu0 0.0
  %2174 = vmatpush1.msra.mxu0 0.0
  %2175 = vmatprep.subr.mxu0 0.0
  %2176 = vmatpush1.msra.mxu0 0.0
  %2177 = vmatprep.subr.mxu0 0.0
  %2178 = vmatpush1.msra.mxu0 0.0
  %2179 = vmatprep.subr.mxu0 0.0
  %2180 = vmatpush1.msra.mxu0 0.0
  %2181 = vmatprep.subr.mxu0 0.0
  %2182 = vmatpush1.msra.mxu0 0.0
  %2183 = vmatprep.subr.mxu0 0.0
  %2184 = vmatpush1.msra.mxu0 0.0
  %2185 = vmatprep.subr.mxu0 0.0
  %2186 = vmatpush1.msra.mxu0 0.0
  %2187 = vmatprep.subr.mxu0 0.0
  %2188 = vmatpush1.msra.mxu0 0.0
  %2189 = vmatprep.subr.mxu0 0.0
  %2190 = vmatpush1.msra.mxu0 0.0
  %2191 = vmatprep.subr.mxu0 0.0
  %2192 = vmatpush1.msra.mxu0 0.0
  %2193 = vmatprep.subr.mxu0 0.0
  %2194 = vmatpush1.msra.mxu0 0.0
  %2195 = vmatprep.subr.mxu0 0.0
  %2196 = vmatpush1.msra.mxu0 0.0
  %2197 = vmatprep.subr.mxu0 0.0
  %2198 = vmatpush1.msra.mxu0 0.0
  %2199 = vmatprep.subr.mxu0 0.0
  %2200 = vmatpush1.msra.mxu0 0.0
  %2201 = vmatprep.subr.mxu0 0.0
  %2202 = vmatpush1.msra.mxu0 0.0
  %2203 = vmatprep.subr.mxu0 0.0
  %2204 = vmatpush1.msra.mxu0 0.0
  %2205 = vmatprep.subr.mxu0 0.0
  %2206 = vmatpush1.msra.mxu0 0.0
  %2207 = vmatprep.subr.mxu0 0.0
  %2208 = vmatpush1.msra.mxu0 0.0
  %2209 = vmatprep.subr.mxu0 0.0
  %2210 = vmatpush1.msra.mxu0 0.0
  %2211 = vmatprep.subr.mxu0 0.0
  %2212 = vmatpush1.msra.mxu0 0.0
  %2213 = vmatprep.subr.mxu0 0.0
  %2214 = vmatpush1.msra.mxu0 0.0
  %2215 = vmatprep.subr.mxu0 0.0
  %2216 = vmatpush1.msra.mxu0 0.0
  %2217 = vmatprep.subr.mxu0 0.0
  %2218 = vmatpush1.msra.mxu0 0.0
  %2219 = vmatprep.subr.mxu0 0.0
  %2220 = vmatpush1.msra.mxu0 0.0
  %2221 = vmatprep.subr.mxu0 0.0
  %2222 = vmatpush1.msra.mxu0 0.0
  %2223 = vmatprep.subr.mxu0 0.0
  %2224 = vmatpush1.msra.mxu0 0.0
  %2225 = vmatprep.mubr.f32.mxu0 0.0
  %2226 = vmatmul.mubr.f32.gmra.mrb[0].mxu0 %v2159
  %v2227 = vpop.f32.mrb[0].mxu0
  %v2228 = vadd.f32 0.0, %v2227
  %v2229 = vpop.f32.mrb[0].mxu0
  %2230 = vdwg.mxu0
  %v2231 = vadd.f32 %v2155, %v2228
  %v2232 = vxor.u32 %v2231, 2147483648
  %v2233 = vmul.f32 %v2232, 1.442695
  %v2234 = vpow.pop %v2233
  %v2235 = vadd.f32 %v2234, 1.0
  %v2236 = vrcp.pop %v2235
  %v2237 = vmul.f32 1.0, %v2236
  %v2238 = vtanh.pop %v2231
  %v2239 = vmul.f32 %v2237, %v2139
  %2241 = vrot.lane.b32.xlu0 %v2238, 64
  %v2242 = vpop.permute.xlu0 %2241
  %v2244 = vmul.f32 %v2237, %v2242
  %2246 = vrot.lane.b32.xlu0 %v2244, 32
  %v2247 = vpop.permute.xlu0 %2246
  %v2249 = vadd.f32 %v2239, %v2247
  %v2250 = vtanh.pop %v2249
  %2252 = vrot.lane.b32.xlu0 %v2250, 64
  %v2253 = vpop.permute.xlu0 %2252
  %v2255 = vmul.f32 %v2237, %v2253
  %s2256 = sld [smem:[#allocation3 + $0x4]]
  %s2257 = scalar_lea.vmem %s6, %s2256
  %v2258 = vld [vmem:[%s2257] sm:$0x1]
  %s2259 = sld [smem:[#allocation3 + $0x5]]
  %s2260 = scalar_lea.vmem %s6, %s2259
  %v2261 = vld [vmem:[%s2260] sm:$0x1]
  %v2263 = vrot.slane %v2261, 7
  %v2265 = vsel %vm2021, %v2258, %v2263
  %2267 = vrot.lane.b32.xlu0 %v2255, 32
  %v2268 = vpop.permute.xlu0 %2267
  %v2269 = vsel %vm1202, %v2268, 0
  %2271 = vmatprep.subr.mxu0 0.0
  %2272 = vmatpush1.msra.mxu0 %v2031
  %2273 = vmatprep.subr.mxu0 0.0
  %2274 = vmatpush1.msra.mxu0 %v2032
  %2275 = vmatprep.subr.mxu0 0.0
  %2276 = vmatpush1.msra.mxu0 %v2033
  %2277 = vmatprep.subr.mxu0 0.0
  %2278 = vmatpush1.msra.mxu0 %v2034
  %2279 = vmatprep.subr.mxu0 0.0
  %2280 = vmatpush1.msra.mxu0 0.0
  %2281 = vmatprep.subr.mxu0 0.0
  %2282 = vmatpush1.msra.mxu0 0.0
  %2283 = vmatprep.subr.mxu0 0.0
  %2284 = vmatpush1.msra.mxu0 0.0
  %2285 = vmatprep.subr.mxu0 0.0
  %2286 = vmatpush1.msra.mxu0 0.0
  %2287 = vmatprep.subr.mxu0 0.0
  %2288 = vmatpush1.msra.mxu0 0.0
  %2289 = vmatprep.subr.mxu0 0.0
  %2290 = vmatpush1.msra.mxu0 0.0
  %2291 = vmatprep.subr.mxu0 0.0
  %2292 = vmatpush1.msra.mxu0 0.0
  %2293 = vmatprep.subr.mxu0 0.0
  %2294 = vmatpush1.msra.mxu0 0.0
  %2295 = vmatprep.subr.mxu0 0.0
  %2296 = vmatpush1.msra.mxu0 0.0
  %2297 = vmatprep.subr.mxu0 0.0
  %2298 = vmatpush1.msra.mxu0 0.0
  %2299 = vmatprep.subr.mxu0 0.0
  %2300 = vmatpush1.msra.mxu0 0.0
  %2301 = vmatprep.subr.mxu0 0.0
  %2302 = vmatpush1.msra.mxu0 0.0
  %2303 = vmatprep.subr.mxu0 0.0
  %2304 = vmatpush1.msra.mxu0 0.0
  %2305 = vmatprep.subr.mxu0 0.0
  %2306 = vmatpush1.msra.mxu0 0.0
  %2307 = vmatprep.subr.mxu0 0.0
  %2308 = vmatpush1.msra.mxu0 0.0
  %2309 = vmatprep.subr.mxu0 0.0
  %2310 = vmatpush1.msra.mxu0 0.0
  %2311 = vmatprep.subr.mxu0 0.0
  %2312 = vmatpush1.msra.mxu0 0.0
  %2313 = vmatprep.subr.mxu0 0.0
  %2314 = vmatpush1.msra.mxu0 0.0
  %2315 = vmatprep.subr.mxu0 0.0
  %2316 = vmatpush1.msra.mxu0 0.0
  %2317 = vmatprep.subr.mxu0 0.0
  %2318 = vmatpush1.msra.mxu0 0.0
  %2319 = vmatprep.subr.mxu0 0.0
  %2320 = vmatpush1.msra.mxu0 0.0
  %2321 = vmatprep.subr.mxu0 0.0
  %2322 = vmatpush1.msra.mxu0 0.0
  %2323 = vmatprep.subr.mxu0 0.0
  %2324 = vmatpush1.msra.mxu0 0.0
  %2325 = vmatprep.subr.mxu0 0.0
  %2326 = vmatpush1.msra.mxu0 0.0
  %2327 = vmatprep.subr.mxu0 0.0
  %2328 = vmatpush1.msra.mxu0 0.0
  %2329 = vmatprep.subr.mxu0 0.0
  %2330 = vmatpush1.msra.mxu0 0.0
  %2331 = vmatprep.subr.mxu0 0.0
  %2332 = vmatpush1.msra.mxu0 0.0
  %2333 = vmatprep.subr.mxu0 0.0
  %2334 = vmatpush1.msra.mxu0 0.0
  %2335 = vmatprep.mubr.f32.mxu0 0.0
  %2336 = vmatmul.mubr.f32.gmra.mrb[0].mxu0 %v2269
  %v2337 = vpop.f32.mrb[0].mxu0
  %v2338 = vadd.f32 0.0, %v2337
  %v2339 = vpop.f32.mrb[0].mxu0
  %2340 = vdwg.mxu0
  %v2341 = vadd.f32 %v2265, %v2338
  %v2342 = vxor.u32 %v2341, 2147483648
  %v2343 = vmul.f32 %v2342, 1.442695
  %v2344 = vpow.pop %v2343
  %v2345 = vadd.f32 %v2344, 1.0
  %v2346 = vrcp.pop %v2345
  %v2347 = vmul.f32 1.0, %v2346
  %v2348 = vtanh.pop %v2341
  %v2349 = vmul.f32 %v2347, %v2249
  %2351 = vrot.lane.b32.xlu0 %v2348, 64
  %v2352 = vpop.permute.xlu0 %2351
  %v2354 = vmul.f32 %v2347, %v2352
  %2356 = vrot.lane.b32.xlu0 %v2354, 32
  %v2357 = vpop.permute.xlu0 %2356
  %v2359 = vadd.f32 %v2349, %v2357
  %v2360 = vtanh.pop %v2359
  %2362 = vrot.lane.b32.xlu0 %v2360, 64
  %v2363 = vpop.permute.xlu0 %2362
  %v2365 = vmul.f32 %v2347, %v2363
  %s2366 = sld [smem:[#allocation3 + $0x6]]
  %s2367 = scalar_lea.vmem %s6, %s2366
  %v2368 = vld [vmem:[%s2367] sm:$0x1]
  %s2369 = sld [smem:[#allocation3 + $0x7]]
  %s2370 = scalar_lea.vmem %s6, %s2369
  %v2371 = vld [vmem:[%s2370] sm:$0x1]
  %v2373 = vrot.slane %v2371, 7
  %v2375 = vsel %vm2021, %v2368, %v2373
  %2377 = vrot.lane.b32.xlu0 %v2365, 32
  %v2378 = vpop.permute.xlu0 %2377
  %v2379 = vsel %vm1202, %v2378, 0
  %2381 = vmatprep.subr.mxu0 0.0
  %2382 = vmatpush1.msra.mxu0 %v2031
  %2383 = vmatprep.subr.mxu0 0.0
  %2384 = vmatpush1.msra.mxu0 %v2032
  %2385 = vmatprep.subr.mxu0 0.0
  %2386 = vmatpush1.msra.mxu0 %v2033
  %2387 = vmatprep.subr.mxu0 0.0
  %2388 = vmatpush1.msra.mxu0 %v2034
  %2389 = vmatprep.subr.mxu0 0.0
  %2390 = vmatpush1.msra.mxu0 0.0
  %2391 = vmatprep.subr.mxu0 0.0
  %2392 = vmatpush1.msra.mxu0 0.0
  %2393 = vmatprep.subr.mxu0 0.0
  %2394 = vmatpush1.msra.mxu0 0.0
  %2395 = vmatprep.subr.mxu0 0.0
  %2396 = vmatpush1.msra.mxu0 0.0
  %2397 = vmatprep.subr.mxu0 0.0
  %2398 = vmatpush1.msra.mxu0 0.0
  %2399 = vmatprep.subr.mxu0 0.0
  %2400 = vmatpush1.msra.mxu0 0.0
  %2401 = vmatprep.subr.mxu0 0.0
  %2402 = vmatpush1.msra.mxu0 0.0
  %2403 = vmatprep.subr.mxu0 0.0
  %2404 = vmatpush1.msra.mxu0 0.0
  %2405 = vmatprep.subr.mxu0 0.0
  %2406 = vmatpush1.msra.mxu0 0.0
  %2407 = vmatprep.subr.mxu0 0.0
  %2408 = vmatpush1.msra.mxu0 0.0
  %2409 = vmatprep.subr.mxu0 0.0
  %2410 = vmatpush1.msra.mxu0 0.0
  %2411 = vmatprep.subr.mxu0 0.0
  %2412 = vmatpush1.msra.mxu0 0.0
  %2413 = vmatprep.subr.mxu0 0.0
  %2414 = vmatpush1.msra.mxu0 0.0
  %2415 = vmatprep.subr.mxu0 0.0
  %2416 = vmatpush1.msra.mxu0 0.0
  %2417 = vmatprep.subr.mxu0 0.0
  %2418 = vmatpush1.msra.mxu0 0.0
  %2419 = vmatprep.subr.mxu0 0.0
  %2420 = vmatpush1.msra.mxu0 0.0
  %2421 = vmatprep.subr.mxu0 0.0
  %2422 = vmatpush1.msra.mxu0 0.0
  %2423 = vmatprep.subr.mxu0 0.0
  %2424 = vmatpush1.msra.mxu0 0.0
  %2425 = vmatprep.subr.mxu0 0.0
  %2426 = vmatpush1.msra.mxu0 0.0
  %2427 = vmatprep.subr.mxu0 0.0
  %2428 = vmatpush1.msra.mxu0 0.0
  %2429 = vmatprep.subr.mxu0 0.0
  %2430 = vmatpush1.msra.mxu0 0.0
  %2431 = vmatprep.subr.mxu0 0.0
  %2432 = vmatpush1.msra.mxu0 0.0
  %2433 = vmatprep.subr.mxu0 0.0
  %2434 = vmatpush1.msra.mxu0 0.0
  %2435 = vmatprep.subr.mxu0 0.0
  %2436 = vmatpush1.msra.mxu0 0.0
  %2437 = vmatprep.subr.mxu0 0.0
  %2438 = vmatpush1.msra.mxu0 0.0
  %2439 = vmatprep.subr.mxu0 0.0
  %2440 = vmatpush1.msra.mxu0 0.0
  %2441 = vmatprep.subr.mxu0 0.0
  %2442 = vmatpush1.msra.mxu0 0.0
  %2443 = vmatprep.subr.mxu0 0.0
  %2444 = vmatpush1.msra.mxu0 0.0
  %2445 = vmatprep.mubr.f32.mxu0 0.0
  %2446 = vmatmul.mubr.f32.gmra.mrb[0].mxu0 %v2379
  %v2447 = vpop.f32.mrb[0].mxu0
  %v2448 = vadd.f32 0.0, %v2447
  %v2449 = vpop.f32.mrb[0].mxu0
  %2450 = vdwg.mxu0
  %v2451 = vadd.f32 %v2375, %v2448
  %v2452 = vxor.u32 %v2451, 2147483648
  %v2453 = vmul.f32 %v2452, 1.442695
  %v2454 = vpow.pop %v2453
  %v2455 = vadd.f32 %v2454, 1.0
  %v2456 = vrcp.pop %v2455
  %v2457 = vmul.f32 1.0, %v2456
  %v2458 = vtanh.pop %v2451
  %v2459 = vmul.f32 %v2457, %v2359
  %2461 = vrot.lane.b32.xlu0 %v2458, 64
  %v2462 = vpop.permute.xlu0 %2461
  %v2464 = vmul.f32 %v2457, %v2462
  %2466 = vrot.lane.b32.xlu0 %v2464, 32
  %v2467 = vpop.permute.xlu0 %2466
  %v2469 = vadd.f32 %v2459, %v2467
  %v2470 = vtanh.pop %v2469
  %2472 = vrot.lane.b32.xlu0 %v2470, 64
  %v2473 = vpop.permute.xlu0 %2472
  %v2475 = vmul.f32 %v2457, %v2473
  %s2476 = sld [smem:[#allocation3 + $0x8]]
  %s2477 = scalar_lea.vmem %s6, %s2476
  %v2478 = vld [vmem:[%s2477] sm:$0x1]
  %s2479 = sld [smem:[#allocation3 + $0x9]]
  %s2480 = scalar_lea.vmem %s6, %s2479
  %v2481 = vld [vmem:[%s2480] sm:$0x1]
  %v2483 = vrot.slane %v2481, 7
  %v2485 = vsel %vm2021, %v2478, %v2483
  %2487 = vrot.lane.b32.xlu0 %v2475, 32
  %v2488 = vpop.permute.xlu0 %2487
  %v2489 = vsel %vm1202, %v2488, 0
  %2491 = vmatprep.subr.mxu0 0.0
  %2492 = vmatpush1.msra.mxu0 %v2031
  %2493 = vmatprep.subr.mxu0 0.0
  %2494 = vmatpush1.msra.mxu0 %v2032
  %2495 = vmatprep.subr.mxu0 0.0
  %2496 = vmatpush1.msra.mxu0 %v2033
  %2497 = vmatprep.subr.mxu0 0.0
  %2498 = vmatpush1.msra.mxu0 %v2034
  %2499 = vmatprep.subr.mxu0 0.0
  %2500 = vmatpush1.msra.mxu0 0.0
  %2501 = vmatprep.subr.mxu0 0.0
  %2502 = vmatpush1.msra.mxu0 0.0
  %2503 = vmatprep.subr.mxu0 0.0
  %2504 = vmatpush1.msra.mxu0 0.0
  %2505 = vmatprep.subr.mxu0 0.0
  %2506 = vmatpush1.msra.mxu0 0.0
  %2507 = vmatprep.subr.mxu0 0.0
  %2508 = vmatpush1.msra.mxu0 0.0
  %2509 = vmatprep.subr.mxu0 0.0
  %2510 = vmatpush1.msra.mxu0 0.0
  %2511 = vmatprep.subr.mxu0 0.0
  %2512 = vmatpush1.msra.mxu0 0.0
  %2513 = vmatprep.subr.mxu0 0.0
  %2514 = vmatpush1.msra.mxu0 0.0
  %2515 = vmatprep.subr.mxu0 0.0
  %2516 = vmatpush1.msra.mxu0 0.0
  %2517 = vmatprep.subr.mxu0 0.0
  %2518 = vmatpush1.msra.mxu0 0.0
  %2519 = vmatprep.subr.mxu0 0.0
  %2520 = vmatpush1.msra.mxu0 0.0
  %2521 = vmatprep.subr.mxu0 0.0
  %2522 = vmatpush1.msra.mxu0 0.0
  %2523 = vmatprep.subr.mxu0 0.0
  %2524 = vmatpush1.msra.mxu0 0.0
  %2525 = vmatprep.subr.mxu0 0.0
  %2526 = vmatpush1.msra.mxu0 0.0
  %2527 = vmatprep.subr.mxu0 0.0
  %2528 = vmatpush1.msra.mxu0 0.0
  %2529 = vmatprep.subr.mxu0 0.0
  %2530 = vmatpush1.msra.mxu0 0.0
  %2531 = vmatprep.subr.mxu0 0.0
  %2532 = vmatpush1.msra.mxu0 0.0
  %2533 = vmatprep.subr.mxu0 0.0
  %2534 = vmatpush1.msra.mxu0 0.0
  %2535 = vmatprep.subr.mxu0 0.0
  %2536 = vmatpush1.msra.mxu0 0.0
  %2537 = vmatprep.subr.mxu0 0.0
  %2538 = vmatpush1.msra.mxu0 0.0
  %2539 = vmatprep.subr.mxu0 0.0
  %2540 = vmatpush1.msra.mxu0 0.0
  %2541 = vmatprep.subr.mxu0 0.0
  %2542 = vmatpush1.msra.mxu0 0.0
  %2543 = vmatprep.subr.mxu0 0.0
  %2544 = vmatpush1.msra.mxu0 0.0
  %2545 = vmatprep.subr.mxu0 0.0
  %2546 = vmatpush1.msra.mxu0 0.0
  %2547 = vmatprep.subr.mxu0 0.0
  %2548 = vmatpush1.msra.mxu0 0.0
  %2549 = vmatprep.subr.mxu0 0.0
  %2550 = vmatpush1.msra.mxu0 0.0
  %2551 = vmatprep.subr.mxu0 0.0
  %2552 = vmatpush1.msra.mxu0 0.0
  %2553 = vmatprep.subr.mxu0 0.0
  %2554 = vmatpush1.msra.mxu0 0.0
  %2555 = vmatprep.mubr.f32.mxu0 0.0
  %2556 = vmatmul.mubr.f32.gmra.mrb[0].mxu0 %v2489
  %v2557 = vpop.f32.mrb[0].mxu0
  %v2558 = vadd.f32 0.0, %v2557
  %v2559 = vpop.f32.mrb[0].mxu0
  %2560 = vdwg.mxu0
  %v2561 = vadd.f32 %v2485, %v2558
  %v2562 = vxor.u32 %v2561, 2147483648
  %v2563 = vmul.f32 %v2562, 1.442695
  %v2564 = vpow.pop %v2563
  %v2565 = vadd.f32 %v2564, 1.0
  %v2566 = vrcp.pop %v2565
  %v2567 = vmul.f32 1.0, %v2566
  %v2568 = vtanh.pop %v2561
  %v2569 = vmul.f32 %v2567, %v2469
  %2571 = vrot.lane.b32.xlu0 %v2568, 64
  %v2572 = vpop.permute.xlu0 %2571
  %v2574 = vmul.f32 %v2567, %v2572
  %2576 = vrot.lane.b32.xlu0 %v2574, 32
  %v2577 = vpop.permute.xlu0 %2576
  %v2579 = vadd.f32 %v2569, %v2577
  %v2580 = vtanh.pop %v2579
  %2582 = vrot.lane.b32.xlu0 %v2580, 64
  %v2583 = vpop.permute.xlu0 %2582
  %v2585 = vmul.f32 %v2567, %v2583
  %s2586 = sld [smem:[#allocation3 + $0xa]]
  %s2587 = scalar_lea.vmem %s6, %s2586
  %v2588 = vld [vmem:[%s2587] sm:$0x1]
  %s2589 = sld [smem:[#allocation3 + $0xb]]
  %s2590 = scalar_lea.vmem %s6, %s2589
  %v2591 = vld [vmem:[%s2590] sm:$0x1]
  %v2593 = vrot.slane %v2591, 7
  %v2595 = vsel %vm2021, %v2588, %v2593
  %2597 = vrot.lane.b32.xlu0 %v2585, 32
  %v2598 = vpop.permute.xlu0 %2597
  %v2599 = vsel %vm1202, %v2598, 0
  %2601 = vmatprep.subr.mxu0 0.0
  %2602 = vmatpush1.msra.mxu0 %v2031
  %2603 = vmatprep.subr.mxu0 0.0
  %2604 = vmatpush1.msra.mxu0 %v2032
  %2605 = vmatprep.subr.mxu0 0.0
  %2606 = vmatpush1.msra.mxu0 %v2033
  %2607 = vmatprep.subr.mxu0 0.0
  %2608 = vmatpush1.msra.mxu0 %v2034
  %2609 = vmatprep.subr.mxu0 0.0
  %2610 = vmatpush1.msra.mxu0 0.0
  %2611 = vmatprep.subr.mxu0 0.0
  %2612 = vmatpush1.msra.mxu0 0.0
  %2613 = vmatprep.subr.mxu0 0.0
  %2614 = vmatpush1.msra.mxu0 0.0
  %2615 = vmatprep.subr.mxu0 0.0
  %2616 = vmatpush1.msra.mxu0 0.0
  %2617 = vmatprep.subr.mxu0 0.0
  %2618 = vmatpush1.msra.mxu0 0.0
  %2619 = vmatprep.subr.mxu0 0.0
  %2620 = vmatpush1.msra.mxu0 0.0
  %2621 = vmatprep.subr.mxu0 0.0
  %2622 = vmatpush1.msra.mxu0 0.0
  %2623 = vmatprep.subr.mxu0 0.0
  %2624 = vmatpush1.msra.mxu0 0.0
  %2625 = vmatprep.subr.mxu0 0.0
  %2626 = vmatpush1.msra.mxu0 0.0
  %2627 = vmatprep.subr.mxu0 0.0
  %2628 = vmatpush1.msra.mxu0 0.0
  %2629 = vmatprep.subr.mxu0 0.0
  %2630 = vmatpush1.msra.mxu0 0.0
  %2631 = vmatprep.subr.mxu0 0.0
  %2632 = vmatpush1.msra.mxu0 0.0
  %2633 = vmatprep.subr.mxu0 0.0
  %2634 = vmatpush1.msra.mxu0 0.0
  %2635 = vmatprep.subr.mxu0 0.0
  %2636 = vmatpush1.msra.mxu0 0.0
  %2637 = vmatprep.subr.mxu0 0.0
  %2638 = vmatpush1.msra.mxu0 0.0
  %2639 = vmatprep.subr.mxu0 0.0
  %2640 = vmatpush1.msra.mxu0 0.0
  %2641 = vmatprep.subr.mxu0 0.0
  %2642 = vmatpush1.msra.mxu0 0.0
  %2643 = vmatprep.subr.mxu0 0.0
  %2644 = vmatpush1.msra.mxu0 0.0
  %2645 = vmatprep.subr.mxu0 0.0
  %2646 = vmatpush1.msra.mxu0 0.0
  %2647 = vmatprep.subr.mxu0 0.0
  %2648 = vmatpush1.msra.mxu0 0.0
  %2649 = vmatprep.subr.mxu0 0.0
  %2650 = vmatpush1.msra.mxu0 0.0
  %2651 = vmatprep.subr.mxu0 0.0
  %2652 = vmatpush1.msra.mxu0 0.0
  %2653 = vmatprep.subr.mxu0 0.0
  %2654 = vmatpush1.msra.mxu0 0.0
  %2655 = vmatprep.subr.mxu0 0.0
  %2656 = vmatpush1.msra.mxu0 0.0
  %2657 = vmatprep.subr.mxu0 0.0
  %2658 = vmatpush1.msra.mxu0 0.0
  %2659 = vmatprep.subr.mxu0 0.0
  %2660 = vmatpush1.msra.mxu0 0.0
  %2661 = vmatprep.subr.mxu0 0.0
  %2662 = vmatpush1.msra.mxu0 0.0
  %2663 = vmatprep.subr.mxu0 0.0
  %2664 = vmatpush1.msra.mxu0 0.0
  %2665 = vmatprep.mubr.f32.mxu0 0.0
  %2666 = vmatmul.mubr.f32.gmra.mrb[0].mxu0 %v2599
  %v2667 = vpop.f32.mrb[0].mxu0
  %v2668 = vadd.f32 0.0, %v2667
  %v2669 = vpop.f32.mrb[0].mxu0
  %2670 = vdwg.mxu0
  %v2671 = vadd.f32 %v2595, %v2668
  %v2672 = vxor.u32 %v2671, 2147483648
  %v2673 = vmul.f32 %v2672, 1.442695
  %v2674 = vpow.pop %v2673
  %v2675 = vadd.f32 %v2674, 1.0
  %v2676 = vrcp.pop %v2675
  %v2677 = vmul.f32 1.0, %v2676
  %v2678 = vtanh.pop %v2671
  %v2679 = vmul.f32 %v2677, %v2579
  %2681 = vrot.lane.b32.xlu0 %v2678, 64
  %v2682 = vpop.permute.xlu0 %2681
  %v2684 = vmul.f32 %v2677, %v2682
  %2686 = vrot.lane.b32.xlu0 %v2684, 32
  %v2687 = vpop.permute.xlu0 %2686
  %v2689 = vadd.f32 %v2679, %v2687
  %v2690 = vtanh.pop %v2689
  %2692 = vrot.lane.b32.xlu0 %v2690, 64
  %v2693 = vpop.permute.xlu0 %2692
  %v2695 = vmul.f32 %v2677, %v2693
  %s2696 = sld [smem:[#allocation3 + $0xc]]
  %s2697 = scalar_lea.vmem %s6, %s2696
  %v2698 = vld [vmem:[%s2697] sm:$0x1]
  %s2699 = sld [smem:[#allocation3 + $0xd]]
  %s2700 = scalar_lea.vmem %s6, %s2699
  %v2701 = vld [vmem:[%s2700] sm:$0x1]
  %v2703 = vrot.slane %v2701, 7
  %v2705 = vsel %vm2021, %v2698, %v2703
  %2707 = vrot.lane.b32.xlu0 %v2695, 32
  %v2708 = vpop.permute.xlu0 %2707
  %v2709 = vsel %vm1202, %v2708, 0
  %2711 = vmatprep.subr.mxu0 0.0
  %2712 = vmatpush1.msra.mxu0 %v2031
  %2713 = vmatprep.subr.mxu0 0.0
  %2714 = vmatpush1.msra.mxu0 %v2032
  %2715 = vmatprep.subr.mxu0 0.0
  %2716 = vmatpush1.msra.mxu0 %v2033
  %2717 = vmatprep.subr.mxu0 0.0
  %2718 = vmatpush1.msra.mxu0 %v2034
  %2719 = vmatprep.subr.mxu0 0.0
  %2720 = vmatpush1.msra.mxu0 0.0
  %2721 = vmatprep.subr.mxu0 0.0
  %2722 = vmatpush1.msra.mxu0 0.0
  %2723 = vmatprep.subr.mxu0 0.0
  %2724 = vmatpush1.msra.mxu0 0.0
  %2725 = vmatprep.subr.mxu0 0.0
  %2726 = vmatpush1.msra.mxu0 0.0
  %2727 = vmatprep.subr.mxu0 0.0
  %2728 = vmatpush1.msra.mxu0 0.0
  %2729 = vmatprep.subr.mxu0 0.0
  %2730 = vmatpush1.msra.mxu0 0.0
  %2731 = vmatprep.subr.mxu0 0.0
  %2732 = vmatpush1.msra.mxu0 0.0
  %2733 = vmatprep.subr.mxu0 0.0
  %2734 = vmatpush1.msra.mxu0 0.0
  %2735 = vmatprep.subr.mxu0 0.0
  %2736 = vmatpush1.msra.mxu0 0.0
  %2737 = vmatprep.subr.mxu0 0.0
  %2738 = vmatpush1.msra.mxu0 0.0
  %2739 = vmatprep.subr.mxu0 0.0
  %2740 = vmatpush1.msra.mxu0 0.0
  %2741 = vmatprep.subr.mxu0 0.0
  %2742 = vmatpush1.msra.mxu0 0.0
  %2743 = vmatprep.subr.mxu0 0.0
  %2744 = vmatpush1.msra.mxu0 0.0
  %2745 = vmatprep.subr.mxu0 0.0
  %2746 = vmatpush1.msra.mxu0 0.0
  %2747 = vmatprep.subr.mxu0 0.0
  %2748 = vmatpush1.msra.mxu0 0.0
  %2749 = vmatprep.subr.mxu0 0.0
  %2750 = vmatpush1.msra.mxu0 0.0
  %2751 = vmatprep.subr.mxu0 0.0
  %2752 = vmatpush1.msra.mxu0 0.0
  %2753 = vmatprep.subr.mxu0 0.0
  %2754 = vmatpush1.msra.mxu0 0.0
  %2755 = vmatprep.subr.mxu0 0.0
  %2756 = vmatpush1.msra.mxu0 0.0
  %2757 = vmatprep.subr.mxu0 0.0
  %2758 = vmatpush1.msra.mxu0 0.0
  %2759 = vmatprep.subr.mxu0 0.0
  %2760 = vmatpush1.msra.mxu0 0.0
  %2761 = vmatprep.subr.mxu0 0.0
  %2762 = vmatpush1.msra.mxu0 0.0
  %2763 = vmatprep.subr.mxu0 0.0
  %2764 = vmatpush1.msra.mxu0 0.0
  %2765 = vmatprep.subr.mxu0 0.0
  %2766 = vmatpush1.msra.mxu0 0.0
  %2767 = vmatprep.subr.mxu0 0.0
  %2768 = vmatpush1.msra.mxu0 0.0
  %2769 = vmatprep.subr.mxu0 0.0
  %2770 = vmatpush1.msra.mxu0 0.0
  %2771 = vmatprep.subr.mxu0 0.0
  %2772 = vmatpush1.msra.mxu0 0.0
  %2773 = vmatprep.subr.mxu0 0.0
  %2774 = vmatpush1.msra.mxu0 0.0
  %2775 = vmatprep.mubr.f32.mxu0 0.0
  %2776 = vmatmul.mubr.f32.gmra.mrb[0].mxu0 %v2709
  %v2777 = vpop.f32.mrb[0].mxu0
  %v2778 = vadd.f32 0.0, %v2777
  %v2779 = vpop.f32.mrb[0].mxu0
  %2780 = vdwg.mxu0
  %v2781 = vadd.f32 %v2705, %v2778
  %v2782 = vxor.u32 %v2781, 2147483648
  %v2783 = vmul.f32 %v2782, 1.442695
  %v2784 = vpow.pop %v2783
  %v2785 = vadd.f32 %v2784, 1.0
  %v2786 = vrcp.pop %v2785
  %v2787 = vmul.f32 1.0, %v2786
  %v2788 = vtanh.pop %v2781
  %v2789 = vmul.f32 %v2787, %v2689
  %2791 = vrot.lane.b32.xlu0 %v2788, 64
  %v2792 = vpop.permute.xlu0 %2791
  %v2794 = vmul.f32 %v2787, %v2792
  %2796 = vrot.lane.b32.xlu0 %v2794, 32
  %v2797 = vpop.permute.xlu0 %2796
  %v2799 = vadd.f32 %v2789, %v2797
  %v2800 = vtanh.pop %v2799
  %2802 = vrot.lane.b32.xlu0 %v2800, 64
  %v2803 = vpop.permute.xlu0 %2802
  %v2805 = vmul.f32 %v2787, %v2803
  %v2806 = vrot.slane %v2255, 6
  %v2808 = vrot.slane %v2365, 4
  %v2810 = vrot.slane %v2475, 2
  %v2812 = vrot.slane %v2695, 6
  %v2815 = vrot.slane %v2805, 4
  %vm2817 = vcmask 1041408
  %v2818 = vsel %vm2817, %v2145, %v2806
  %vm2819 = vcmask 1043456
  %v2820 = vsel %vm2819, %v2818, %v2808
  %v2821 = vsel %vm118, %v2820, %v2810
  %v2822 = vsel %vm2817, %v2585, %v2812
  %v2823 = vsel %vm2819, %v2822, %v2815
  %v2824 = vld [vmem:[%s8] sm:$0xff]
  %v2825 = vld [vmem:[%s8 + $0x8] sm:$0xff]
  %v2826 = vld [vmem:[%s8 + $0x10] sm:$0xff]
  %v2827 = vld [vmem:[%s8 + $0x18] sm:$0xff]
  %v2828 = vld [vmem:[%s9] sm:$0x1]
  %v2830 = vlaneseq
  %v2831 = vshrl.u32 %v2830, 7
  %v2832 = vsub.s32 0, %v2831
  %v2833 = vrot.slane %v2828, %v2832
  %2837 = vrot.lane.b32.xlu0 %v2821, 32
  %v2838 = vpop.permute.xlu0 %2837
  %2839 = vrot.lane.b32.xlu0 %v2823, 32
  %v2840 = vpop.permute.xlu0 %2839
  %v2841 = vsel %vm1202, %v2838, 0
  %v2843 = vsel %vm1202, %v2840, 0
  %2845 = vmatprep.subr.mxu0 0.0
  %2846 = vmatpush1.msra.mxu0 %v2824
  %2847 = vmatprep.subr.mxu0 0.0
  %2848 = vmatpush1.msra.mxu0 %v2825
  %2849 = vmatprep.subr.mxu0 0.0
  %2850 = vmatpush1.msra.mxu0 %v2826
  %2851 = vmatprep.subr.mxu0 0.0
  %2852 = vmatpush1.msra.mxu0 %v2827
  %2853 = vmatprep.subr.mxu0 0.0
  %2854 = vmatpush1.msra.mxu0 0.0
  %2855 = vmatprep.subr.mxu0 0.0
  %2856 = vmatpush1.msra.mxu0 0.0
  %2857 = vmatprep.subr.mxu0 0.0
  %2858 = vmatpush1.msra.mxu0 0.0
  %2859 = vmatprep.subr.mxu0 0.0
  %2860 = vmatpush1.msra.mxu0 0.0
  %2861 = vmatprep.subr.mxu0 0.0
  %2862 = vmatpush1.msra.mxu0 0.0
  %2863 = vmatprep.subr.mxu0 0.0
  %2864 = vmatpush1.msra.mxu0 0.0
  %2865 = vmatprep.subr.mxu0 0.0
  %2866 = vmatpush1.msra.mxu0 0.0
  %2867 = vmatprep.subr.mxu0 0.0
  %2868 = vmatpush1.msra.mxu0 0.0
  %2869 = vmatprep.subr.mxu0 0.0
  %2870 = vmatpush1.msra.mxu0 0.0
  %2871 = vmatprep.subr.mxu0 0.0
  %2872 = vmatpush1.msra.mxu0 0.0
  %2873 = vmatprep.subr.mxu0 0.0
  %2874 = vmatpush1.msra.mxu0 0.0
  %2875 = vmatprep.subr.mxu0 0.0
  %2876 = vmatpush1.msra.mxu0 0.0
  %2877 = vmatprep.subr.mxu0 0.0
  %2878 = vmatpush1.msra.mxu0 0.0
  %2879 = vmatprep.subr.mxu0 0.0
  %2880 = vmatpush1.msra.mxu0 0.0
  %2881 = vmatprep.subr.mxu0 0.0
  %2882 = vmatpush1.msra.mxu0 0.0
  %2883 = vmatprep.subr.mxu0 0.0
  %2884 = vmatpush1.msra.mxu0 0.0
  %2885 = vmatprep.subr.mxu0 0.0
  %2886 = vmatpush1.msra.mxu0 0.0
  %2887 = vmatprep.subr.mxu0 0.0
  %2888 = vmatpush1.msra.mxu0 0.0
  %2889 = vmatprep.subr.mxu0 0.0
  %2890 = vmatpush1.msra.mxu0 0.0
  %2891 = vmatprep.subr.mxu0 0.0
  %2892 = vmatpush1.msra.mxu0 0.0
  %2893 = vmatprep.subr.mxu0 0.0
  %2894 = vmatpush1.msra.mxu0 0.0
  %2895 = vmatprep.subr.mxu0 0.0
  %2896 = vmatpush1.msra.mxu0 0.0
  %2897 = vmatprep.subr.mxu0 0.0
  %2898 = vmatpush1.msra.mxu0 0.0
  %2899 = vmatprep.subr.mxu0 0.0
  %2900 = vmatpush1.msra.mxu0 0.0
  %2901 = vmatprep.subr.mxu0 0.0
  %2902 = vmatpush1.msra.mxu0 0.0
  %2903 = vmatprep.subr.mxu0 0.0
  %2904 = vmatpush1.msra.mxu0 0.0
  %2905 = vmatprep.subr.mxu0 0.0
  %2906 = vmatpush1.msra.mxu0 0.0
  %2907 = vmatprep.subr.mxu0 0.0
  %2908 = vmatpush1.msra.mxu0 0.0
  %2909 = vmatprep.mubr.f32.mxu0 0.0
  %2910 = vmatmul.mubr.f32.gmra.mrb[0].mxu0 %v2841
  %v2911 = vpop.f32.mrb[0].mxu0
  %v2912 = vadd.f32 %v2833, %v2911
  %v2913 = vpop.f32.mrb[0].mxu0
  %2914 = vmatprep.mubr.f32.mxu0 0.0
  %2915 = vmatmul.mubr.f32.gmra.mrb[0].mxu0 %v2843
  %v2916 = vpop.f32.mrb[0].mxu0
  %v2917 = vadd.f32 %v2833, %v2916
  %v2918 = vpop.f32.mrb[0].mxu0
  %2919 = vdwg.mxu0
  %2920 = vst [vmem:[%s10] sm:$0xff] %v2912
  %2921 = vst [vmem:[%s10 + $0x8] sm:$0x3f] %v2917
  // Predicated region
  $region38: #{forward_pallas.1} parent=0 // pred_check
    _
  $region39: #{forward_pallas.1} parent=0 // pred_check_branch
    %2923 = sbr.rel (0) target = $region41
  $region40: #{forward_pallas.1} parent=0 // pred_region
    _
  $region41: #{forward_pallas.1} parent=0 // pred_fallthru
    _
  // Predicated region
  $region42: #{forward_pallas.1} parent=0 // pred_check
    _
  $region43: #{forward_pallas.1} parent=0 // pred_check_branch
    %2925 = sbr.rel (0) target = $region45
  $region44: #{forward_pallas.1} parent=0 // pred_region
    _
  $region45: #{forward_pallas.1} parent=0 // pred_fallthru
    _

</llo_original>
